<compile_context>
chip_gen: v6e
topology: v6e:2x2x1
jax: 0.10.0
libtpu: 0.0.40
codegen_flags: <defaults>
</compile_context>

<pallas_src>
import functools

import numpy as np

import jax
import jax.numpy as jnp
from jax import lax
from jax.experimental import pallas as pl
from jax.experimental.pallas import tpu as pltpu


# ----------------------------- kernel -----------------------------------------


def _encoder_kernel(x_ref, wq_ref, bq_ref, wk_ref, bk_ref, wv_ref, bv_ref,
                    wf_ref, bf_ref, lng_ref, lnb_ref,
                    qmask_ref, bmask_ref, dmask_ref, pmask_ref, spread_ref,
                    sel_ref, o_ref, *, num_heads, dim_q_k, layers, eps):
    # Load every weight / constant once; they stay resident for the whole encoder.
    wq = wq_ref[...]; bq = bq_ref[...]
    wk = wk_ref[...]; bk = bk_ref[...]
    wv = wv_ref[...]; bv = bv_ref[...]
    wf = wf_ref[...]; bf = bf_ref[...]
    gamma = lng_ref[...]; beta = lnb_ref[...]

    qmask = qmask_ref[...]    # (R, H*dqk)  per-head column selector for stacked queries
    bmask = bmask_ref[...]    # (R, N)      additive batch mask (0 valid, -1e30 cross-batch)
    dmask = dmask_ref[...]    # (R, H*dv)   keep the row's own head block of P@V
    pmask = pmask_ref[...]    # (R, H*dv)   raw-view column placement block
    spread = spread_ref[...]  # (H*dv, H*dv) = tile(eye(dv), (H, H)) : replicate head block
    sel = sel_ref[...]        # (N, R)      scatter-add stacked rows into merged rows

    scale = 1.0 / (dim_q_k ** 0.5)
    H = num_heads

    def mha(a):
        """MultiHeadAttention forward, all batches & heads at once. a: (N, dim_m)."""
        qs = jnp.maximum(jnp.dot(a, wq, preferred_element_type=jnp.float32) + bq, 0.0)
        ks = jnp.maximum(jnp.dot(a, wk, preferred_element_type=jnp.float32) + bk, 0.0)
        vs = jnp.maximum(jnp.dot(a, wv, preferred_element_type=jnp.float32) + bv, 0.0)

        # Head-stacked queries: row g = h*N + i carries only head-h columns of query row i.
        qh = jnp.concatenate([qs] * H, axis=0) * qmask                       # (R, H*dqk)
        # One score matmul for every (head, batch, time) query row; cross-batch
        # columns are pushed to -1e30 so they vanish in the softmax.
        s = lax.dot_general(qh, ks, (((1,), (1,)), ((), ())),
                            preferred_element_type=jnp.float32) * scale + bmask  # (R, N)
        m = jnp.max(s, axis=-1, keepdims=True)          # valid scores >= 0 (ReLU'd q, k)
        p = jnp.exp(s - m)                              # masked entries underflow to exactly 0
        p = p * pl.reciprocal(jnp.sum(p, axis=-1, keepdims=True), approx=True)

        of = jnp.dot(p, vs, preferred_element_type=jnp.float32)              # (R, H*dv)
        # Keep the row's own head block, replicate it into every dv block (MXU), then
        # keep only the block demanded by the raw (bs,H,ts,dv)->(bs,ts,H*dv) view.
        tf = jnp.dot(of * dmask, spread, preferred_element_type=jnp.float32) * pmask
        zm = jnp.dot(tf, wf, preferred_element_type=jnp.float32)             # (R, dim_m)
        y = jnp.dot(sel, zm, preferred_element_type=jnp.float32)             # (N, dim_m)
        # TODO(synk): nn.Dropout(p) is identity in eval/inference mode; not applied.
        return jnp.maximum(y + bf, 0.0)

    def layer_norm(z):
        mu = jnp.mean(z, axis=-1, keepdims=True)
        zc = z - mu
        var = jnp.mean(zc * zc, axis=-1, keepdims=True)   # biased variance, as torch
        return zc * lax.rsqrt(var + eps) * gamma + beta

    a = x_ref[...]                               # (bs*ts, dim_m) activation slab
    for _ in range(layers + 1):                  # whole encoder loop stays in VMEM
        out = layer_norm(mha(a))                 # first LN: no residual
        out = mha(out)
        a = layer_norm(out + a)
    o_ref[...] = a


# ----------------------------- host constants -----------------------------------


def _attention_constants(bs, ts, num_heads, dim_q_k, dim_v):
    """Host-side masks implementing batch isolation, per-head selection and the raw
    memory head merge of `output.view(bs, ts, -1)` as elementwise masks / matmuls."""
    N = bs * ts
    R = num_heads * N
    g = np.arange(R)
    h = g // N                        # head of stacked row g
    i = g % N                         # (batch, time) row index
    b = i // ts
    t = i % ts
    u = h * ts + t                    # flattened (head, time) index within a batch
    j = u % num_heads                 # raw-view column block
    tgt = b * ts + u // num_heads     # raw-view target (merged) row

    cq = np.arange(num_heads * dim_q_k)
    qmask = (cq[None, :] // dim_q_k == h[:, None]).astype(np.float32)            # (R, H*dqk)

    y = np.arange(N)
    bmask = np.where(y[None, :] // ts == b[:, None], 0.0, -1e30).astype(np.float32)  # (R, N)

    cv = np.arange(num_heads * dim_v)
    dmask = (cv[None, :] // dim_v == h[:, None]).astype(np.float32)              # (R, H*dv)
    pmask = (cv[None, :] // dim_v == j[:, None]).astype(np.float32)              # (R, H*dv)

    spread = np.tile(np.eye(dim_v, dtype=np.float32), (num_heads, num_heads))    # (H*dv, H*dv)

    rows = np.arange(N)
    sel = (rows[:, None] == tgt[None, :]).astype(np.float32)                     # (N, R)
    return qmask, bmask, dmask, pmask, spread, sel


# ----------------------------- wrapper -----------------------------------------


def _full_block(a):
    nd = a.ndim
    return pl.BlockSpec(a.shape, lambda i, _nd=nd: (0,) * _nd)


def encoder_forward(x, p, *, layers, num_heads, dim_q_k, dim_v):
    bs, ts, dim_m = x.shape
    xf = x.reshape(bs * ts, dim_m)               # lane/sublane-dense activation slab
    consts = _attention_constants(bs, ts, num_heads, dim_q_k, dim_v)

    kernel = functools.partial(
        _encoder_kernel, num_heads=num_heads, dim_q_k=dim_q_k, layers=layers, eps=1e-5)

    args = (xf, p["wq"], p["bq"], p["wk"], p["bk"], p["wv"], p["bv"],
            p["wf"], p["bf"], p["ln_g"], p["ln_b"],
            *[jnp.asarray(c) for c in consts])

    out = pl.pallas_call(
        kernel,
        out_shape=jax.ShapeDtypeStruct((bs * ts, dim_m), jnp.float32),
        grid=(1,),                               # single fused invocation; everything in VMEM
        in_specs=[_full_block(a) for a in args],
        out_specs=pl.BlockSpec((bs * ts, dim_m), lambda i: (0, 0)),
        compiler_params=pltpu.CompilerParams(dimension_semantics=("arbitrary",)),
    )(*args)
    return out.reshape(bs, ts, dim_m)


# ----------------------------- params ------------------------------------------


def init_params(key, *, num_heads, dim_q_k, dim_v, dim_m):
    ks = jax.random.split(key, 8)
    s = 0.1
    return {
        "wq": s * jax.random.normal(ks[0], (dim_m, num_heads * dim_q_k), jnp.float32),
        "bq": s * jax.random.normal(ks[1], (1, num_heads * dim_q_k), jnp.float32),
        "wk": s * jax.random.normal(ks[2], (dim_m, num_heads * dim_q_k), jnp.float32),
        "bk": s * jax.random.normal(ks[3], (1, num_heads * dim_q_k), jnp.float32),
        "wv": s * jax.random.normal(ks[4], (dim_m, num_heads * dim_v), jnp.float32),
        "bv": s * jax.random.normal(ks[5], (1, num_heads * dim_v), jnp.float32),
        "wf": s * jax.random.normal(ks[6], (num_heads * dim_v, dim_m), jnp.float32),
        "bf": s * jax.random.normal(ks[7], (1, dim_m), jnp.float32),
        "ln_g": jnp.ones((1, dim_m), jnp.float32),   # torch LayerNorm default init
        "ln_b": jnp.zeros((1, dim_m), jnp.float32),
    }


if __name__ == "__main__":
    # Small shapes consistent with the module's forward.
    bs, ts = 2, 8
    num_heads, dim_q_k, dim_v, dim_m = 4, 8, 8, 32
    layers = 1

    key = jax.random.PRNGKey(0)
    k_x, k_p = jax.random.split(key)
    x = jax.random.normal(k_x, (bs, ts, dim_m), jnp.float32)
    params = init_params(k_p, num_heads=num_heads, dim_q_k=dim_q_k,
                         dim_v=dim_v, dim_m=dim_m)

    fwd = jax.jit(functools.partial(encoder_forward, layers=layers,
                                    num_heads=num_heads, dim_q_k=dim_q_k,
                                    dim_v=dim_v))
    out = fwd(x, params)
    jax.block_until_ready(out)
    assert out.shape == (bs, ts, dim_m) and out.dtype == jnp.float32
    assert bool(jnp.all(jnp.isfinite(out)))
    print("KERNEL_OK")
</pallas_src>

<mosaic_0001>
module attributes {stable_mosaic.version = 11 : i64} {
  func.func @_encoder_kernel(%arg0: i32, %arg1: memref<16x32xf32, #tpu.memory_space<vmem>>, %arg2: memref<32x32xf32, #tpu.memory_space<vmem>>, %arg3: memref<1x32xf32, #tpu.memory_space<vmem>>, %arg4: memref<32x32xf32, #tpu.memory_space<vmem>>, %arg5: memref<1x32xf32, #tpu.memory_space<vmem>>, %arg6: memref<32x32xf32, #tpu.memory_space<vmem>>, %arg7: memref<1x32xf32, #tpu.memory_space<vmem>>, %arg8: memref<32x32xf32, #tpu.memory_space<vmem>>, %arg9: memref<1x32xf32, #tpu.memory_space<vmem>>, %arg10: memref<1x32xf32, #tpu.memory_space<vmem>>, %arg11: memref<1x32xf32, #tpu.memory_space<vmem>>, %arg12: memref<64x32xf32, #tpu.memory_space<vmem>>, %arg13: memref<64x16xf32, #tpu.memory_space<vmem>>, %arg14: memref<64x32xf32, #tpu.memory_space<vmem>>, %arg15: memref<64x32xf32, #tpu.memory_space<vmem>>, %arg16: memref<32x32xf32, #tpu.memory_space<vmem>>, %arg17: memref<16x64xf32, #tpu.memory_space<vmem>>, %arg18: memref<16x32xf32, #tpu.memory_space<vmem>>) attributes {dimension_semantics = [#tpu.dimension_semantics<arbitrary>], iteration_bounds = array<i64: 1>, scalar_prefetch = 0 : i64, scratch_operands = 0 : i64, tpu.core_type = #tpu.core_type<tc>, window_params = [{pipeline_mode = #tpu.pipeline_mode<synchronous>, transform_indices = @transform_0, window_bounds = array<i64: 16, 32>}, {pipeline_mode = #tpu.pipeline_mode<synchronous>, transform_indices = @transform_1, window_bounds = array<i64: 32, 32>}, {pipeline_mode = #tpu.pipeline_mode<synchronous>, transform_indices = @transform_2, window_bounds = array<i64: 1, 32>}, {pipeline_mode = #tpu.pipeline_mode<synchronous>, transform_indices = @transform_3, window_bounds = array<i64: 32, 32>}, {pipeline_mode = #tpu.pipeline_mode<synchronous>, transform_indices = @transform_4, window_bounds = array<i64: 1, 32>}, {pipeline_mode = #tpu.pipeline_mode<synchronous>, transform_indices = @transform_5, window_bounds = array<i64: 32, 32>}, {pipeline_mode = #tpu.pipeline_mode<synchronous>, transform_indices = @transform_6, window_bounds = array<i64: 1, 32>}, {pipeline_mode = #tpu.pipeline_mode<synchronous>, transform_indices = @transform_7, window_bounds = array<i64: 32, 32>}, {pipeline_mode = #tpu.pipeline_mode<synchronous>, transform_indices = @transform_8, window_bounds = array<i64: 1, 32>}, {pipeline_mode = #tpu.pipeline_mode<synchronous>, transform_indices = @transform_9, window_bounds = array<i64: 1, 32>}, {pipeline_mode = #tpu.pipeline_mode<synchronous>, transform_indices = @transform_10, window_bounds = array<i64: 1, 32>}, {pipeline_mode = #tpu.pipeline_mode<synchronous>, transform_indices = @transform_11, window_bounds = array<i64: 64, 32>}, {pipeline_mode = #tpu.pipeline_mode<synchronous>, transform_indices = @transform_12, window_bounds = array<i64: 64, 16>}, {pipeline_mode = #tpu.pipeline_mode<synchronous>, transform_indices = @transform_13, window_bounds = array<i64: 64, 32>}, {pipeline_mode = #tpu.pipeline_mode<synchronous>, transform_indices = @transform_14, window_bounds = array<i64: 64, 32>}, {pipeline_mode = #tpu.pipeline_mode<synchronous>, transform_indices = @transform_15, window_bounds = array<i64: 32, 32>}, {pipeline_mode = #tpu.pipeline_mode<synchronous>, transform_indices = @transform_16, window_bounds = array<i64: 16, 64>}, {pipeline_mode = #tpu.pipeline_mode<synchronous>, transform_indices = @transform_17, window_bounds = array<i64: 16, 32>}]} {
    %c0 = arith.constant 0 : index
    %c0_0 = arith.constant 0 : index
    %0 = vector.load %arg2[%c0, %c0_0] : memref<32x32xf32, #tpu.memory_space<vmem>>, vector<32x32xf32>
    %c0_1 = arith.constant 0 : index
    %c0_2 = arith.constant 0 : index
    %1 = vector.load %arg3[%c0_1, %c0_2] : memref<1x32xf32, #tpu.memory_space<vmem>>, vector<1x32xf32>
    %c0_3 = arith.constant 0 : index
    %c0_4 = arith.constant 0 : index
    %2 = vector.load %arg4[%c0_3, %c0_4] : memref<32x32xf32, #tpu.memory_space<vmem>>, vector<32x32xf32>
    %c0_5 = arith.constant 0 : index
    %c0_6 = arith.constant 0 : index
    %3 = vector.load %arg5[%c0_5, %c0_6] : memref<1x32xf32, #tpu.memory_space<vmem>>, vector<1x32xf32>
    %c0_7 = arith.constant 0 : index
    %c0_8 = arith.constant 0 : index
    %4 = vector.load %arg6[%c0_7, %c0_8] : memref<32x32xf32, #tpu.memory_space<vmem>>, vector<32x32xf32>
    %c0_9 = arith.constant 0 : index
    %c0_10 = arith.constant 0 : index
    %5 = vector.load %arg7[%c0_9, %c0_10] : memref<1x32xf32, #tpu.memory_space<vmem>>, vector<1x32xf32>
    %c0_11 = arith.constant 0 : index
    %c0_12 = arith.constant 0 : index
    %6 = vector.load %arg8[%c0_11, %c0_12] : memref<32x32xf32, #tpu.memory_space<vmem>>, vector<32x32xf32>
    %c0_13 = arith.constant 0 : index
    %c0_14 = arith.constant 0 : index
    %7 = vector.load %arg9[%c0_13, %c0_14] : memref<1x32xf32, #tpu.memory_space<vmem>>, vector<1x32xf32>
    %c0_15 = arith.constant 0 : index
    %c0_16 = arith.constant 0 : index
    %8 = vector.load %arg10[%c0_15, %c0_16] : memref<1x32xf32, #tpu.memory_space<vmem>>, vector<1x32xf32>
    %c0_17 = arith.constant 0 : index
    %c0_18 = arith.constant 0 : index
    %9 = vector.load %arg11[%c0_17, %c0_18] : memref<1x32xf32, #tpu.memory_space<vmem>>, vector<1x32xf32>
    %c0_19 = arith.constant 0 : index
    %c0_20 = arith.constant 0 : index
    %10 = vector.load %arg12[%c0_19, %c0_20] : memref<64x32xf32, #tpu.memory_space<vmem>>, vector<64x32xf32>
    %c0_21 = arith.constant 0 : index
    %c0_22 = arith.constant 0 : index
    %11 = vector.load %arg13[%c0_21, %c0_22] : memref<64x16xf32, #tpu.memory_space<vmem>>, vector<64x16xf32>
    %c0_23 = arith.constant 0 : index
    %c0_24 = arith.constant 0 : index
    %12 = vector.load %arg14[%c0_23, %c0_24] : memref<64x32xf32, #tpu.memory_space<vmem>>, vector<64x32xf32>
    %c0_25 = arith.constant 0 : index
    %c0_26 = arith.constant 0 : index
    %13 = vector.load %arg15[%c0_25, %c0_26] : memref<64x32xf32, #tpu.memory_space<vmem>>, vector<64x32xf32>
    %c0_27 = arith.constant 0 : index
    %c0_28 = arith.constant 0 : index
    %14 = vector.load %arg16[%c0_27, %c0_28] : memref<32x32xf32, #tpu.memory_space<vmem>>, vector<32x32xf32>
    %c0_29 = arith.constant 0 : index
    %c0_30 = arith.constant 0 : index
    %15 = vector.load %arg17[%c0_29, %c0_30] : memref<16x64xf32, #tpu.memory_space<vmem>>, vector<16x64xf32>
    %c0_31 = arith.constant 0 : index
    %c0_32 = arith.constant 0 : index
    %16 = vector.load %arg1[%c0_31, %c0_32] : memref<16x32xf32, #tpu.memory_space<vmem>>, vector<16x32xf32>
    %cst = arith.constant dense<0.000000e+00> : vector<16x32xf32>
    %17 = tpu.matmul %16, %0, %cst {dimension_numbers = #tpu.dot_dimension_numbers<[1], [0], [0], [1], [0, 0, 1, 1], [], []>} : vector<16x32xf32>, vector<32x32xf32>, vector<16x32xf32> -> vector<16x32xf32>
    %18 = vector.broadcast %1 : vector<1x32xf32> to vector<16x32xf32>
    %19 = arith.addf %17, %18 : vector<16x32xf32>
    %cst_33 = arith.constant 0.000000e+00 : f32
    %20 = vector.broadcast %cst_33 : f32 to vector<16x32xf32>
    %21 = arith.maximumf %19, %20 : vector<16x32xf32>
    %cst_34 = arith.constant dense<0.000000e+00> : vector<16x32xf32>
    %22 = tpu.matmul %16, %2, %cst_34 {dimension_numbers = #tpu.dot_dimension_numbers<[1], [0], [0], [1], [0, 0, 1, 1], [], []>} : vector<16x32xf32>, vector<32x32xf32>, vector<16x32xf32> -> vector<16x32xf32>
    %23 = vector.broadcast %3 : vector<1x32xf32> to vector<16x32xf32>
    %24 = arith.addf %22, %23 : vector<16x32xf32>
    %cst_35 = arith.constant 0.000000e+00 : f32
    %25 = vector.broadcast %cst_35 : f32 to vector<16x32xf32>
    %26 = arith.maximumf %24, %25 : vector<16x32xf32>
    %cst_36 = arith.constant dense<0.000000e+00> : vector<16x32xf32>
    %27 = tpu.matmul %16, %4, %cst_36 {dimension_numbers = #tpu.dot_dimension_numbers<[1], [0], [0], [1], [0, 0, 1, 1], [], []>} : vector<16x32xf32>, vector<32x32xf32>, vector<16x32xf32> -> vector<16x32xf32>
    %28 = vector.broadcast %5 : vector<1x32xf32> to vector<16x32xf32>
    %29 = arith.addf %27, %28 : vector<16x32xf32>
    %cst_37 = arith.constant 0.000000e+00 : f32
    %30 = vector.broadcast %cst_37 : f32 to vector<16x32xf32>
    %31 = arith.maximumf %29, %30 : vector<16x32xf32>
    %32 = tpu.concatenate %21, %21, %21, %21 in 0 : vector<16x32xf32>, vector<16x32xf32>, vector<16x32xf32>, vector<16x32xf32> -> vector<64x32xf32>
    %33 = arith.mulf %32, %10 : vector<64x32xf32>
    %cst_38 = arith.constant dense<0.000000e+00> : vector<64x16xf32>
    %34 = tpu.matmul %33, %26, %cst_38 {dimension_numbers = #tpu.dot_dimension_numbers<[1], [1], [0], [0], [0, 0, 1, 0], [], []>} : vector<64x32xf32>, vector<16x32xf32>, vector<64x16xf32> -> vector<64x16xf32>
    %cst_39 = arith.constant 0.353553385 : f32
    %35 = vector.broadcast %cst_39 : f32 to vector<64x16xf32>
    %36 = arith.mulf %34, %35 : vector<64x16xf32>
    %37 = arith.addf %36, %11 : vector<64x16xf32>
    %cst_40 = arith.constant dense<0xFF800000> : vector<64xf32>
    %38 = vector.multi_reduction <maximumf>, %37, %cst_40 [1] : vector<64x16xf32> to vector<64xf32>
    %39 = vector.shape_cast %38 : vector<64xf32> to vector<64x1xf32>
    %40 = vector.broadcast %39 : vector<64x1xf32> to vector<64x16xf32>
    %41 = arith.subf %37, %40 : vector<64x16xf32>
    %42 = math.exp %41 : vector<64x16xf32>
    %cst_41 = arith.constant dense<0.000000e+00> : vector<64xf32>
    %43 = vector.multi_reduction <add>, %42, %cst_41 [1] : vector<64x16xf32> to vector<64xf32>
    %44 = vector.shape_cast %43 : vector<64xf32> to vector<64x1xf32>
    %45 = tpu.reciprocal %44 {approx = true} : vector<64x1xf32> -> vector<64x1xf32>
    %46 = vector.broadcast %45 : vector<64x1xf32> to vector<64x16xf32>
    %47 = arith.mulf %42, %46 : vector<64x16xf32>
    %cst_42 = arith.constant dense<0.000000e+00> : vector<64x32xf32>
    %48 = tpu.matmul %47, %31, %cst_42 {dimension_numbers = #tpu.dot_dimension_numbers<[1], [0], [0], [1], [0, 0, 1, 1], [], []>} : vector<64x16xf32>, vector<16x32xf32>, vector<64x32xf32> -> vector<64x32xf32>
    %49 = arith.mulf %48, %12 : vector<64x32xf32>
    %cst_43 = arith.constant dense<0.000000e+00> : vector<64x32xf32>
    %50 = tpu.matmul %49, %14, %cst_43 {dimension_numbers = #tpu.dot_dimension_numbers<[1], [0], [0], [1], [0, 0, 1, 1], [], []>} : vector<64x32xf32>, vector<32x32xf32>, vector<64x32xf32> -> vector<64x32xf32>
    %51 = arith.mulf %50, %13 : vector<64x32xf32>
    %cst_44 = arith.constant dense<0.000000e+00> : vector<64x32xf32>
    %52 = tpu.matmul %51, %6, %cst_44 {dimension_numbers = #tpu.dot_dimension_numbers<[1], [0], [0], [1], [0, 0, 1, 1], [], []>} : vector<64x32xf32>, vector<32x32xf32>, vector<64x32xf32> -> vector<64x32xf32>
    %cst_45 = arith.constant dense<0.000000e+00> : vector<16x32xf32>
    %53 = tpu.matmul %15, %52, %cst_45 {dimension_numbers = #tpu.dot_dimension_numbers<[1], [0], [0], [1], [0, 0, 1, 1], [], []>} : vector<16x64xf32>, vector<64x32xf32>, vector<16x32xf32> -> vector<16x32xf32>
    %54 = vector.broadcast %7 : vector<1x32xf32> to vector<16x32xf32>
    %55 = arith.addf %53, %54 : vector<16x32xf32>
    %cst_46 = arith.constant 0.000000e+00 : f32
    %56 = vector.broadcast %cst_46 : f32 to vector<16x32xf32>
    %57 = arith.maximumf %55, %56 : vector<16x32xf32>
    %cst_47 = arith.constant dense<0.000000e+00> : vector<16xf32>
    %58 = vector.multi_reduction <add>, %57, %cst_47 [1] : vector<16x32xf32> to vector<16xf32>
    %59 = vector.shape_cast %58 : vector<16xf32> to vector<16x1xf32>
    %cst_48 = arith.constant 3.200000e+01 : f32
    %60 = vector.broadcast %cst_48 : f32 to vector<16x1xf32>
    %61 = arith.divf %59, %60 : vector<16x1xf32>
    %62 = vector.broadcast %61 : vector<16x1xf32> to vector<16x32xf32>
    %63 = arith.subf %57, %62 : vector<16x32xf32>
    %64 = arith.mulf %63, %63 : vector<16x32xf32>
    %cst_49 = arith.constant dense<0.000000e+00> : vector<16xf32>
    %65 = vector.multi_reduction <add>, %64, %cst_49 [1] : vector<16x32xf32> to vector<16xf32>
    %66 = vector.shape_cast %65 : vector<16xf32> to vector<16x1xf32>
    %cst_50 = arith.constant 3.200000e+01 : f32
    %67 = vector.broadcast %cst_50 : f32 to vector<16x1xf32>
    %68 = arith.divf %66, %67 : vector<16x1xf32>
    %cst_51 = arith.constant 9.99999974E-6 : f32
    %69 = vector.broadcast %cst_51 : f32 to vector<16x1xf32>
    %70 = arith.addf %68, %69 : vector<16x1xf32>
    %71 = math.rsqrt %70 : vector<16x1xf32>
    %72 = vector.broadcast %71 : vector<16x1xf32> to vector<16x32xf32>
    %73 = arith.mulf %63, %72 : vector<16x32xf32>
    %74 = vector.broadcast %8 : vector<1x32xf32> to vector<16x32xf32>
    %75 = arith.mulf %73, %74 : vector<16x32xf32>
    %76 = vector.broadcast %9 : vector<1x32xf32> to vector<16x32xf32>
    %77 = arith.addf %75, %76 : vector<16x32xf32>
    %cst_52 = arith.constant dense<0.000000e+00> : vector<16x32xf32>
    %78 = tpu.matmul %77, %0, %cst_52 {dimension_numbers = #tpu.dot_dimension_numbers<[1], [0], [0], [1], [0, 0, 1, 1], [], []>} : vector<16x32xf32>, vector<32x32xf32>, vector<16x32xf32> -> vector<16x32xf32>
    %79 = vector.broadcast %1 : vector<1x32xf32> to vector<16x32xf32>
    %80 = arith.addf %78, %79 : vector<16x32xf32>
    %cst_53 = arith.constant 0.000000e+00 : f32
    %81 = vector.broadcast %cst_53 : f32 to vector<16x32xf32>
    %82 = arith.maximumf %80, %81 : vector<16x32xf32>
    %cst_54 = arith.constant dense<0.000000e+00> : vector<16x32xf32>
    %83 = tpu.matmul %77, %2, %cst_54 {dimension_numbers = #tpu.dot_dimension_numbers<[1], [0], [0], [1], [0, 0, 1, 1], [], []>} : vector<16x32xf32>, vector<32x32xf32>, vector<16x32xf32> -> vector<16x32xf32>
    %84 = vector.broadcast %3 : vector<1x32xf32> to vector<16x32xf32>
    %85 = arith.addf %83, %84 : vector<16x32xf32>
    %cst_55 = arith.constant 0.000000e+00 : f32
    %86 = vector.broadcast %cst_55 : f32 to vector<16x32xf32>
    %87 = arith.maximumf %85, %86 : vector<16x32xf32>
    %cst_56 = arith.constant dense<0.000000e+00> : vector<16x32xf32>
    %88 = tpu.matmul %77, %4, %cst_56 {dimension_numbers = #tpu.dot_dimension_numbers<[1], [0], [0], [1], [0, 0, 1, 1], [], []>} : vector<16x32xf32>, vector<32x32xf32>, vector<16x32xf32> -> vector<16x32xf32>
    %89 = vector.broadcast %5 : vector<1x32xf32> to vector<16x32xf32>
    %90 = arith.addf %88, %89 : vector<16x32xf32>
    %cst_57 = arith.constant 0.000000e+00 : f32
    %91 = vector.broadcast %cst_57 : f32 to vector<16x32xf32>
    %92 = arith.maximumf %90, %91 : vector<16x32xf32>
    %93 = tpu.concatenate %82, %82, %82, %82 in 0 : vector<16x32xf32>, vector<16x32xf32>, vector<16x32xf32>, vector<16x32xf32> -> vector<64x32xf32>
    %94 = arith.mulf %93, %10 : vector<64x32xf32>
    %cst_58 = arith.constant dense<0.000000e+00> : vector<64x16xf32>
    %95 = tpu.matmul %94, %87, %cst_58 {dimension_numbers = #tpu.dot_dimension_numbers<[1], [1], [0], [0], [0, 0, 1, 0], [], []>} : vector<64x32xf32>, vector<16x32xf32>, vector<64x16xf32> -> vector<64x16xf32>
    %cst_59 = arith.constant 0.353553385 : f32
    %96 = vector.broadcast %cst_59 : f32 to vector<64x16xf32>
    %97 = arith.mulf %95, %96 : vector<64x16xf32>
    %98 = arith.addf %97, %11 : vector<64x16xf32>
    %cst_60 = arith.constant dense<0xFF800000> : vector<64xf32>
    %99 = vector.multi_reduction <maximumf>, %98, %cst_60 [1] : vector<64x16xf32> to vector<64xf32>
    %100 = vector.shape_cast %99 : vector<64xf32> to vector<64x1xf32>
    %101 = vector.broadcast %100 : vector<64x1xf32> to vector<64x16xf32>
    %102 = arith.subf %98, %101 : vector<64x16xf32>
    %103 = math.exp %102 : vector<64x16xf32>
    %cst_61 = arith.constant dense<0.000000e+00> : vector<64xf32>
    %104 = vector.multi_reduction <add>, %103, %cst_61 [1] : vector<64x16xf32> to vector<64xf32>
    %105 = vector.shape_cast %104 : vector<64xf32> to vector<64x1xf32>
    %106 = tpu.reciprocal %105 {approx = true} : vector<64x1xf32> -> vector<64x1xf32>
    %107 = vector.broadcast %106 : vector<64x1xf32> to vector<64x16xf32>
    %108 = arith.mulf %103, %107 : vector<64x16xf32>
    %cst_62 = arith.constant dense<0.000000e+00> : vector<64x32xf32>
    %109 = tpu.matmul %108, %92, %cst_62 {dimension_numbers = #tpu.dot_dimension_numbers<[1], [0], [0], [1], [0, 0, 1, 1], [], []>} : vector<64x16xf32>, vector<16x32xf32>, vector<64x32xf32> -> vector<64x32xf32>
    %110 = arith.mulf %109, %12 : vector<64x32xf32>
    %cst_63 = arith.constant dense<0.000000e+00> : vector<64x32xf32>
    %111 = tpu.matmul %110, %14, %cst_63 {dimension_numbers = #tpu.dot_dimension_numbers<[1], [0], [0], [1], [0, 0, 1, 1], [], []>} : vector<64x32xf32>, vector<32x32xf32>, vector<64x32xf32> -> vector<64x32xf32>
    %112 = arith.mulf %111, %13 : vector<64x32xf32>
    %cst_64 = arith.constant dense<0.000000e+00> : vector<64x32xf32>
    %113 = tpu.matmul %112, %6, %cst_64 {dimension_numbers = #tpu.dot_dimension_numbers<[1], [0], [0], [1], [0, 0, 1, 1], [], []>} : vector<64x32xf32>, vector<32x32xf32>, vector<64x32xf32> -> vector<64x32xf32>
    %cst_65 = arith.constant dense<0.000000e+00> : vector<16x32xf32>
    %114 = tpu.matmul %15, %113, %cst_65 {dimension_numbers = #tpu.dot_dimension_numbers<[1], [0], [0], [1], [0, 0, 1, 1], [], []>} : vector<16x64xf32>, vector<64x32xf32>, vector<16x32xf32> -> vector<16x32xf32>
    %115 = vector.broadcast %7 : vector<1x32xf32> to vector<16x32xf32>
    %116 = arith.addf %114, %115 : vector<16x32xf32>
    %cst_66 = arith.constant 0.000000e+00 : f32
    %117 = vector.broadcast %cst_66 : f32 to vector<16x32xf32>
    %118 = arith.maximumf %116, %117 : vector<16x32xf32>
    %119 = arith.addf %118, %16 : vector<16x32xf32>
    %cst_67 = arith.constant dense<0.000000e+00> : vector<16xf32>
    %120 = vector.multi_reduction <add>, %119, %cst_67 [1] : vector<16x32xf32> to vector<16xf32>
    %121 = vector.shape_cast %120 : vector<16xf32> to vector<16x1xf32>
    %cst_68 = arith.constant 3.200000e+01 : f32
    %122 = vector.broadcast %cst_68 : f32 to vector<16x1xf32>
    %123 = arith.divf %121, %122 : vector<16x1xf32>
    %124 = vector.broadcast %123 : vector<16x1xf32> to vector<16x32xf32>
    %125 = arith.subf %119, %124 : vector<16x32xf32>
    %126 = arith.mulf %125, %125 : vector<16x32xf32>
    %cst_69 = arith.constant dense<0.000000e+00> : vector<16xf32>
    %127 = vector.multi_reduction <add>, %126, %cst_69 [1] : vector<16x32xf32> to vector<16xf32>
    %128 = vector.shape_cast %127 : vector<16xf32> to vector<16x1xf32>
    %cst_70 = arith.constant 3.200000e+01 : f32
    %129 = vector.broadcast %cst_70 : f32 to vector<16x1xf32>
    %130 = arith.divf %128, %129 : vector<16x1xf32>
    %cst_71 = arith.constant 9.99999974E-6 : f32
    %131 = vector.broadcast %cst_71 : f32 to vector<16x1xf32>
    %132 = arith.addf %130, %131 : vector<16x1xf32>
    %133 = math.rsqrt %132 : vector<16x1xf32>
    %134 = vector.broadcast %133 : vector<16x1xf32> to vector<16x32xf32>
    %135 = arith.mulf %125, %134 : vector<16x32xf32>
    %136 = vector.broadcast %8 : vector<1x32xf32> to vector<16x32xf32>
    %137 = arith.mulf %135, %136 : vector<16x32xf32>
    %138 = vector.broadcast %9 : vector<1x32xf32> to vector<16x32xf32>
    %139 = arith.addf %137, %138 : vector<16x32xf32>
    %cst_72 = arith.constant dense<0.000000e+00> : vector<16x32xf32>
    %140 = tpu.matmul %139, %0, %cst_72 {dimension_numbers = #tpu.dot_dimension_numbers<[1], [0], [0], [1], [0, 0, 1, 1], [], []>} : vector<16x32xf32>, vector<32x32xf32>, vector<16x32xf32> -> vector<16x32xf32>
    %141 = vector.broadcast %1 : vector<1x32xf32> to vector<16x32xf32>
    %142 = arith.addf %140, %141 : vector<16x32xf32>
    %cst_73 = arith.constant 0.000000e+00 : f32
    %143 = vector.broadcast %cst_73 : f32 to vector<16x32xf32>
    %144 = arith.maximumf %142, %143 : vector<16x32xf32>
    %cst_74 = arith.constant dense<0.000000e+00> : vector<16x32xf32>
    %145 = tpu.matmul %139, %2, %cst_74 {dimension_numbers = #tpu.dot_dimension_numbers<[1], [0], [0], [1], [0, 0, 1, 1], [], []>} : vector<16x32xf32>, vector<32x32xf32>, vector<16x32xf32> -> vector<16x32xf32>
    %146 = vector.broadcast %3 : vector<1x32xf32> to vector<16x32xf32>
    %147 = arith.addf %145, %146 : vector<16x32xf32>
    %cst_75 = arith.constant 0.000000e+00 : f32
    %148 = vector.broadcast %cst_75 : f32 to vector<16x32xf32>
    %149 = arith.maximumf %147, %148 : vector<16x32xf32>
    %cst_76 = arith.constant dense<0.000000e+00> : vector<16x32xf32>
    %150 = tpu.matmul %139, %4, %cst_76 {dimension_numbers = #tpu.dot_dimension_numbers<[1], [0], [0], [1], [0, 0, 1, 1], [], []>} : vector<16x32xf32>, vector<32x32xf32>, vector<16x32xf32> -> vector<16x32xf32>
    %151 = vector.broadcast %5 : vector<1x32xf32> to vector<16x32xf32>
    %152 = arith.addf %150, %151 : vector<16x32xf32>
    %cst_77 = arith.constant 0.000000e+00 : f32
    %153 = vector.broadcast %cst_77 : f32 to vector<16x32xf32>
    %154 = arith.maximumf %152, %153 : vector<16x32xf32>
    %155 = tpu.concatenate %144, %144, %144, %144 in 0 : vector<16x32xf32>, vector<16x32xf32>, vector<16x32xf32>, vector<16x32xf32> -> vector<64x32xf32>
    %156 = arith.mulf %155, %10 : vector<64x32xf32>
    %cst_78 = arith.constant dense<0.000000e+00> : vector<64x16xf32>
    %157 = tpu.matmul %156, %149, %cst_78 {dimension_numbers = #tpu.dot_dimension_numbers<[1], [1], [0], [0], [0, 0, 1, 0], [], []>} : vector<64x32xf32>, vector<16x32xf32>, vector<64x16xf32> -> vector<64x16xf32>
    %cst_79 = arith.constant 0.353553385 : f32
    %158 = vector.broadcast %cst_79 : f32 to vector<64x16xf32>
    %159 = arith.mulf %157, %158 : vector<64x16xf32>
    %160 = arith.addf %159, %11 : vector<64x16xf32>
    %cst_80 = arith.constant dense<0xFF800000> : vector<64xf32>
    %161 = vector.multi_reduction <maximumf>, %160, %cst_80 [1] : vector<64x16xf32> to vector<64xf32>
    %162 = vector.shape_cast %161 : vector<64xf32> to vector<64x1xf32>
    %163 = vector.broadcast %162 : vector<64x1xf32> to vector<64x16xf32>
    %164 = arith.subf %160, %163 : vector<64x16xf32>
    %165 = math.exp %164 : vector<64x16xf32>
    %cst_81 = arith.constant dense<0.000000e+00> : vector<64xf32>
    %166 = vector.multi_reduction <add>, %165, %cst_81 [1] : vector<64x16xf32> to vector<64xf32>
    %167 = vector.shape_cast %166 : vector<64xf32> to vector<64x1xf32>
    %168 = tpu.reciprocal %167 {approx = true} : vector<64x1xf32> -> vector<64x1xf32>
    %169 = vector.broadcast %168 : vector<64x1xf32> to vector<64x16xf32>
    %170 = arith.mulf %165, %169 : vector<64x16xf32>
    %cst_82 = arith.constant dense<0.000000e+00> : vector<64x32xf32>
    %171 = tpu.matmul %170, %154, %cst_82 {dimension_numbers = #tpu.dot_dimension_numbers<[1], [0], [0], [1], [0, 0, 1, 1], [], []>} : vector<64x16xf32>, vector<16x32xf32>, vector<64x32xf32> -> vector<64x32xf32>
    %172 = arith.mulf %171, %12 : vector<64x32xf32>
    %cst_83 = arith.constant dense<0.000000e+00> : vector<64x32xf32>
    %173 = tpu.matmul %172, %14, %cst_83 {dimension_numbers = #tpu.dot_dimension_numbers<[1], [0], [0], [1], [0, 0, 1, 1], [], []>} : vector<64x32xf32>, vector<32x32xf32>, vector<64x32xf32> -> vector<64x32xf32>
    %174 = arith.mulf %173, %13 : vector<64x32xf32>
    %cst_84 = arith.constant dense<0.000000e+00> : vector<64x32xf32>
    %175 = tpu.matmul %174, %6, %cst_84 {dimension_numbers = #tpu.dot_dimension_numbers<[1], [0], [0], [1], [0, 0, 1, 1], [], []>} : vector<64x32xf32>, vector<32x32xf32>, vector<64x32xf32> -> vector<64x32xf32>
    %cst_85 = arith.constant dense<0.000000e+00> : vector<16x32xf32>
    %176 = tpu.matmul %15, %175, %cst_85 {dimension_numbers = #tpu.dot_dimension_numbers<[1], [0], [0], [1], [0, 0, 1, 1], [], []>} : vector<16x64xf32>, vector<64x32xf32>, vector<16x32xf32> -> vector<16x32xf32>
    %177 = vector.broadcast %7 : vector<1x32xf32> to vector<16x32xf32>
    %178 = arith.addf %176, %177 : vector<16x32xf32>
    %cst_86 = arith.constant 0.000000e+00 : f32
    %179 = vector.broadcast %cst_86 : f32 to vector<16x32xf32>
    %180 = arith.maximumf %178, %179 : vector<16x32xf32>
    %cst_87 = arith.constant dense<0.000000e+00> : vector<16xf32>
    %181 = vector.multi_reduction <add>, %180, %cst_87 [1] : vector<16x32xf32> to vector<16xf32>
    %182 = vector.shape_cast %181 : vector<16xf32> to vector<16x1xf32>
    %cst_88 = arith.constant 3.200000e+01 : f32
    %183 = vector.broadcast %cst_88 : f32 to vector<16x1xf32>
    %184 = arith.divf %182, %183 : vector<16x1xf32>
    %185 = vector.broadcast %184 : vector<16x1xf32> to vector<16x32xf32>
    %186 = arith.subf %180, %185 : vector<16x32xf32>
    %187 = arith.mulf %186, %186 : vector<16x32xf32>
    %cst_89 = arith.constant dense<0.000000e+00> : vector<16xf32>
    %188 = vector.multi_reduction <add>, %187, %cst_89 [1] : vector<16x32xf32> to vector<16xf32>
    %189 = vector.shape_cast %188 : vector<16xf32> to vector<16x1xf32>
    %cst_90 = arith.constant 3.200000e+01 : f32
    %190 = vector.broadcast %cst_90 : f32 to vector<16x1xf32>
    %191 = arith.divf %189, %190 : vector<16x1xf32>
    %cst_91 = arith.constant 9.99999974E-6 : f32
    %192 = vector.broadcast %cst_91 : f32 to vector<16x1xf32>
    %193 = arith.addf %191, %192 : vector<16x1xf32>
    %194 = math.rsqrt %193 : vector<16x1xf32>
    %195 = vector.broadcast %194 : vector<16x1xf32> to vector<16x32xf32>
    %196 = arith.mulf %186, %195 : vector<16x32xf32>
    %197 = vector.broadcast %8 : vector<1x32xf32> to vector<16x32xf32>
    %198 = arith.mulf %196, %197 : vector<16x32xf32>
    %199 = vector.broadcast %9 : vector<1x32xf32> to vector<16x32xf32>
    %200 = arith.addf %198, %199 : vector<16x32xf32>
    %cst_92 = arith.constant dense<0.000000e+00> : vector<16x32xf32>
    %201 = tpu.matmul %200, %0, %cst_92 {dimension_numbers = #tpu.dot_dimension_numbers<[1], [0], [0], [1], [0, 0, 1, 1], [], []>} : vector<16x32xf32>, vector<32x32xf32>, vector<16x32xf32> -> vector<16x32xf32>
    %202 = vector.broadcast %1 : vector<1x32xf32> to vector<16x32xf32>
    %203 = arith.addf %201, %202 : vector<16x32xf32>
    %cst_93 = arith.constant 0.000000e+00 : f32
    %204 = vector.broadcast %cst_93 : f32 to vector<16x32xf32>
    %205 = arith.maximumf %203, %204 : vector<16x32xf32>
    %cst_94 = arith.constant dense<0.000000e+00> : vector<16x32xf32>
    %206 = tpu.matmul %200, %2, %cst_94 {dimension_numbers = #tpu.dot_dimension_numbers<[1], [0], [0], [1], [0, 0, 1, 1], [], []>} : vector<16x32xf32>, vector<32x32xf32>, vector<16x32xf32> -> vector<16x32xf32>
    %207 = vector.broadcast %3 : vector<1x32xf32> to vector<16x32xf32>
    %208 = arith.addf %206, %207 : vector<16x32xf32>
    %cst_95 = arith.constant 0.000000e+00 : f32
    %209 = vector.broadcast %cst_95 : f32 to vector<16x32xf32>
    %210 = arith.maximumf %208, %209 : vector<16x32xf32>
    %cst_96 = arith.constant dense<0.000000e+00> : vector<16x32xf32>
    %211 = tpu.matmul %200, %4, %cst_96 {dimension_numbers = #tpu.dot_dimension_numbers<[1], [0], [0], [1], [0, 0, 1, 1], [], []>} : vector<16x32xf32>, vector<32x32xf32>, vector<16x32xf32> -> vector<16x32xf32>
    %212 = vector.broadcast %5 : vector<1x32xf32> to vector<16x32xf32>
    %213 = arith.addf %211, %212 : vector<16x32xf32>
    %cst_97 = arith.constant 0.000000e+00 : f32
    %214 = vector.broadcast %cst_97 : f32 to vector<16x32xf32>
    %215 = arith.maximumf %213, %214 : vector<16x32xf32>
    %216 = tpu.concatenate %205, %205, %205, %205 in 0 : vector<16x32xf32>, vector<16x32xf32>, vector<16x32xf32>, vector<16x32xf32> -> vector<64x32xf32>
    %217 = arith.mulf %216, %10 : vector<64x32xf32>
    %cst_98 = arith.constant dense<0.000000e+00> : vector<64x16xf32>
    %218 = tpu.matmul %217, %210, %cst_98 {dimension_numbers = #tpu.dot_dimension_numbers<[1], [1], [0], [0], [0, 0, 1, 0], [], []>} : vector<64x32xf32>, vector<16x32xf32>, vector<64x16xf32> -> vector<64x16xf32>
    %cst_99 = arith.constant 0.353553385 : f32
    %219 = vector.broadcast %cst_99 : f32 to vector<64x16xf32>
    %220 = arith.mulf %218, %219 : vector<64x16xf32>
    %221 = arith.addf %220, %11 : vector<64x16xf32>
    %cst_100 = arith.constant dense<0xFF800000> : vector<64xf32>
    %222 = vector.multi_reduction <maximumf>, %221, %cst_100 [1] : vector<64x16xf32> to vector<64xf32>
    %223 = vector.shape_cast %222 : vector<64xf32> to vector<64x1xf32>
    %224 = vector.broadcast %223 : vector<64x1xf32> to vector<64x16xf32>
    %225 = arith.subf %221, %224 : vector<64x16xf32>
    %226 = math.exp %225 : vector<64x16xf32>
    %cst_101 = arith.constant dense<0.000000e+00> : vector<64xf32>
    %227 = vector.multi_reduction <add>, %226, %cst_101 [1] : vector<64x16xf32> to vector<64xf32>
    %228 = vector.shape_cast %227 : vector<64xf32> to vector<64x1xf32>
    %229 = tpu.reciprocal %228 {approx = true} : vector<64x1xf32> -> vector<64x1xf32>
    %230 = vector.broadcast %229 : vector<64x1xf32> to vector<64x16xf32>
    %231 = arith.mulf %226, %230 : vector<64x16xf32>
    %cst_102 = arith.constant dense<0.000000e+00> : vector<64x32xf32>
    %232 = tpu.matmul %231, %215, %cst_102 {dimension_numbers = #tpu.dot_dimension_numbers<[1], [0], [0], [1], [0, 0, 1, 1], [], []>} : vector<64x16xf32>, vector<16x32xf32>, vector<64x32xf32> -> vector<64x32xf32>
    %233 = arith.mulf %232, %12 : vector<64x32xf32>
    %cst_103 = arith.constant dense<0.000000e+00> : vector<64x32xf32>
    %234 = tpu.matmul %233, %14, %cst_103 {dimension_numbers = #tpu.dot_dimension_numbers<[1], [0], [0], [1], [0, 0, 1, 1], [], []>} : vector<64x32xf32>, vector<32x32xf32>, vector<64x32xf32> -> vector<64x32xf32>
    %235 = arith.mulf %234, %13 : vector<64x32xf32>
    %cst_104 = arith.constant dense<0.000000e+00> : vector<64x32xf32>
    %236 = tpu.matmul %235, %6, %cst_104 {dimension_numbers = #tpu.dot_dimension_numbers<[1], [0], [0], [1], [0, 0, 1, 1], [], []>} : vector<64x32xf32>, vector<32x32xf32>, vector<64x32xf32> -> vector<64x32xf32>
    %cst_105 = arith.constant dense<0.000000e+00> : vector<16x32xf32>
    %237 = tpu.matmul %15, %236, %cst_105 {dimension_numbers = #tpu.dot_dimension_numbers<[1], [0], [0], [1], [0, 0, 1, 1], [], []>} : vector<16x64xf32>, vector<64x32xf32>, vector<16x32xf32> -> vector<16x32xf32>
    %238 = vector.broadcast %7 : vector<1x32xf32> to vector<16x32xf32>
    %239 = arith.addf %237, %238 : vector<16x32xf32>
    %cst_106 = arith.constant 0.000000e+00 : f32
    %240 = vector.broadcast %cst_106 : f32 to vector<16x32xf32>
    %241 = arith.maximumf %239, %240 : vector<16x32xf32>
    %242 = arith.addf %241, %139 : vector<16x32xf32>
    %cst_107 = arith.constant dense<0.000000e+00> : vector<16xf32>
    %243 = vector.multi_reduction <add>, %242, %cst_107 [1] : vector<16x32xf32> to vector<16xf32>
    %244 = vector.shape_cast %243 : vector<16xf32> to vector<16x1xf32>
    %cst_108 = arith.constant 3.200000e+01 : f32
    %245 = vector.broadcast %cst_108 : f32 to vector<16x1xf32>
    %246 = arith.divf %244, %245 : vector<16x1xf32>
    %247 = vector.broadcast %246 : vector<16x1xf32> to vector<16x32xf32>
    %248 = arith.subf %242, %247 : vector<16x32xf32>
    %249 = arith.mulf %248, %248 : vector<16x32xf32>
    %cst_109 = arith.constant dense<0.000000e+00> : vector<16xf32>
    %250 = vector.multi_reduction <add>, %249, %cst_109 [1] : vector<16x32xf32> to vector<16xf32>
    %251 = vector.shape_cast %250 : vector<16xf32> to vector<16x1xf32>
    %cst_110 = arith.constant 3.200000e+01 : f32
    %252 = vector.broadcast %cst_110 : f32 to vector<16x1xf32>
    %253 = arith.divf %251, %252 : vector<16x1xf32>
    %cst_111 = arith.constant 9.99999974E-6 : f32
    %254 = vector.broadcast %cst_111 : f32 to vector<16x1xf32>
    %255 = arith.addf %253, %254 : vector<16x1xf32>
    %256 = math.rsqrt %255 : vector<16x1xf32>
    %257 = vector.broadcast %256 : vector<16x1xf32> to vector<16x32xf32>
    %258 = arith.mulf %248, %257 : vector<16x32xf32>
    %259 = vector.broadcast %8 : vector<1x32xf32> to vector<16x32xf32>
    %260 = arith.mulf %258, %259 : vector<16x32xf32>
    %261 = vector.broadcast %9 : vector<1x32xf32> to vector<16x32xf32>
    %262 = arith.addf %260, %261 : vector<16x32xf32>
    %c0_112 = arith.constant 0 : index
    %c0_113 = arith.constant 0 : index
    %263 = vector.load %arg18[%c0_112, %c0_113] : memref<16x32xf32, #tpu.memory_space<vmem>>, vector<16x32xf32>
    tpu.vector_store %arg18[%c0_112, %c0_113], %262 {strides = array<i32>} : memref<16x32xf32, #tpu.memory_space<vmem>>, vector<16x32xf32>,
    return
  }
  func.func @transform_0(%arg0: i32) -> (i32, i32) {
    %c0_i32 = arith.constant 0 : i32
    %c0_i32_0 = arith.constant 0 : i32
    %c0_i32_1 = arith.constant 0 : i32
    return %c0_i32, %c0_i32_0 : i32, i32
  }
  func.func @transform_1(%arg0: i32) -> (i32, i32) {
    %c0_i32 = arith.constant 0 : i32
    %c0_i32_0 = arith.constant 0 : i32
    %c0_i32_1 = arith.constant 0 : i32
    return %c0_i32, %c0_i32_0 : i32, i32
  }
  func.func @transform_2(%arg0: i32) -> (i32, i32) {
    %c0_i32 = arith.constant 0 : i32
    %c0_i32_0 = arith.constant 0 : i32
    %c0_i32_1 = arith.constant 0 : i32
    return %c0_i32, %c0_i32_0 : i32, i32
  }
  func.func @transform_3(%arg0: i32) -> (i32, i32) {
    %c0_i32 = arith.constant 0 : i32
    %c0_i32_0 = arith.constant 0 : i32
    %c0_i32_1 = arith.constant 0 : i32
    return %c0_i32, %c0_i32_0 : i32, i32
  }
  func.func @transform_4(%arg0: i32) -> (i32, i32) {
    %c0_i32 = arith.constant 0 : i32
    %c0_i32_0 = arith.constant 0 : i32
    %c0_i32_1 = arith.constant 0 : i32
    return %c0_i32, %c0_i32_0 : i32, i32
  }
  func.func @transform_5(%arg0: i32) -> (i32, i32) {
    %c0_i32 = arith.constant 0 : i32
    %c0_i32_0 = arith.constant 0 : i32
    %c0_i32_1 = arith.constant 0 : i32
    return %c0_i32, %c0_i32_0 : i32, i32
  }
  func.func @transform_6(%arg0: i32) -> (i32, i32) {
    %c0_i32 = arith.constant 0 : i32
    %c0_i32_0 = arith.constant 0 : i32
    %c0_i32_1 = arith.constant 0 : i32
    return %c0_i32, %c0_i32_0 : i32, i32
  }
  func.func @transform_7(%arg0: i32) -> (i32, i32) {
    %c0_i32 = arith.constant 0 : i32
    %c0_i32_0 = arith.constant 0 : i32
    %c0_i32_1 = arith.constant 0 : i32
    return %c0_i32, %c0_i32_0 : i32, i32
  }
  func.func @transform_8(%arg0: i32) -> (i32, i32) {
    %c0_i32 = arith.constant 0 : i32
    %c0_i32_0 = arith.constant 0 : i32
    %c0_i32_1 = arith.constant 0 : i32
    return %c0_i32, %c0_i32_0 : i32, i32
  }
  func.func @transform_9(%arg0: i32) -> (i32, i32) {
    %c0_i32 = arith.constant 0 : i32
    %c0_i32_0 = arith.constant 0 : i32
    %c0_i32_1 = arith.constant 0 : i32
    return %c0_i32, %c0_i32_0 : i32, i32
  }
  func.func @transform_10(%arg0: i32) -> (i32, i32) {
    %c0_i32 = arith.constant 0 : i32
    %c0_i32_0 = arith.constant 0 : i32
    %c0_i32_1 = arith.constant 0 : i32
    return %c0_i32, %c0_i32_0 : i32, i32
  }
  func.func @transform_11(%arg0: i32) -> (i32, i32) {
    %c0_i32 = arith.constant 0 : i32
    %c0_i32_0 = arith.constant 0 : i32
    %c0_i32_1 = arith.constant 0 : i32
    return %c0_i32, %c0_i32_0 : i32, i32
  }
  func.func @transform_12(%arg0: i32) -> (i32, i32) {
    %c0_i32 = arith.constant 0 : i32
    %c0_i32_0 = arith.constant 0 : i32
    %c0_i32_1 = arith.constant 0 : i32
    return %c0_i32, %c0_i32_0 : i32, i32
  }
  func.func @transform_13(%arg0: i32) -> (i32, i32) {
    %c0_i32 = arith.constant 0 : i32
    %c0_i32_0 = arith.constant 0 : i32
    %c0_i32_1 = arith.constant 0 : i32
    return %c0_i32, %c0_i32_0 : i32, i32
  }
  func.func @transform_14(%arg0: i32) -> (i32, i32) {
    %c0_i32 = arith.constant 0 : i32
    %c0_i32_0 = arith.constant 0 : i32
    %c0_i32_1 = arith.constant 0 : i32
    return %c0_i32, %c0_i32_0 : i32, i32
  }
  func.func @transform_15(%arg0: i32) -> (i32, i32) {
    %c0_i32 = arith.constant 0 : i32
    %c0_i32_0 = arith.constant 0 : i32
    %c0_i32_1 = arith.constant 0 : i32
    return %c0_i32, %c0_i32_0 : i32, i32
  }
  func.func @transform_16(%arg0: i32) -> (i32, i32) {
    %c0_i32 = arith.constant 0 : i32
    %c0_i32_0 = arith.constant 0 : i32
    %c0_i32_1 = arith.constant 0 : i32
    return %c0_i32, %c0_i32_0 : i32, i32
  }
  func.func @transform_17(%arg0: i32) -> (i32, i32) {
    %c0_i32 = arith.constant 0 : i32
    %c0_i32_0 = arith.constant 0 : i32
    %c0_i32_1 = arith.constant 0 : i32
    return %c0_i32, %c0_i32_0 : i32, i32
  }
}

</mosaic_0001>

<llo_original>
// kernel: encoder_forward.1
$region0: #{encoder_forward.1}
  #allocation0 [shape = 'u32[]', space=smem, size = 0x4, offset = 0x4, fixed_abs, tag = 'smem constant byte address 0x4 - core index']
  #allocation1 [shape = 'u32[144,128]{1,0:T(1,128)}', space=vmem, size = 0x12000, scoped, tag = 'internal scratch']
  %s0 = inlined_call_operand.hbm [shape: f32[16,32], index: 0, kind: input, shape index: {}]
  %s1 = inlined_call_operand.hbm [shape: f32[32,32], index: 1, kind: input, shape index: {}]
  %s2 = inlined_call_operand.vmem [shape: f32[1,32], index: 2, kind: input, shape index: {}]
  %s3 = inlined_call_operand.hbm [shape: f32[32,32], index: 3, kind: input, shape index: {}]
  %s4 = inlined_call_operand.vmem [shape: f32[1,32], index: 4, kind: input, shape index: {}]
  %s5 = inlined_call_operand.hbm [shape: f32[32,32], index: 5, kind: input, shape index: {}]
  %s6 = inlined_call_operand.vmem [shape: f32[1,32], index: 6, kind: input, shape index: {}]
  %s7 = inlined_call_operand.hbm [shape: f32[32,32], index: 7, kind: input, shape index: {}]
  %s8 = inlined_call_operand.hbm [shape: f32[1,32], index: 8, kind: input, shape index: {}]
  %s9 = inlined_call_operand.vmem [shape: f32[1,32], index: 9, kind: input, shape index: {}]
  %s10 = inlined_call_operand.vmem [shape: f32[1,32], index: 10, kind: input, shape index: {}]
  %s11 = inlined_call_operand.hbm [shape: f32[64,32], index: 11, kind: input, shape index: {}, may-alias: {11,13}]
  %s12 = inlined_call_operand.hbm [shape: f32[64,16], index: 12, kind: input, shape index: {}]
  %s13 = inlined_call_operand.hbm [shape: f32[64,32], index: 13, kind: input, shape index: {}, may-alias: {11,13}]
  %s14 = inlined_call_operand.hbm [shape: f32[64,32], index: 14, kind: input, shape index: {}]
  %s15 = inlined_call_operand.hbm [shape: f32[32,32], index: 15, kind: input, shape index: {}]
  %s16 = inlined_call_operand.vmem [shape: f32[16,64], index: 16, kind: input, shape index: {}]
  %s17 = inlined_call_operand.hbm [shape: f32[16,32], index: 17, kind: output, shape index: {}]
  %s18 = sld [smem:[#allocation0]]
  $region122: #{encoder_forward.1} parent=0
    _
  %s20 = ssub.s32 1, %s18
  %s21 = scalar_select 0, %s20, %s18
  $region1: #{encoder_forward.1} parent=0
    #allocation2 [shape = 'u8[8192]{0}', space=vmem, size = 0x2000, scoped, tag = 'input window, operand 0, single buffered']
    #allocation3 [shape = 's32[1]{0}', space=sflag, size = 0x4, scoped, tag = 'scoped memory for encoder_forward.1']
    #allocation4 [shape = 's32[1]{0}', space=sflag, size = 0x4, scoped, tag = 'scoped memory for encoder_forward.1']
    #allocation5 [shape = 'u8[16384]{0}', space=vmem, size = 0x4000, scoped, tag = 'input window, operand 1, single buffered']
    #allocation6 [shape = 's32[1]{0}', space=sflag, size = 0x4, scoped, tag = 'scoped memory for encoder_forward.1']
    #allocation7 [shape = 'u8[16384]{0}', space=vmem, size = 0x4000, scoped, tag = 'input window, operand 3, single buffered']
    #allocation8 [shape = 'u8[16384]{0}', space=vmem, size = 0x4000, scoped, tag = 'input window, operand 5, single buffered']
    #allocation9 [shape = 's32[1]{0}', space=sflag, size = 0x4, scoped, tag = 'scoped memory for encoder_forward.1']
    #allocation10 [shape = 'u8[16384]{0}', space=vmem, size = 0x4000, scoped, tag = 'input window, operand 7, single buffered']
    #allocation11 [shape = 'u8[512]{0}', space=vmem, size = 0x400, scoped, tag = 'input window, operand 8, single buffered']
    #allocation12 [shape = 's32[1]{0}', space=sflag, size = 0x4, scoped, tag = 'scoped memory for encoder_forward.1']
    #allocation13 [shape = 'u8[32768]{0}', space=vmem, size = 0x8000, scoped, tag = 'input window, operand 11, single buffered']
    #allocation14 [shape = 'u8[32768]{0}', space=vmem, size = 0x8000, scoped, tag = 'input window, operand 12, single buffered']
    #allocation15 [shape = 's32[1]{0}', space=sflag, size = 0x4, scoped, tag = 'scoped memory for encoder_forward.1']
    #allocation16 [shape = 'u8[32768]{0}', space=vmem, size = 0x8000, scoped, tag = 'input window, operand 13, single buffered']
    #allocation17 [shape = 'u8[32768]{0}', space=vmem, size = 0x8000, scoped, tag = 'input window, operand 14, single buffered']
    #allocation18 [shape = 's32[1]{0}', space=sflag, size = 0x4, scoped, tag = 'scoped memory for encoder_forward.1']
    #allocation19 [shape = 'u8[16384]{0}', space=vmem, size = 0x4000, scoped, tag = 'input window, operand 15, single buffered']
    #allocation20 [shape = 'u8[8192]{0}', space=vmem, size = 0x2000, scoped, tag = 'output window, operand 0, single buffered']
    %22 = vsyncpa [#allocation3], 0
    %23 = vsyncpa [#allocation6], 0
    %24 = vsyncpa [#allocation9], 0
    %25 = vsyncpa [#allocation12], 0
    %26 = vsyncpa [#allocation15], 0
    %27 = vsyncpa [#allocation18], 0
    %28 = vsyncpa [#allocation4], 0
    // Predicated region
    $region2: #{encoder_forward.1} parent=1 // pred_check
      _
    $region3: #{encoder_forward.1} parent=1 // pred_check_branch
      %30 = sbr.rel (0) target = $region5
    $region4: #{encoder_forward.1} parent=1 // pred_region
      %s32 = ssub.s32 256, 256
      %33 = vsyncadd [#allocation3], %s32
      %s34 = sshll.u32 [#allocation2], 4
      %s35 = int_to_ptr.vmem [resolvable:$true] %s34
      %40 = dma.hbm_to_vmem [thread:$0]  %s0, 256, %s35, [#allocation3], 128, 128, 8
    $region5: #{encoder_forward.1} parent=1 // pred_fallthru
      _
    // Predicated region
    $region6: #{encoder_forward.1} parent=1 // pred_check
      _
    $region7: #{encoder_forward.1} parent=1 // pred_check_branch
      %42 = sbr.rel (0) target = $region9
    $region8: #{encoder_forward.1} parent=1 // pred_region
      %s44 = ssub.s32 512, 512
      %45 = vsyncadd [#allocation6], %s44
      %s46 = sshll.u32 [#allocation5], 4
      %s47 = int_to_ptr.vmem [resolvable:$true] %s46
      %52 = dma.hbm_to_vmem [thread:$0]  %s1, 512, %s47, [#allocation6], 128, 128, 8
    $region9: #{encoder_forward.1} parent=1 // pred_fallthru
      _
    // Predicated region
    $region10: #{encoder_forward.1} parent=1 // pred_check
      _
    $region11: #{encoder_forward.1} parent=1 // pred_check_branch
      %54 = sbr.rel (0) target = $region13
    $region12: #{encoder_forward.1} parent=1 // pred_region
      _
    $region13: #{encoder_forward.1} parent=1 // pred_fallthru
      _
    // Predicated region
    $region14: #{encoder_forward.1} parent=1 // pred_check
      _
    $region15: #{encoder_forward.1} parent=1 // pred_check_branch
      %56 = sbr.rel (0) target = $region17
    $region16: #{encoder_forward.1} parent=1 // pred_region
      %s58 = ssub.s32 512, 512
      %59 = vsyncadd [#allocation6], %s58
      %s60 = sshll.u32 [#allocation7], 4
      %s61 = int_to_ptr.vmem [resolvable:$true] %s60
      %66 = dma.hbm_to_vmem [thread:$0]  %s3, 512, %s61, [#allocation6], 128, 128, 8
    $region17: #{encoder_forward.1} parent=1 // pred_fallthru
      _
    // Predicated region
    $region18: #{encoder_forward.1} parent=1 // pred_check
      _
    $region19: #{encoder_forward.1} parent=1 // pred_check_branch
      %68 = sbr.rel (0) target = $region21
    $region20: #{encoder_forward.1} parent=1 // pred_region
      _
    $region21: #{encoder_forward.1} parent=1 // pred_fallthru
      _
    // Predicated region
    $region22: #{encoder_forward.1} parent=1 // pred_check
      _
    $region23: #{encoder_forward.1} parent=1 // pred_check_branch
      %70 = sbr.rel (0) target = $region25
    $region24: #{encoder_forward.1} parent=1 // pred_region
      %s72 = ssub.s32 512, 512
      %73 = vsyncadd [#allocation9], %s72
      %s74 = sshll.u32 [#allocation8], 4
      %s75 = int_to_ptr.vmem [resolvable:$true] %s74
      %80 = dma.hbm_to_vmem [thread:$0]  %s5, 512, %s75, [#allocation9], 128, 128, 8
    $region25: #{encoder_forward.1} parent=1 // pred_fallthru
      _
    // Predicated region
    $region26: #{encoder_forward.1} parent=1 // pred_check
      _
    $region27: #{encoder_forward.1} parent=1 // pred_check_branch
      %82 = sbr.rel (0) target = $region29
    $region28: #{encoder_forward.1} parent=1 // pred_region
      _
    $region29: #{encoder_forward.1} parent=1 // pred_fallthru
      _
    // Predicated region
    $region30: #{encoder_forward.1} parent=1 // pred_check
      _
    $region31: #{encoder_forward.1} parent=1 // pred_check_branch
      %84 = sbr.rel (0) target = $region33
    $region32: #{encoder_forward.1} parent=1 // pred_region
      %s86 = ssub.s32 512, 512
      %87 = vsyncadd [#allocation9], %s86
      %s88 = sshll.u32 [#allocation10], 4
      %s89 = int_to_ptr.vmem [resolvable:$true] %s88
      %94 = dma.hbm_to_vmem [thread:$0]  %s7, 512, %s89, [#allocation9], 128, 128, 8
    $region33: #{encoder_forward.1} parent=1 // pred_fallthru
      _
    // Predicated region
    $region34: #{encoder_forward.1} parent=1 // pred_check
      _
    $region35: #{encoder_forward.1} parent=1 // pred_check_branch
      %96 = sbr.rel (0) target = $region37
    $region36: #{encoder_forward.1} parent=1 // pred_region
      %s98 = ssub.s32 16, 16
      %99 = vsyncadd [#allocation12], %s98
      %s101 = sshll.u32 [#allocation11], 4
      %s102 = int_to_ptr.vmem [resolvable:$true] %s101
      %104 = dma.hbm_to_vmem [thread:$0]  %s8, 16, %s102, [#allocation12]
    $region37: #{encoder_forward.1} parent=1 // pred_fallthru
      _
    // Predicated region
    $region38: #{encoder_forward.1} parent=1 // pred_check
      _
    $region39: #{encoder_forward.1} parent=1 // pred_check_branch
      %106 = sbr.rel (0) target = $region41
    $region40: #{encoder_forward.1} parent=1 // pred_region
      _
    $region41: #{encoder_forward.1} parent=1 // pred_fallthru
      _
    // Predicated region
    $region42: #{encoder_forward.1} parent=1 // pred_check
      _
    $region43: #{encoder_forward.1} parent=1 // pred_check_branch
      %108 = sbr.rel (0) target = $region45
    $region44: #{encoder_forward.1} parent=1 // pred_region
      _
    $region45: #{encoder_forward.1} parent=1 // pred_fallthru
      _
    // Predicated region
    $region46: #{encoder_forward.1} parent=1 // pred_check
      _
    $region47: #{encoder_forward.1} parent=1 // pred_check_branch
      %110 = sbr.rel (0) target = $region49
    $region48: #{encoder_forward.1} parent=1 // pred_region
      %s112 = ssub.s32 1024, 1024
      %113 = vsyncadd [#allocation12], %s112
      %s114 = sshll.u32 [#allocation13], 4
      %s115 = int_to_ptr.vmem [resolvable:$true] %s114
      %120 = dma.hbm_to_vmem [thread:$0]  %s11, 1024, %s115, [#allocation12], 128, 128, 8
    $region49: #{encoder_forward.1} parent=1 // pred_fallthru
      _
    // Predicated region
    $region50: #{encoder_forward.1} parent=1 // pred_check
      _
    $region51: #{encoder_forward.1} parent=1 // pred_check_branch
      %122 = sbr.rel (0) target = $region53
    $region52: #{encoder_forward.1} parent=1 // pred_region
      %s124 = ssub.s32 1024, 1024
      %125 = vsyncadd [#allocation15], %s124
      %s126 = sshll.u32 [#allocation14], 4
      %s127 = int_to_ptr.vmem [resolvable:$true] %s126
      %132 = dma.hbm_to_vmem [thread:$0]  %s12, 1024, %s127, [#allocation15], 128, 128, 8
    $region53: #{encoder_forward.1} parent=1 // pred_fallthru
      _
    // Predicated region
    $region54: #{encoder_forward.1} parent=1 // pred_check
      _
    $region55: #{encoder_forward.1} parent=1 // pred_check_branch
      %134 = sbr.rel (0) target = $region57
    $region56: #{encoder_forward.1} parent=1 // pred_region
      %s136 = ssub.s32 1024, 1024
      %137 = vsyncadd [#allocation15], %s136
      %s138 = sshll.u32 [#allocation16], 4
      %s139 = int_to_ptr.vmem [resolvable:$true] %s138
      %144 = dma.hbm_to_vmem [thread:$0]  %s13, 1024, %s139, [#allocation15], 128, 128, 8
    $region57: #{encoder_forward.1} parent=1 // pred_fallthru
      _
    // Predicated region
    $region58: #{encoder_forward.1} parent=1 // pred_check
      _
    $region59: #{encoder_forward.1} parent=1 // pred_check_branch
      %146 = sbr.rel (0) target = $region61
    $region60: #{encoder_forward.1} parent=1 // pred_region
      %s148 = ssub.s32 1024, 1024
      %149 = vsyncadd [#allocation18], %s148
      %s150 = sshll.u32 [#allocation17], 4
      %s151 = int_to_ptr.vmem [resolvable:$true] %s150
      %156 = dma.hbm_to_vmem [thread:$0]  %s14, 1024, %s151, [#allocation18], 128, 128, 8
    $region61: #{encoder_forward.1} parent=1 // pred_fallthru
      _
    // Predicated region
    $region62: #{encoder_forward.1} parent=1 // pred_check
      _
    $region63: #{encoder_forward.1} parent=1 // pred_check_branch
      %158 = sbr.rel (0) target = $region65
    $region64: #{encoder_forward.1} parent=1 // pred_region
      %s160 = ssub.s32 512, 512
      %161 = vsyncadd [#allocation18], %s160
      %s162 = sshll.u32 [#allocation19], 4
      %s163 = int_to_ptr.vmem [resolvable:$true] %s162
      %168 = dma.hbm_to_vmem [thread:$0]  %s15, 512, %s163, [#allocation18], 128, 128, 8
    $region65: #{encoder_forward.1} parent=1 // pred_fallthru
      _
    // Predicated region
    $region66: #{encoder_forward.1} parent=1 // pred_check
      _
    $region67: #{encoder_forward.1} parent=1 // pred_check_branch
      %170 = sbr.rel (0) target = $region69
    $region68: #{encoder_forward.1} parent=1 // pred_region
      _
    $region69: #{encoder_forward.1} parent=1 // pred_fallthru
      _
    // Predicated region
    $region70: #{encoder_forward.1} parent=1 // pred_check
      _
    $region71: #{encoder_forward.1} parent=1 // pred_check_branch
      %172 = sbr.rel (0) target = $region73
    $region72: #{encoder_forward.1} parent=1 // pred_region
      %173 = dma.done [#allocation3], 256
    $region73: #{encoder_forward.1} parent=1 // pred_fallthru
      _
    // Predicated region
    $region74: #{encoder_forward.1} parent=1 // pred_check
      _
    $region75: #{encoder_forward.1} parent=1 // pred_check_branch
      %175 = sbr.rel (0) target = $region77
    $region76: #{encoder_forward.1} parent=1 // pred_region
      %176 = dma.done [#allocation6], 512
    $region77: #{encoder_forward.1} parent=1 // pred_fallthru
      _
    // Predicated region
    $region78: #{encoder_forward.1} parent=1 // pred_check
      _
    $region79: #{encoder_forward.1} parent=1 // pred_check_branch
      %178 = sbr.rel (0) target = $region81
    $region80: #{encoder_forward.1} parent=1 // pred_region
      %179 = dma.done [#allocation6], 512
    $region81: #{encoder_forward.1} parent=1 // pred_fallthru
      _
    // Predicated region
    $region82: #{encoder_forward.1} parent=1 // pred_check
      _
    $region83: #{encoder_forward.1} parent=1 // pred_check_branch
      %181 = sbr.rel (0) target = $region85
    $region84: #{encoder_forward.1} parent=1 // pred_region
      %182 = dma.done [#allocation9], 512
    $region85: #{encoder_forward.1} parent=1 // pred_fallthru
      _
    // Predicated region
    $region86: #{encoder_forward.1} parent=1 // pred_check
      _
    $region87: #{encoder_forward.1} parent=1 // pred_check_branch
      %184 = sbr.rel (0) target = $region89
    $region88: #{encoder_forward.1} parent=1 // pred_region
      %185 = dma.done [#allocation9], 512
    $region89: #{encoder_forward.1} parent=1 // pred_fallthru
      _
    // Predicated region
    $region90: #{encoder_forward.1} parent=1 // pred_check
      _
    $region91: #{encoder_forward.1} parent=1 // pred_check_branch
      %187 = sbr.rel (0) target = $region93
    $region92: #{encoder_forward.1} parent=1 // pred_region
      %188 = dma.done [#allocation12], 16
    $region93: #{encoder_forward.1} parent=1 // pred_fallthru
      _
    // Predicated region
    $region94: #{encoder_forward.1} parent=1 // pred_check
      _
    $region95: #{encoder_forward.1} parent=1 // pred_check_branch
      %190 = sbr.rel (0) target = $region97
    $region96: #{encoder_forward.1} parent=1 // pred_region
      %191 = dma.done [#allocation12], 1024
    $region97: #{encoder_forward.1} parent=1 // pred_fallthru
      _
    // Predicated region
    $region98: #{encoder_forward.1} parent=1 // pred_check
      _
    $region99: #{encoder_forward.1} parent=1 // pred_check_branch
      %193 = sbr.rel (0) target = $region101
    $region100: #{encoder_forward.1} parent=1 // pred_region
      %194 = dma.done [#allocation15], 1024
    $region101: #{encoder_forward.1} parent=1 // pred_fallthru
      _
    // Predicated region
    $region102: #{encoder_forward.1} parent=1 // pred_check
      _
    $region103: #{encoder_forward.1} parent=1 // pred_check_branch
      %196 = sbr.rel (0) target = $region105
    $region104: #{encoder_forward.1} parent=1 // pred_region
      %197 = dma.done [#allocation15], 1024
    $region105: #{encoder_forward.1} parent=1 // pred_fallthru
      _
    // Predicated region
    $region106: #{encoder_forward.1} parent=1 // pred_check
      _
    $region107: #{encoder_forward.1} parent=1 // pred_check_branch
      %199 = sbr.rel (0) target = $region109
    $region108: #{encoder_forward.1} parent=1 // pred_region
      %200 = dma.done [#allocation18], 1024
    $region109: #{encoder_forward.1} parent=1 // pred_fallthru
      _
    // Predicated region
    $region110: #{encoder_forward.1} parent=1 // pred_check
      _
    $region111: #{encoder_forward.1} parent=1 // pred_check_branch
      %202 = sbr.rel (0) target = $region113
    $region112: #{encoder_forward.1} parent=1 // pred_region
      %203 = dma.done [#allocation18], 512
    $region113: #{encoder_forward.1} parent=1 // pred_fallthru
      _
    %v204 = vld [vmem:[#allocation5] sm:$0xff]
    %v205 = vld [vmem:[#allocation5 + $0x8] sm:$0xff]
    %v206 = vld [vmem:[#allocation5 + $0x10] sm:$0xff]
    %v207 = vld [vmem:[#allocation5 + $0x18] sm:$0xff]
    %v208 = vld [vmem:[%s2] sm:$0x1]
    %v209 = vld [vmem:[#allocation7] sm:$0xff]
    %v210 = vld [vmem:[#allocation7 + $0x8] sm:$0xff]
    %v211 = vld [vmem:[#allocation7 + $0x10] sm:$0xff]
    %v212 = vld [vmem:[#allocation7 + $0x18] sm:$0xff]
    %v213 = vld [vmem:[%s4] sm:$0x1]
    %v214 = vld [vmem:[#allocation8] sm:$0xff]
    %v215 = vld [vmem:[#allocation8 + $0x8] sm:$0xff]
    %v216 = vld [vmem:[#allocation8 + $0x10] sm:$0xff]
    %v217 = vld [vmem:[#allocation8 + $0x18] sm:$0xff]
    %v218 = vld [vmem:[%s6] sm:$0x1]
    %v219 = vld [vmem:[#allocation10] sm:$0xff]
    %v220 = vld [vmem:[#allocation10 + $0x8] sm:$0xff]
    %v221 = vld [vmem:[#allocation10 + $0x10] sm:$0xff]
    %v222 = vld [vmem:[#allocation10 + $0x18] sm:$0xff]
    %v223 = vld [vmem:[#allocation11] sm:$0x1]
    %v224 = vld [vmem:[%s9] sm:$0x1]
    %v225 = vld [vmem:[%s10] sm:$0x1]
    %v226 = vld [vmem:[#allocation13] sm:$0xff]
    %v227 = vld [vmem:[#allocation13 + $0x8] sm:$0xff]
    %v228 = vld [vmem:[#allocation13 + $0x10] sm:$0xff]
    %v229 = vld [vmem:[#allocation13 + $0x18] sm:$0xff]
    %v230 = vld [vmem:[#allocation13 + $0x20] sm:$0xff]
    %v231 = vld [vmem:[#allocation13 + $0x28] sm:$0xff]
    %v232 = vld [vmem:[#allocation13 + $0x30] sm:$0xff]
    %v233 = vld [vmem:[#allocation13 + $0x38] sm:$0xff]
    %v234 = vld [vmem:[#allocation14] sm:$0xff]
    %v235 = vld [vmem:[#allocation14 + $0x8] sm:$0xff]
    %v236 = vld [vmem:[#allocation14 + $0x10] sm:$0xff]
    %v237 = vld [vmem:[#allocation14 + $0x18] sm:$0xff]
    %v238 = vld [vmem:[#allocation14 + $0x20] sm:$0xff]
    %v239 = vld [vmem:[#allocation14 + $0x28] sm:$0xff]
    %v240 = vld [vmem:[#allocation14 + $0x30] sm:$0xff]
    %v241 = vld [vmem:[#allocation14 + $0x38] sm:$0xff]
    %v242 = vld [vmem:[#allocation16] sm:$0xff]
    %v243 = vld [vmem:[#allocation16 + $0x8] sm:$0xff]
    %v244 = vld [vmem:[#allocation16 + $0x10] sm:$0xff]
    %v245 = vld [vmem:[#allocation16 + $0x18] sm:$0xff]
    %v246 = vld [vmem:[#allocation16 + $0x20] sm:$0xff]
    %v247 = vld [vmem:[#allocation16 + $0x28] sm:$0xff]
    %v248 = vld [vmem:[#allocation16 + $0x30] sm:$0xff]
    %v249 = vld [vmem:[#allocation16 + $0x38] sm:$0xff]
    %v250 = vld [vmem:[#allocation17] sm:$0xff]
    %v251 = vld [vmem:[#allocation17 + $0x8] sm:$0xff]
    %v252 = vld [vmem:[#allocation17 + $0x10] sm:$0xff]
    %v253 = vld [vmem:[#allocation17 + $0x18] sm:$0xff]
    %v254 = vld [vmem:[#allocation17 + $0x20] sm:$0xff]
    %v255 = vld [vmem:[#allocation17 + $0x28] sm:$0xff]
    %v256 = vld [vmem:[#allocation17 + $0x30] sm:$0xff]
    %v257 = vld [vmem:[#allocation17 + $0x38] sm:$0xff]
    %v258 = vld [vmem:[#allocation19] sm:$0xff]
    %v259 = vld [vmem:[#allocation19 + $0x8] sm:$0xff]
    %v260 = vld [vmem:[#allocation19 + $0x10] sm:$0xff]
    %v261 = vld [vmem:[#allocation19 + $0x18] sm:$0xff]
    %v262 = vld [vmem:[%s16] sm:$0xff]
    %v263 = vld [vmem:[%s16 + $0x8] sm:$0xff]
    %v264 = vld [vmem:[#allocation2] sm:$0xff]
    %v265 = vld [vmem:[#allocation2 + $0x8] sm:$0xff]
    %v267 = vlaneseq
    %v268 = vshrl.u32 %v267, 7
    %v269 = vsub.s32 0, %v268
    %v270 = vrot.slane %v208, %v269
    %vm272 = vcmask 261120
    %v274 = vsel %vm272, %v264, 0
    %v277 = vsel %vm272, %v265, 0
    %279 = vmatprep.subr.mxu0 0.0
    %280 = vmatpush1.msra.mxu0 0.0
    %281 = vmatprep.subr.mxu0 0.0
    %282 = vmatpush1.msra.mxu0 0.0
    %283 = vmatprep.subr.mxu0 0.0
    %284 = vmatpush1.msra.mxu0 0.0
    %285 = vmatprep.subr.mxu0 0.0
    %286 = vmatpush1.msra.mxu0 0.0
    %287 = vmatprep.subr.mxu0 0.0
    %288 = vmatpush1.msra.mxu0 0.0
    %289 = vmatprep.subr.mxu0 0.0
    %290 = vmatpush1.msra.mxu0 0.0
    %291 = vmatprep.subr.mxu0 0.0
    %292 = vmatpush1.msra.mxu0 0.0
    %293 = vmatprep.subr.mxu0 0.0
    %294 = vmatpush1.msra.mxu0 0.0
    %295 = vmatprep.subr.mxu0 0.0
    %296 = vmatpush1.msra.mxu0 0.0
    %297 = vmatprep.subr.mxu0 0.0
    %298 = vmatpush1.msra.mxu0 0.0
    %299 = vmatprep.subr.mxu0 0.0
    %300 = vmatpush1.msra.mxu0 0.0
    %301 = vmatprep.subr.mxu0 0.0
    %302 = vmatpush1.msra.mxu0 0.0
    %303 = vmatprep.subr.mxu0 0.0
    %304 = vmatpush1.msra.mxu0 %v207
    %305 = vmatprep.subr.mxu0 0.0
    %306 = vmatpush1.msra.mxu0 %v206
    %307 = vmatprep.subr.mxu0 0.0
    %308 = vmatpush1.msra.mxu0 %v205
    %309 = vmatprep.subr.mxu0 0.0
    %310 = vmatpush1.msra.mxu0 %v204
    %311 = vmatprep.subr.mxu0 0.0
    %312 = vmatpush2.msra.mxu0 0.0
    %313 = vmatprep.subr.mxu0 0.0
    %314 = vmatpush2.msra.mxu0 0.0
    %315 = vmatprep.subr.mxu0 0.0
    %316 = vmatpush2.msra.mxu0 0.0
    %317 = vmatprep.subr.mxu0 0.0
    %318 = vmatpush2.msra.mxu0 0.0
    %319 = vmatprep.subr.mxu0 0.0
    %320 = vmatpush2.msra.mxu0 0.0
    %321 = vmatprep.subr.mxu0 0.0
    %322 = vmatpush2.msra.mxu0 0.0
    %323 = vmatprep.subr.mxu0 0.0
    %324 = vmatpush2.msra.mxu0 0.0
    %325 = vmatprep.subr.mxu0 0.0
    %326 = vmatpush2.msra.mxu0 0.0
    %327 = vmatprep.subr.mxu0 0.0
    %328 = vmatpush2.msra.mxu0 0.0
    %329 = vmatprep.subr.mxu0 0.0
    %330 = vmatpush2.msra.mxu0 0.0
    %331 = vmatprep.subr.mxu0 0.0
    %332 = vmatpush2.msra.mxu0 0.0
    %333 = vmatprep.subr.mxu0 0.0
    %334 = vmatpush2.msra.mxu0 0.0
    %335 = vmatprep.subr.mxu0 0.0
    %336 = vmatpush2.msra.mxu0 0.0
    %337 = vmatprep.subr.mxu0 0.0
    %338 = vmatpush2.msra.mxu0 0.0
    %339 = vmatprep.subr.mxu0 0.0
    %340 = vmatpush2.msra.mxu0 0.0
    %341 = vmatprep.subr.mxu0 0.0
    %342 = vmatpush2.msra.mxu0 0.0
    %343 = vmatprep.mubr.f32.mxu0 0.0
    %344 = vmatmul.mubr.f32.gmra.mxu0 %v274
    %v345 = vpop.f32.mrf.mxu0
    %v346 = vadd.f32 %v270, %v345
    %v347 = vpop.f32.mrf.mxu0
    %348 = vmatprep.mubr.f32.mxu0 0.0
    %349 = vmatmul.mubr.f32.gmra.mxu0 %v277
    %v350 = vpop.f32.mrf.mxu0
    %v351 = vadd.f32 %v270, %v350
    %v352 = vpop.f32.mrf.mxu0
    %353 = vdwg.mxu0
    %v354 = vmax.f32 %v346, 0.0
    %v355 = vmax.f32 %v351, 0.0
    %v357 = vlaneseq
    %v358 = vshrl.u32 %v357, 7
    %v359 = vsub.s32 0, %v358
    %v360 = vrot.slane %v213, %v359
    %362 = vmatprep.subr.mxu0 0.0
    %363 = vmatpush1.msra.mxu0 0.0
    %364 = vmatprep.subr.mxu0 0.0
    %365 = vmatpush1.msra.mxu0 0.0
    %366 = vmatprep.subr.mxu0 0.0
    %367 = vmatpush1.msra.mxu0 0.0
    %368 = vmatprep.subr.mxu0 0.0
    %369 = vmatpush1.msra.mxu0 0.0
    %370 = vmatprep.subr.mxu0 0.0
    %371 = vmatpush1.msra.mxu0 0.0
    %372 = vmatprep.subr.mxu0 0.0
    %373 = vmatpush1.msra.mxu0 0.0
    %374 = vmatprep.subr.mxu0 0.0
    %375 = vmatpush1.msra.mxu0 0.0
    %376 = vmatprep.subr.mxu0 0.0
    %377 = vmatpush1.msra.mxu0 0.0
    %378 = vmatprep.subr.mxu0 0.0
    %379 = vmatpush1.msra.mxu0 0.0
    %380 = vmatprep.subr.mxu0 0.0
    %381 = vmatpush1.msra.mxu0 0.0
    %382 = vmatprep.subr.mxu0 0.0
    %383 = vmatpush1.msra.mxu0 0.0
    %384 = vmatprep.subr.mxu0 0.0
    %385 = vmatpush1.msra.mxu0 0.0
    %386 = vmatprep.subr.mxu0 0.0
    %387 = vmatpush1.msra.mxu0 %v212
    %388 = vmatprep.subr.mxu0 0.0
    %389 = vmatpush1.msra.mxu0 %v211
    %390 = vmatprep.subr.mxu0 0.0
    %391 = vmatpush1.msra.mxu0 %v210
    %392 = vmatprep.subr.mxu0 0.0
    %393 = vmatpush1.msra.mxu0 %v209
    %394 = vmatprep.subr.mxu0 0.0
    %395 = vmatpush2.msra.mxu0 0.0
    %396 = vmatprep.subr.mxu0 0.0
    %397 = vmatpush2.msra.mxu0 0.0
    %398 = vmatprep.subr.mxu0 0.0
    %399 = vmatpush2.msra.mxu0 0.0
    %400 = vmatprep.subr.mxu0 0.0
    %401 = vmatpush2.msra.mxu0 0.0
    %402 = vmatprep.subr.mxu0 0.0
    %403 = vmatpush2.msra.mxu0 0.0
    %404 = vmatprep.subr.mxu0 0.0
    %405 = vmatpush2.msra.mxu0 0.0
    %406 = vmatprep.subr.mxu0 0.0
    %407 = vmatpush2.msra.mxu0 0.0
    %408 = vmatprep.subr.mxu0 0.0
    %409 = vmatpush2.msra.mxu0 0.0
    %410 = vmatprep.subr.mxu0 0.0
    %411 = vmatpush2.msra.mxu0 0.0
    %412 = vmatprep.subr.mxu0 0.0
    %413 = vmatpush2.msra.mxu0 0.0
    %414 = vmatprep.subr.mxu0 0.0
    %415 = vmatpush2.msra.mxu0 0.0
    %416 = vmatprep.subr.mxu0 0.0
    %417 = vmatpush2.msra.mxu0 0.0
    %418 = vmatprep.subr.mxu0 0.0
    %419 = vmatpush2.msra.mxu0 0.0
    %420 = vmatprep.subr.mxu0 0.0
    %421 = vmatpush2.msra.mxu0 0.0
    %422 = vmatprep.subr.mxu0 0.0
    %423 = vmatpush2.msra.mxu0 0.0
    %424 = vmatprep.subr.mxu0 0.0
    %425 = vmatpush2.msra.mxu0 0.0
    %426 = vmatprep.mubr.f32.mxu0 0.0
    %427 = vmatmul.mubr.f32.gmra.mxu0 %v274
    %v428 = vpop.f32.mrf.mxu0
    %v429 = vadd.f32 %v360, %v428
    %v430 = vpop.f32.mrf.mxu0
    %431 = vmatprep.mubr.f32.mxu0 0.0
    %432 = vmatmul.mubr.f32.gmra.mxu0 %v277
    %v433 = vpop.f32.mrf.mxu0
    %v434 = vadd.f32 %v360, %v433
    %v435 = vpop.f32.mrf.mxu0
    %436 = vdwg.mxu0
    %v437 = vmax.f32 %v429, 0.0
    %v438 = vmax.f32 %v434, 0.0
    %v440 = vlaneseq
    %v441 = vshrl.u32 %v440, 7
    %v442 = vsub.s32 0, %v441
    %v443 = vrot.slane %v218, %v442
    %445 = vmatprep.subr.mxu0 0.0
    %446 = vmatpush1.msra.mxu0 0.0
    %447 = vmatprep.subr.mxu0 0.0
    %448 = vmatpush1.msra.mxu0 0.0
    %449 = vmatprep.subr.mxu0 0.0
    %450 = vmatpush1.msra.mxu0 0.0
    %451 = vmatprep.subr.mxu0 0.0
    %452 = vmatpush1.msra.mxu0 0.0
    %453 = vmatprep.subr.mxu0 0.0
    %454 = vmatpush1.msra.mxu0 0.0
    %455 = vmatprep.subr.mxu0 0.0
    %456 = vmatpush1.msra.mxu0 0.0
    %457 = vmatprep.subr.mxu0 0.0
    %458 = vmatpush1.msra.mxu0 0.0
    %459 = vmatprep.subr.mxu0 0.0
    %460 = vmatpush1.msra.mxu0 0.0
    %461 = vmatprep.subr.mxu0 0.0
    %462 = vmatpush1.msra.mxu0 0.0
    %463 = vmatprep.subr.mxu0 0.0
    %464 = vmatpush1.msra.mxu0 0.0
    %465 = vmatprep.subr.mxu0 0.0
    %466 = vmatpush1.msra.mxu0 0.0
    %467 = vmatprep.subr.mxu0 0.0
    %468 = vmatpush1.msra.mxu0 0.0
    %469 = vmatprep.subr.mxu0 0.0
    %470 = vmatpush1.msra.mxu0 %v217
    %471 = vmatprep.subr.mxu0 0.0
    %472 = vmatpush1.msra.mxu0 %v216
    %473 = vmatprep.subr.mxu0 0.0
    %474 = vmatpush1.msra.mxu0 %v215
    %475 = vmatprep.subr.mxu0 0.0
    %476 = vmatpush1.msra.mxu0 %v214
    %477 = vmatprep.subr.mxu0 0.0
    %478 = vmatpush2.msra.mxu0 0.0
    %479 = vmatprep.subr.mxu0 0.0
    %480 = vmatpush2.msra.mxu0 0.0
    %481 = vmatprep.subr.mxu0 0.0
    %482 = vmatpush2.msra.mxu0 0.0
    %483 = vmatprep.subr.mxu0 0.0
    %484 = vmatpush2.msra.mxu0 0.0
    %485 = vmatprep.subr.mxu0 0.0
    %486 = vmatpush2.msra.mxu0 0.0
    %487 = vmatprep.subr.mxu0 0.0
    %488 = vmatpush2.msra.mxu0 0.0
    %489 = vmatprep.subr.mxu0 0.0
    %490 = vmatpush2.msra.mxu0 0.0
    %491 = vmatprep.subr.mxu0 0.0
    %492 = vmatpush2.msra.mxu0 0.0
    %493 = vmatprep.subr.mxu0 0.0
    %494 = vmatpush2.msra.mxu0 0.0
    %495 = vmatprep.subr.mxu0 0.0
    %496 = vmatpush2.msra.mxu0 0.0
    %497 = vmatprep.subr.mxu0 0.0
    %498 = vmatpush2.msra.mxu0 0.0
    %499 = vmatprep.subr.mxu0 0.0
    %500 = vmatpush2.msra.mxu0 0.0
    %501 = vmatprep.subr.mxu0 0.0
    %502 = vmatpush2.msra.mxu0 0.0
    %503 = vmatprep.subr.mxu0 0.0
    %504 = vmatpush2.msra.mxu0 0.0
    %505 = vmatprep.subr.mxu0 0.0
    %506 = vmatpush2.msra.mxu0 0.0
    %507 = vmatprep.subr.mxu0 0.0
    %508 = vmatpush2.msra.mxu0 0.0
    %509 = vmatprep.mubr.f32.mxu0 0.0
    %510 = vmatmul.mubr.f32.gmra.mxu0 %v274
    %v511 = vpop.f32.mrf.mxu0
    %v512 = vadd.f32 %v443, %v511
    %v513 = vpop.f32.mrf.mxu0
    %514 = vmatprep.mubr.f32.mxu0 0.0
    %515 = vmatmul.mubr.f32.gmra.mxu0 %v277
    %v516 = vpop.f32.mrf.mxu0
    %v517 = vadd.f32 %v443, %v516
    %v518 = vpop.f32.mrf.mxu0
    %519 = vdwg.mxu0
    %v520 = vmax.f32 %v512, 0.0
    %v521 = vmax.f32 %v517, 0.0
    %v522 = vmul.f32 %v354, %v226
    %v523 = vmul.f32 %v355, %v227
    %v524 = vmul.f32 %v354, %v228
    %v525 = vmul.f32 %v355, %v229
    %v526 = vmul.f32 %v354, %v230
    %v527 = vmul.f32 %v355, %v231
    %v528 = vmul.f32 %v354, %v232
    %v529 = vmul.f32 %v355, %v233
    %v531 = vsel %vm272, %v522, 0
    %v534 = vsel %vm272, %v523, 0
    %v537 = vsel %vm272, %v524, 0
    %v540 = vsel %vm272, %v525, 0
    %v543 = vsel %vm272, %v526, 0
    %v546 = vsel %vm272, %v527, 0
    %v549 = vsel %vm272, %v528, 0
    %v552 = vsel %vm272, %v529, 0
    %v555 = vsel %vm272, %v437, 0
    %v558 = vsel %vm272, %v438, 0
    %560 = vmatprep.subr.mxu0 0.0
    %561 = vmatpush1.xpose.msra.mxu0 0.0
    %562 = vmatprep.subr.mxu0 0.0
    %563 = vmatpush1.xpose.msra.mxu0 0.0
    %564 = vmatprep.subr.mxu0 0.0
    %565 = vmatpush1.xpose.msra.mxu0 0.0
    %566 = vmatprep.subr.mxu0 0.0
    %567 = vmatpush1.xpose.msra.mxu0 0.0
    %568 = vmatprep.subr.mxu0 0.0
    %569 = vmatpush1.xpose.msra.mxu0 0.0
    %570 = vmatprep.subr.mxu0 0.0
    %571 = vmatpush1.xpose.msra.mxu0 0.0
    %572 = vmatprep.subr.mxu0 0.0
    %573 = vmatpush1.xpose.msra.mxu0 0.0
    %574 = vmatprep.subr.mxu0 0.0
    %575 = vmatpush1.xpose.msra.mxu0 0.0
    %576 = vmatprep.subr.mxu0 0.0
    %577 = vmatpush1.xpose.msra.mxu0 0.0
    %578 = vmatprep.subr.mxu0 0.0
    %579 = vmatpush1.xpose.msra.mxu0 0.0
    %580 = vmatprep.subr.mxu0 0.0
    %581 = vmatpush1.xpose.msra.mxu0 0.0
    %582 = vmatprep.subr.mxu0 0.0
    %583 = vmatpush1.xpose.msra.mxu0 0.0
    %584 = vmatprep.subr.mxu0 0.0
    %585 = vmatpush1.xpose.msra.mxu0 0.0
    %586 = vmatprep.subr.mxu0 0.0
    %587 = vmatpush1.xpose.msra.mxu0 0.0
    %588 = vmatprep.subr.mxu0 0.0
    %589 = vmatpush1.xpose.msra.mxu0 %v558
    %590 = vmatprep.subr.mxu0 0.0
    %591 = vmatpush1.xpose.msra.mxu0 %v555
    %592 = vmatprep.subr.mxu0 0.0
    %593 = vmatpush2.xpose.msra.mxu0 0.0
    %594 = vmatprep.subr.mxu0 0.0
    %595 = vmatpush2.xpose.msra.mxu0 0.0
    %596 = vmatprep.subr.mxu0 0.0
    %597 = vmatpush2.xpose.msra.mxu0 0.0
    %598 = vmatprep.subr.mxu0 0.0
    %599 = vmatpush2.xpose.msra.mxu0 0.0
    %600 = vmatprep.subr.mxu0 0.0
    %601 = vmatpush2.xpose.msra.mxu0 0.0
    %602 = vmatprep.subr.mxu0 0.0
    %603 = vmatpush2.xpose.msra.mxu0 0.0
    %604 = vmatprep.subr.mxu0 0.0
    %605 = vmatpush2.xpose.msra.mxu0 0.0
    %606 = vmatprep.subr.mxu0 0.0
    %607 = vmatpush2.xpose.msra.mxu0 0.0
    %608 = vmatprep.subr.mxu0 0.0
    %609 = vmatpush2.xpose.msra.mxu0 0.0
    %610 = vmatprep.subr.mxu0 0.0
    %611 = vmatpush2.xpose.msra.mxu0 0.0
    %612 = vmatprep.subr.mxu0 0.0
    %613 = vmatpush2.xpose.msra.mxu0 0.0
    %614 = vmatprep.subr.mxu0 0.0
    %615 = vmatpush2.xpose.msra.mxu0 0.0
    %616 = vmatprep.subr.mxu0 0.0
    %617 = vmatpush2.xpose.msra.mxu0 0.0
    %618 = vmatprep.subr.mxu0 0.0
    %619 = vmatpush2.xpose.msra.mxu0 0.0
    %620 = vmatprep.subr.mxu0 0.0
    %621 = vmatpush2.xpose.msra.mxu0 0.0
    %622 = vmatprep.subr.mxu0 0.0
    %623 = vmatpush2.xpose.msra.mxu0 0.0
    %624 = vmatprep.mubr.f32.mxu0 0.0
    %625 = vmatmul.mubr.f32.gmra.mxu0 %v531
    %v626 = vpop.f32.mrf.mxu0
    %v627 = vadd.f32 0.0, %v626
    %v628 = vpop.f32.mrf.mxu0
    %629 = vmatprep.mubr.f32.mxu0 0.0
    %630 = vmatmul.mubr.f32.gmra.mxu0 %v534
    %v631 = vpop.f32.mrf.mxu0
    %v632 = vadd.f32 0.0, %v631
    %v633 = vpop.f32.mrf.mxu0
    %634 = vmatprep.mubr.f32.mxu0 0.0
    %635 = vmatmul.mubr.f32.gmra.mxu0 %v537
    %v636 = vpop.f32.mrf.mxu0
    %v637 = vadd.f32 0.0, %v636
    %v638 = vpop.f32.mrf.mxu0
    %639 = vmatprep.mubr.f32.mxu0 0.0
    %640 = vmatmul.mubr.f32.gmra.mxu0 %v540
    %v641 = vpop.f32.mrf.mxu0
    %v642 = vadd.f32 0.0, %v641
    %v643 = vpop.f32.mrf.mxu0
    %644 = vmatprep.mubr.f32.mxu0 0.0
    %645 = vmatmul.mubr.f32.gmra.mxu0 %v543
    %v646 = vpop.f32.mrf.mxu0
    %v647 = vadd.f32 0.0, %v646
    %v648 = vpop.f32.mrf.mxu0
    %649 = vmatprep.mubr.f32.mxu0 0.0
    %650 = vmatmul.mubr.f32.gmra.mxu0 %v546
    %v651 = vpop.f32.mrf.mxu0
    %v652 = vadd.f32 0.0, %v651
    %v653 = vpop.f32.mrf.mxu0
    %654 = vmatprep.mubr.f32.mxu0 0.0
    %655 = vmatmul.mubr.f32.gmra.mxu0 %v549
    %v656 = vpop.f32.mrf.mxu0
    %v657 = vadd.f32 0.0, %v656
    %v658 = vpop.f32.mrf.mxu0
    %659 = vmatprep.mubr.f32.mxu0 0.0
    %660 = vmatmul.mubr.f32.gmra.mxu0 %v552
    %v661 = vpop.f32.mrf.mxu0
    %v662 = vadd.f32 0.0, %v661
    %v663 = vpop.f32.mrf.mxu0
    %664 = vdwg.mxu0
    %v665 = vmul.f32 %v627, 0.35355338
    %v666 = vmul.f32 %v632, 0.35355338
    %v667 = vmul.f32 %v637, 0.35355338
    %v668 = vmul.f32 %v642, 0.35355338
    %v669 = vmul.f32 %v647, 0.35355338
    %v670 = vmul.f32 %v652, 0.35355338
    %v671 = vmul.f32 %v657, 0.35355338
    %v672 = vmul.f32 %v662, 0.35355338
    %v673 = vadd.f32 %v665, %v234
    %v674 = vadd.f32 %v666, %v235
    %v675 = vadd.f32 %v667, %v236
    %v676 = vadd.f32 %v668, %v237
    %v677 = vadd.f32 %v669, %v238
    %v678 = vadd.f32 %v670, %v239
    %v679 = vadd.f32 %v671, %v240
    %v680 = vadd.f32 %v672, %v241
    %vm681 = vcmask 130048
    %v682 = vsel %vm681, %v673, -inf
    %683 = vmax.xlane.f32.xlu0 %v682
    %v684 = vpop.xlane.xlu0 %683
    %v685 = vsel %vm681, %v674, -inf
    %686 = vmax.xlane.f32.xlu0 %v685
    %v687 = vpop.xlane.xlu0 %686
    %v688 = vsel %vm681, %v675, -inf
    %689 = vmax.xlane.f32.xlu0 %v688
    %v690 = vpop.xlane.xlu0 %689
    %v691 = vsel %vm681, %v676, -inf
    %692 = vmax.xlane.f32.xlu0 %v691
    %v693 = vpop.xlane.xlu0 %692
    %v694 = vsel %vm681, %v677, -inf
    %695 = vmax.xlane.f32.xlu0 %v694
    %v696 = vpop.xlane.xlu0 %695
    %v697 = vsel %vm681, %v678, -inf
    %698 = vmax.xlane.f32.xlu0 %v697
    %v699 = vpop.xlane.xlu0 %698
    %v700 = vsel %vm681, %v679, -inf
    %701 = vmax.xlane.f32.xlu0 %v700
    %v702 = vpop.xlane.xlu0 %701
    %v703 = vsel %vm681, %v680, -inf
    %704 = vmax.xlane.f32.xlu0 %v703
    %v705 = vpop.xlane.xlu0 %704
    %v706 = vsub.f32 %v673, %v684
    %v707 = vsub.f32 %v674, %v687
    %v708 = vsub.f32 %v675, %v690
    %v709 = vsub.f32 %v676, %v693
    %v710 = vsub.f32 %v677, %v696
    %v711 = vsub.f32 %v678, %v699
    %v712 = vsub.f32 %v679, %v702
    %v713 = vsub.f32 %v680, %v705
    %v714 = vmul.f32 %v706, 1.442695
    %v715 = vpow.pop %v714
    %v716 = vmul.f32 %v707, 1.442695
    %v717 = vpow.pop %v716
    %v718 = vmul.f32 %v708, 1.442695
    %v719 = vpow.pop %v718
    %v720 = vmul.f32 %v709, 1.442695
    %v721 = vpow.pop %v720
    %v722 = vmul.f32 %v710, 1.442695
    %v723 = vpow.pop %v722
    %v724 = vmul.f32 %v711, 1.442695
    %v725 = vpow.pop %v724
    %v726 = vmul.f32 %v712, 1.442695
    %v727 = vpow.pop %v726
    %v728 = vmul.f32 %v713, 1.442695
    %v729 = vpow.pop %v728
    %v730 = vsel %vm681, %v715, 0.0
    %731 = vadd.xlane.f32.xlu0 %v730
    %v732 = vpop.xlane.xlu0 %731
    %v733 = vsel %vm681, %v717, 0.0
    %734 = vadd.xlane.f32.xlu0 %v733
    %v735 = vpop.xlane.xlu0 %734
    %v736 = vsel %vm681, %v719, 0.0
    %737 = vadd.xlane.f32.xlu0 %v736
    %v738 = vpop.xlane.xlu0 %737
    %v739 = vsel %vm681, %v721, 0.0
    %740 = vadd.xlane.f32.xlu0 %v739
    %v741 = vpop.xlane.xlu0 %740
    %v742 = vsel %vm681, %v723, 0.0
    %743 = vadd.xlane.f32.xlu0 %v742
    %v744 = vpop.xlane.xlu0 %743
    %v745 = vsel %vm681, %v725, 0.0
    %746 = vadd.xlane.f32.xlu0 %v745
    %v747 = vpop.xlane.xlu0 %746
    %v748 = vsel %vm681, %v727, 0.0
    %749 = vadd.xlane.f32.xlu0 %v748
    %v750 = vpop.xlane.xlu0 %749
    %v751 = vsel %vm681, %v729, 0.0
    %752 = vadd.xlane.f32.xlu0 %v751
    %v753 = vpop.xlane.xlu0 %752
    %v754 = vrcp.pop %v732
    %v755 = vrcp.pop %v735
    %v756 = vrcp.pop %v738
    %v757 = vrcp.pop %v741
    %v758 = vrcp.pop %v744
    %v759 = vrcp.pop %v747
    %v760 = vrcp.pop %v750
    %v761 = vrcp.pop %v753
    %v762 = vmul.f32 %v715, %v754
    %v763 = vmul.f32 %v717, %v755
    %v764 = vmul.f32 %v719, %v756
    %v765 = vmul.f32 %v721, %v757
    %v766 = vmul.f32 %v723, %v758
    %v767 = vmul.f32 %v725, %v759
    %v768 = vmul.f32 %v727, %v760
    %v769 = vmul.f32 %v729, %v761
    %v771 = vsel %vm681, %v762, 0
    %v774 = vsel %vm681, %v763, 0
    %v777 = vsel %vm681, %v764, 0
    %v780 = vsel %vm681, %v765, 0
    %v783 = vsel %vm681, %v766, 0
    %v786 = vsel %vm681, %v767, 0
    %v789 = vsel %vm681, %v768, 0
    %v792 = vsel %vm681, %v769, 0
    %794 = vmatprep.subr.mxu0 0.0
    %795 = vmatpush1.msra.mxu0 0.0
    %796 = vmatprep.subr.mxu0 0.0
    %797 = vmatpush1.msra.mxu0 0.0
    %798 = vmatprep.subr.mxu0 0.0
    %799 = vmatpush1.msra.mxu0 0.0
    %800 = vmatprep.subr.mxu0 0.0
    %801 = vmatpush1.msra.mxu0 0.0
    %802 = vmatprep.subr.mxu0 0.0
    %803 = vmatpush1.msra.mxu0 0.0
    %804 = vmatprep.subr.mxu0 0.0
    %805 = vmatpush1.msra.mxu0 0.0
    %806 = vmatprep.subr.mxu0 0.0
    %807 = vmatpush1.msra.mxu0 0.0
    %808 = vmatprep.subr.mxu0 0.0
    %809 = vmatpush1.msra.mxu0 0.0
    %810 = vmatprep.subr.mxu0 0.0
    %811 = vmatpush1.msra.mxu0 0.0
    %812 = vmatprep.subr.mxu0 0.0
    %813 = vmatpush1.msra.mxu0 0.0
    %814 = vmatprep.subr.mxu0 0.0
    %815 = vmatpush1.msra.mxu0 0.0
    %816 = vmatprep.subr.mxu0 0.0
    %817 = vmatpush1.msra.mxu0 0.0
    %818 = vmatprep.subr.mxu0 0.0
    %819 = vmatpush1.msra.mxu0 0.0
    %820 = vmatprep.subr.mxu0 0.0
    %821 = vmatpush1.msra.mxu0 0.0
    %822 = vmatprep.subr.mxu0 0.0
    %823 = vmatpush1.msra.mxu0 %v521
    %824 = vmatprep.subr.mxu0 0.0
    %825 = vmatpush1.msra.mxu0 %v520
    %826 = vmatprep.subr.mxu0 0.0
    %827 = vmatpush2.msra.mxu0 0.0
    %828 = vmatprep.subr.mxu0 0.0
    %829 = vmatpush2.msra.mxu0 0.0
    %830 = vmatprep.subr.mxu0 0.0
    %831 = vmatpush2.msra.mxu0 0.0
    %832 = vmatprep.subr.mxu0 0.0
    %833 = vmatpush2.msra.mxu0 0.0
    %834 = vmatprep.subr.mxu0 0.0
    %835 = vmatpush2.msra.mxu0 0.0
    %836 = vmatprep.subr.mxu0 0.0
    %837 = vmatpush2.msra.mxu0 0.0
    %838 = vmatprep.subr.mxu0 0.0
    %839 = vmatpush2.msra.mxu0 0.0
    %840 = vmatprep.subr.mxu0 0.0
    %841 = vmatpush2.msra.mxu0 0.0
    %842 = vmatprep.subr.mxu0 0.0
    %843 = vmatpush2.msra.mxu0 0.0
    %844 = vmatprep.subr.mxu0 0.0
    %845 = vmatpush2.msra.mxu0 0.0
    %846 = vmatprep.subr.mxu0 0.0
    %847 = vmatpush2.msra.mxu0 0.0
    %848 = vmatprep.subr.mxu0 0.0
    %849 = vmatpush2.msra.mxu0 0.0
    %850 = vmatprep.subr.mxu0 0.0
    %851 = vmatpush2.msra.mxu0 0.0
    %852 = vmatprep.subr.mxu0 0.0
    %853 = vmatpush2.msra.mxu0 0.0
    %854 = vmatprep.subr.mxu0 0.0
    %855 = vmatpush2.msra.mxu0 0.0
    %856 = vmatprep.subr.mxu0 0.0
    %857 = vmatpush2.msra.mxu0 0.0
    %858 = vmatprep.mubr.f32.mxu0 0.0
    %859 = vmatmul.mubr.f32.gmra.mxu0 %v771
    %v860 = vpop.f32.mrf.mxu0
    %v861 = vadd.f32 0.0, %v860
    %v862 = vpop.f32.mrf.mxu0
    %863 = vmatprep.mubr.f32.mxu0 0.0
    %864 = vmatmul.mubr.f32.gmra.mxu0 %v774
    %v865 = vpop.f32.mrf.mxu0
    %v866 = vadd.f32 0.0, %v865
    %v867 = vpop.f32.mrf.mxu0
    %868 = vmatprep.mubr.f32.mxu0 0.0
    %869 = vmatmul.mubr.f32.gmra.mxu0 %v777
    %v870 = vpop.f32.mrf.mxu0
    %v871 = vadd.f32 0.0, %v870
    %v872 = vpop.f32.mrf.mxu0
    %873 = vmatprep.mubr.f32.mxu0 0.0
    %874 = vmatmul.mubr.f32.gmra.mxu0 %v780
    %v875 = vpop.f32.mrf.mxu0
    %v876 = vadd.f32 0.0, %v875
    %v877 = vpop.f32.mrf.mxu0
    %878 = vmatprep.mubr.f32.mxu0 0.0
    %879 = vmatmul.mubr.f32.gmra.mxu0 %v783
    %v880 = vpop.f32.mrf.mxu0
    %v881 = vadd.f32 0.0, %v880
    %v882 = vpop.f32.mrf.mxu0
    %883 = vmatprep.mubr.f32.mxu0 0.0
    %884 = vmatmul.mubr.f32.gmra.mxu0 %v786
    %v885 = vpop.f32.mrf.mxu0
    %v886 = vadd.f32 0.0, %v885
    %v887 = vpop.f32.mrf.mxu0
    %888 = vmatprep.mubr.f32.mxu0 0.0
    %889 = vmatmul.mubr.f32.gmra.mxu0 %v789
    %v890 = vpop.f32.mrf.mxu0
    %v891 = vadd.f32 0.0, %v890
    %v892 = vpop.f32.mrf.mxu0
    %893 = vmatprep.mubr.f32.mxu0 0.0
    %894 = vmatmul.mubr.f32.gmra.mxu0 %v792
    %v895 = vpop.f32.mrf.mxu0
    %v896 = vadd.f32 0.0, %v895
    %v897 = vpop.f32.mrf.mxu0
    %898 = vdwg.mxu0
    %v899 = vmul.f32 %v861, %v242
    %v900 = vmul.f32 %v866, %v243
    %v901 = vmul.f32 %v871, %v244
    %v902 = vmul.f32 %v876, %v245
    %v903 = vmul.f32 %v881, %v246
    %v904 = vmul.f32 %v886, %v247
    %v905 = vmul.f32 %v891, %v248
    %v906 = vmul.f32 %v896, %v249
    %v908 = vsel %vm272, %v899, 0
    %v911 = vsel %vm272, %v900, 0
    %v914 = vsel %vm272, %v901, 0
    %v917 = vsel %vm272, %v902, 0
    %v920 = vsel %vm272, %v903, 0
    %v923 = vsel %vm272, %v904, 0
    %v926 = vsel %vm272, %v905, 0
    %v929 = vsel %vm272, %v906, 0
    %931 = vmatprep.subr.mxu0 0.0
    %932 = vmatpush1.msra.mxu0 0.0
    %933 = vmatprep.subr.mxu0 0.0
    %934 = vmatpush1.msra.mxu0 0.0
    %935 = vmatprep.subr.mxu0 0.0
    %936 = vmatpush1.msra.mxu0 0.0
    %937 = vmatprep.subr.mxu0 0.0
    %938 = vmatpush1.msra.mxu0 0.0
    %939 = vmatprep.subr.mxu0 0.0
    %940 = vmatpush1.msra.mxu0 0.0
    %941 = vmatprep.subr.mxu0 0.0
    %942 = vmatpush1.msra.mxu0 0.0
    %943 = vmatprep.subr.mxu0 0.0
    %944 = vmatpush1.msra.mxu0 0.0
    %945 = vmatprep.subr.mxu0 0.0
    %946 = vmatpush1.msra.mxu0 0.0
    %947 = vmatprep.subr.mxu0 0.0
    %948 = vmatpush1.msra.mxu0 0.0
    %949 = vmatprep.subr.mxu0 0.0
    %950 = vmatpush1.msra.mxu0 0.0
    %951 = vmatprep.subr.mxu0 0.0
    %952 = vmatpush1.msra.mxu0 0.0
    %953 = vmatprep.subr.mxu0 0.0
    %954 = vmatpush1.msra.mxu0 0.0
    %955 = vmatprep.subr.mxu0 0.0
    %956 = vmatpush1.msra.mxu0 %v261
    %957 = vmatprep.subr.mxu0 0.0
    %958 = vmatpush1.msra.mxu0 %v260
    %959 = vmatprep.subr.mxu0 0.0
    %960 = vmatpush1.msra.mxu0 %v259
    %961 = vmatprep.subr.mxu0 0.0
    %962 = vmatpush1.msra.mxu0 %v258
    %963 = vmatprep.subr.mxu0 0.0
    %964 = vmatpush2.msra.mxu0 0.0
    %965 = vmatprep.subr.mxu0 0.0
    %966 = vmatpush2.msra.mxu0 0.0
    %967 = vmatprep.subr.mxu0 0.0
    %968 = vmatpush2.msra.mxu0 0.0
    %969 = vmatprep.subr.mxu0 0.0
    %970 = vmatpush2.msra.mxu0 0.0
    %971 = vmatprep.subr.mxu0 0.0
    %972 = vmatpush2.msra.mxu0 0.0
    %973 = vmatprep.subr.mxu0 0.0
    %974 = vmatpush2.msra.mxu0 0.0
    %975 = vmatprep.subr.mxu0 0.0
    %976 = vmatpush2.msra.mxu0 0.0
    %977 = vmatprep.subr.mxu0 0.0
    %978 = vmatpush2.msra.mxu0 0.0
    %979 = vmatprep.subr.mxu0 0.0
    %980 = vmatpush2.msra.mxu0 0.0
    %981 = vmatprep.subr.mxu0 0.0
    %982 = vmatpush2.msra.mxu0 0.0
    %983 = vmatprep.subr.mxu0 0.0
    %984 = vmatpush2.msra.mxu0 0.0
    %985 = vmatprep.subr.mxu0 0.0
    %986 = vmatpush2.msra.mxu0 0.0
    %987 = vmatprep.subr.mxu0 0.0
    %988 = vmatpush2.msra.mxu0 0.0
    %989 = vmatprep.subr.mxu0 0.0
    %990 = vmatpush2.msra.mxu0 0.0
    %991 = vmatprep.subr.mxu0 0.0
    %992 = vmatpush2.msra.mxu0 0.0
    %993 = vmatprep.subr.mxu0 0.0
    %994 = vmatpush2.msra.mxu0 0.0
    %995 = vmatprep.mubr.f32.mxu0 0.0
    %996 = vmatmul.mubr.f32.gmra.mxu0 %v908
    %v997 = vpop.f32.mrf.mxu0
    %v998 = vadd.f32 0.0, %v997
    %v999 = vpop.f32.mrf.mxu0
    %1000 = vmatprep.mubr.f32.mxu0 0.0
    %1001 = vmatmul.mubr.f32.gmra.mxu0 %v911
    %v1002 = vpop.f32.mrf.mxu0
    %v1003 = vadd.f32 0.0, %v1002
    %v1004 = vpop.f32.mrf.mxu0
    %1005 = vmatprep.mubr.f32.mxu0 0.0
    %1006 = vmatmul.mubr.f32.gmra.mxu0 %v914
    %v1007 = vpop.f32.mrf.mxu0
    %v1008 = vadd.f32 0.0, %v1007
    %v1009 = vpop.f32.mrf.mxu0
    %1010 = vmatprep.mubr.f32.mxu0 0.0
    %1011 = vmatmul.mubr.f32.gmra.mxu0 %v917
    %v1012 = vpop.f32.mrf.mxu0
    %v1013 = vadd.f32 0.0, %v1012
    %v1014 = vpop.f32.mrf.mxu0
    %1015 = vmatprep.mubr.f32.mxu0 0.0
    %1016 = vmatmul.mubr.f32.gmra.mxu0 %v920
    %v1017 = vpop.f32.mrf.mxu0
    %v1018 = vadd.f32 0.0, %v1017
    %v1019 = vpop.f32.mrf.mxu0
    %1020 = vmatprep.mubr.f32.mxu0 0.0
    %1021 = vmatmul.mubr.f32.gmra.mxu0 %v923
    %v1022 = vpop.f32.mrf.mxu0
    %v1023 = vadd.f32 0.0, %v1022
    %v1024 = vpop.f32.mrf.mxu0
    %1025 = vmatprep.mubr.f32.mxu0 0.0
    %1026 = vmatmul.mubr.f32.gmra.mxu0 %v926
    %v1027 = vpop.f32.mrf.mxu0
    %v1028 = vadd.f32 0.0, %v1027
    %v1029 = vpop.f32.mrf.mxu0
    %1030 = vmatprep.mubr.f32.mxu0 0.0
    %1031 = vmatmul.mubr.f32.gmra.mxu0 %v929
    %v1032 = vpop.f32.mrf.mxu0
    %v1033 = vadd.f32 0.0, %v1032
    %v1034 = vpop.f32.mrf.mxu0
    %1035 = vdwg.mxu0
    %v1036 = vmul.f32 %v998, %v250
    %v1037 = vmul.f32 %v1003, %v251
    %v1038 = vmul.f32 %v1008, %v252
    %v1039 = vmul.f32 %v1013, %v253
    %v1040 = vmul.f32 %v1018, %v254
    %v1041 = vmul.f32 %v1023, %v255
    %v1042 = vmul.f32 %v1028, %v256
    %v1043 = vmul.f32 %v1033, %v257
    %v1045 = vsel %vm272, %v1036, 0
    %v1048 = vsel %vm272, %v1037, 0
    %v1051 = vsel %vm272, %v1038, 0
    %v1054 = vsel %vm272, %v1039, 0
    %v1057 = vsel %vm272, %v1040, 0
    %v1060 = vsel %vm272, %v1041, 0
    %v1063 = vsel %vm272, %v1042, 0
    %v1066 = vsel %vm272, %v1043, 0
    %1068 = vmatprep.subr.mxu0 0.0
    %1069 = vmatpush1.msra.mxu0 0.0
    %1070 = vmatprep.subr.mxu0 0.0
    %1071 = vmatpush1.msra.mxu0 0.0
    %1072 = vmatprep.subr.mxu0 0.0
    %1073 = vmatpush1.msra.mxu0 0.0
    %1074 = vmatprep.subr.mxu0 0.0
    %1075 = vmatpush1.msra.mxu0 0.0
    %1076 = vmatprep.subr.mxu0 0.0
    %1077 = vmatpush1.msra.mxu0 0.0
    %1078 = vmatprep.subr.mxu0 0.0
    %1079 = vmatpush1.msra.mxu0 0.0
    %1080 = vmatprep.subr.mxu0 0.0
    %1081 = vmatpush1.msra.mxu0 0.0
    %1082 = vmatprep.subr.mxu0 0.0
    %1083 = vmatpush1.msra.mxu0 0.0
    %1084 = vmatprep.subr.mxu0 0.0
    %1085 = vmatpush1.msra.mxu0 0.0
    %1086 = vmatprep.subr.mxu0 0.0
    %1087 = vmatpush1.msra.mxu0 0.0
    %1088 = vmatprep.subr.mxu0 0.0
    %1089 = vmatpush1.msra.mxu0 0.0
    %1090 = vmatprep.subr.mxu0 0.0
    %1091 = vmatpush1.msra.mxu0 0.0
    %1092 = vmatprep.subr.mxu0 0.0
    %1093 = vmatpush1.msra.mxu0 %v222
    %1094 = vmatprep.subr.mxu0 0.0
    %1095 = vmatpush1.msra.mxu0 %v221
    %1096 = vmatprep.subr.mxu0 0.0
    %1097 = vmatpush1.msra.mxu0 %v220
    %1098 = vmatprep.subr.mxu0 0.0
    %1099 = vmatpush1.msra.mxu0 %v219
    %1100 = vmatprep.subr.mxu0 0.0
    %1101 = vmatpush2.msra.mxu0 0.0
    %1102 = vmatprep.subr.mxu0 0.0
    %1103 = vmatpush2.msra.mxu0 0.0
    %1104 = vmatprep.subr.mxu0 0.0
    %1105 = vmatpush2.msra.mxu0 0.0
    %1106 = vmatprep.subr.mxu0 0.0
    %1107 = vmatpush2.msra.mxu0 0.0
    %1108 = vmatprep.subr.mxu0 0.0
    %1109 = vmatpush2.msra.mxu0 0.0
    %1110 = vmatprep.subr.mxu0 0.0
    %1111 = vmatpush2.msra.mxu0 0.0
    %1112 = vmatprep.subr.mxu0 0.0
    %1113 = vmatpush2.msra.mxu0 0.0
    %1114 = vmatprep.subr.mxu0 0.0
    %1115 = vmatpush2.msra.mxu0 0.0
    %1116 = vmatprep.subr.mxu0 0.0
    %1117 = vmatpush2.msra.mxu0 0.0
    %1118 = vmatprep.subr.mxu0 0.0
    %1119 = vmatpush2.msra.mxu0 0.0
    %1120 = vmatprep.subr.mxu0 0.0
    %1121 = vmatpush2.msra.mxu0 0.0
    %1122 = vmatprep.subr.mxu0 0.0
    %1123 = vmatpush2.msra.mxu0 0.0
    %1124 = vmatprep.subr.mxu0 0.0
    %1125 = vmatpush2.msra.mxu0 0.0
    %1126 = vmatprep.subr.mxu0 0.0
    %1127 = vmatpush2.msra.mxu0 0.0
    %1128 = vmatprep.subr.mxu0 0.0
    %1129 = vmatpush2.msra.mxu0 0.0
    %1130 = vmatprep.subr.mxu0 0.0
    %1131 = vmatpush2.msra.mxu0 0.0
    %1132 = vmatprep.mubr.f32.mxu0 0.0
    %1133 = vmatmul.mubr.f32.gmra.mxu0 %v1045
    %v1134 = vpop.f32.mrf.mxu0
    %v1135 = vadd.f32 0.0, %v1134
    %v1136 = vpop.f32.mrf.mxu0
    %1137 = vmatprep.mubr.f32.mxu0 0.0
    %1138 = vmatmul.mubr.f32.gmra.mxu0 %v1048
    %v1139 = vpop.f32.mrf.mxu0
    %v1140 = vadd.f32 0.0, %v1139
    %v1141 = vpop.f32.mrf.mxu0
    %1142 = vmatprep.mubr.f32.mxu0 0.0
    %1143 = vmatmul.mubr.f32.gmra.mxu0 %v1051
    %v1144 = vpop.f32.mrf.mxu0
    %v1145 = vadd.f32 0.0, %v1144
    %v1146 = vpop.f32.mrf.mxu0
    %1147 = vmatprep.mubr.f32.mxu0 0.0
    %1148 = vmatmul.mubr.f32.gmra.mxu0 %v1054
    %v1149 = vpop.f32.mrf.mxu0
    %v1150 = vadd.f32 0.0, %v1149
    %v1151 = vpop.f32.mrf.mxu0
    %1152 = vmatprep.mubr.f32.mxu0 0.0
    %1153 = vmatmul.mubr.f32.gmra.mxu0 %v1057
    %v1154 = vpop.f32.mrf.mxu0
    %v1155 = vadd.f32 0.0, %v1154
    %v1156 = vpop.f32.mrf.mxu0
    %1157 = vmatprep.mubr.f32.mxu0 0.0
    %1158 = vmatmul.mubr.f32.gmra.mxu0 %v1060
    %v1159 = vpop.f32.mrf.mxu0
    %v1160 = vadd.f32 0.0, %v1159
    %v1161 = vpop.f32.mrf.mxu0
    %1162 = vmatprep.mubr.f32.mxu0 0.0
    %1163 = vmatmul.mubr.f32.gmra.mxu0 %v1063
    %v1164 = vpop.f32.mrf.mxu0
    %v1165 = vadd.f32 0.0, %v1164
    %v1166 = vpop.f32.mrf.mxu0
    %1167 = vmatprep.mubr.f32.mxu0 0.0
    %1168 = vmatmul.mubr.f32.gmra.mxu0 %v1066
    %v1169 = vpop.f32.mrf.mxu0
    %v1170 = vadd.f32 0.0, %v1169
    %v1171 = vpop.f32.mrf.mxu0
    %1172 = vdwg.mxu0
    %v1174 = vlaneseq
    %v1175 = vshrl.u32 %v1174, 7
    %v1176 = vsub.s32 0, %v1175
    %v1177 = vrot.slane %v223, %v1176
    %vm1179 = vcmask 523264
    %v1181 = vsel %vm1179, %v262, 0
    %v1184 = vsel %vm1179, %v263, 0
    %1186 = vmatprep.subr.mxu0 0.0
    %1187 = vmatpush1.msra.mxu0 0.0
    %1188 = vmatprep.subr.mxu0 0.0
    %1189 = vmatpush1.msra.mxu0 0.0
    %1190 = vmatprep.subr.mxu0 0.0
    %1191 = vmatpush1.msra.mxu0 0.0
    %1192 = vmatprep.subr.mxu0 0.0
    %1193 = vmatpush1.msra.mxu0 0.0
    %1194 = vmatprep.subr.mxu0 0.0
    %1195 = vmatpush1.msra.mxu0 0.0
    %1196 = vmatprep.subr.mxu0 0.0
    %1197 = vmatpush1.msra.mxu0 0.0
    %1198 = vmatprep.subr.mxu0 0.0
    %1199 = vmatpush1.msra.mxu0 0.0
    %1200 = vmatprep.subr.mxu0 0.0
    %1201 = vmatpush1.msra.mxu0 0.0
    %1202 = vmatprep.subr.mxu0 0.0
    %1203 = vmatpush1.msra.mxu0 %v1170
    %1204 = vmatprep.subr.mxu0 0.0
    %1205 = vmatpush1.msra.mxu0 %v1165
    %1206 = vmatprep.subr.mxu0 0.0
    %1207 = vmatpush1.msra.mxu0 %v1160
    %1208 = vmatprep.subr.mxu0 0.0
    %1209 = vmatpush1.msra.mxu0 %v1155
    %1210 = vmatprep.subr.mxu0 0.0
    %1211 = vmatpush1.msra.mxu0 %v1150
    %1212 = vmatprep.subr.mxu0 0.0
    %1213 = vmatpush1.msra.mxu0 %v1145
    %1214 = vmatprep.subr.mxu0 0.0
    %1215 = vmatpush1.msra.mxu0 %v1140
    %1216 = vmatprep.subr.mxu0 0.0
    %1217 = vmatpush1.msra.mxu0 %v1135
    %1218 = vmatprep.subr.mxu0 0.0
    %1219 = vmatpush2.msra.mxu0 0.0
    %1220 = vmatprep.subr.mxu0 0.0
    %1221 = vmatpush2.msra.mxu0 0.0
    %1222 = vmatprep.subr.mxu0 0.0
    %1223 = vmatpush2.msra.mxu0 0.0
    %1224 = vmatprep.subr.mxu0 0.0
    %1225 = vmatpush2.msra.mxu0 0.0
    %1226 = vmatprep.subr.mxu0 0.0
    %1227 = vmatpush2.msra.mxu0 0.0
    %1228 = vmatprep.subr.mxu0 0.0
    %1229 = vmatpush2.msra.mxu0 0.0
    %1230 = vmatprep.subr.mxu0 0.0
    %1231 = vmatpush2.msra.mxu0 0.0
    %1232 = vmatprep.subr.mxu0 0.0
    %1233 = vmatpush2.msra.mxu0 0.0
    %1234 = vmatprep.subr.mxu0 0.0
    %1235 = vmatpush2.msra.mxu0 0.0
    %1236 = vmatprep.subr.mxu0 0.0
    %1237 = vmatpush2.msra.mxu0 0.0
    %1238 = vmatprep.subr.mxu0 0.0
    %1239 = vmatpush2.msra.mxu0 0.0
    %1240 = vmatprep.subr.mxu0 0.0
    %1241 = vmatpush2.msra.mxu0 0.0
    %1242 = vmatprep.subr.mxu0 0.0
    %1243 = vmatpush2.msra.mxu0 0.0
    %1244 = vmatprep.subr.mxu0 0.0
    %1245 = vmatpush2.msra.mxu0 0.0
    %1246 = vmatprep.subr.mxu0 0.0
    %1247 = vmatpush2.msra.mxu0 0.0
    %1248 = vmatprep.subr.mxu0 0.0
    %1249 = vmatpush2.msra.mxu0 0.0
    %1250 = vmatprep.mubr.f32.mxu0 0.0
    %1251 = vmatmul.mubr.f32.gmra.mxu0 %v1181
    %v1252 = vpop.f32.mrf.mxu0
    %v1253 = vadd.f32 %v1177, %v1252
    %v1254 = vpop.f32.mrf.mxu0
    %1255 = vmatprep.mubr.f32.mxu0 0.0
    %1256 = vmatmul.mubr.f32.gmra.mxu0 %v1184
    %v1257 = vpop.f32.mrf.mxu0
    %v1258 = vadd.f32 %v1177, %v1257
    %v1259 = vpop.f32.mrf.mxu0
    %1260 = vdwg.mxu0
    %v1261 = vmax.f32 %v1253, 0.0
    %v1262 = vmax.f32 %v1258, 0.0
    %v1263 = vsel %vm272, %v1261, 0.0
    %1264 = vadd.xlane.f32.xlu0 %v1263
    %v1265 = vpop.xlane.xlu0 %1264
    %v1266 = vsel %vm272, %v1262, 0.0
    %1267 = vadd.xlane.f32.xlu0 %v1266
    %v1268 = vpop.xlane.xlu0 %1267
    %v1269 = vrcp.pop 32.0
    %v1270 = vmul.f32 %v1265, %v1269
    %v1271 = vmul.f32 %v1268, %v1269
    %v1272 = vsub.f32 %v1261, %v1270
    %v1273 = vsub.f32 %v1262, %v1271
    %v1274 = vmul.f32 %v1272, %v1272
    %v1275 = vmul.f32 %v1273, %v1273
    %v1276 = vsel %vm272, %v1274, 0.0
    %1277 = vadd.xlane.f32.xlu0 %v1276
    %v1278 = vpop.xlane.xlu0 %1277
    %v1279 = vsel %vm272, %v1275, 0.0
    %1280 = vadd.xlane.f32.xlu0 %v1279
    %v1281 = vpop.xlane.xlu0 %1280
    %v1282 = vmul.f32 %v1278, %v1269
    %v1283 = vmul.f32 %v1281, %v1269
    %v1284 = vadd.f32 %v1282, 1e-05
    %v1285 = vadd.f32 %v1283, 1e-05
    %v1286 = vrsqrt.pop %v1284
    %v1287 = vrsqrt.pop %v1285
    %v1288 = vmul.f32 %v1272, %v1286
    %v1289 = vmul.f32 %v1273, %v1287
    %v1291 = vlaneseq
    %v1292 = vshrl.u32 %v1291, 7
    %v1293 = vsub.s32 0, %v1292
    %v1294 = vrot.slane %v224, %v1293
    %v1296 = vmul.f32 %v1288, %v1294
    %v1297 = vmul.f32 %v1289, %v1294
    %v1299 = vlaneseq
    %v1300 = vshrl.u32 %v1299, 7
    %v1301 = vsub.s32 0, %v1300
    %v1302 = vrot.slane %v225, %v1301
    %v1304 = vadd.f32 %v1296, %v1302
    %v1305 = vadd.f32 %v1297, %v1302
    %v1307 = vsel %vm272, %v1304, 0
    %v1310 = vsel %vm272, %v1305, 0
    %1312 = vmatprep.subr.mxu0 0.0
    %1313 = vmatpush1.msra.mxu0 0.0
    %1314 = vmatprep.subr.mxu0 0.0
    %1315 = vmatpush1.msra.mxu0 0.0
    %1316 = vmatprep.subr.mxu0 0.0
    %1317 = vmatpush1.msra.mxu0 0.0
    %1318 = vmatprep.subr.mxu0 0.0
    %1319 = vmatpush1.msra.mxu0 0.0
    %1320 = vmatprep.subr.mxu0 0.0
    %1321 = vmatpush1.msra.mxu0 0.0
    %1322 = vmatprep.subr.mxu0 0.0
    %1323 = vmatpush1.msra.mxu0 0.0
    %1324 = vmatprep.subr.mxu0 0.0
    %1325 = vmatpush1.msra.mxu0 0.0
    %1326 = vmatprep.subr.mxu0 0.0
    %1327 = vmatpush1.msra.mxu0 0.0
    %1328 = vmatprep.subr.mxu0 0.0
    %1329 = vmatpush1.msra.mxu0 0.0
    %1330 = vmatprep.subr.mxu0 0.0
    %1331 = vmatpush1.msra.mxu0 0.0
    %1332 = vmatprep.subr.mxu0 0.0
    %1333 = vmatpush1.msra.mxu0 0.0
    %1334 = vmatprep.subr.mxu0 0.0
    %1335 = vmatpush1.msra.mxu0 0.0
    %1336 = vmatprep.subr.mxu0 0.0
    %1337 = vmatpush1.msra.mxu0 %v207
    %1338 = vmatprep.subr.mxu0 0.0
    %1339 = vmatpush1.msra.mxu0 %v206
    %1340 = vmatprep.subr.mxu0 0.0
    %1341 = vmatpush1.msra.mxu0 %v205
    %1342 = vmatprep.subr.mxu0 0.0
    %1343 = vmatpush1.msra.mxu0 %v204
    %1344 = vmatprep.subr.mxu0 0.0
    %1345 = vmatpush2.msra.mxu0 0.0
    %1346 = vmatprep.subr.mxu0 0.0
    %1347 = vmatpush2.msra.mxu0 0.0
    %1348 = vmatprep.subr.mxu0 0.0
    %1349 = vmatpush2.msra.mxu0 0.0
    %1350 = vmatprep.subr.mxu0 0.0
    %1351 = vmatpush2.msra.mxu0 0.0
    %1352 = vmatprep.subr.mxu0 0.0
    %1353 = vmatpush2.msra.mxu0 0.0
    %1354 = vmatprep.subr.mxu0 0.0
    %1355 = vmatpush2.msra.mxu0 0.0
    %1356 = vmatprep.subr.mxu0 0.0
    %1357 = vmatpush2.msra.mxu0 0.0
    %1358 = vmatprep.subr.mxu0 0.0
    %1359 = vmatpush2.msra.mxu0 0.0
    %1360 = vmatprep.subr.mxu0 0.0
    %1361 = vmatpush2.msra.mxu0 0.0
    %1362 = vmatprep.subr.mxu0 0.0
    %1363 = vmatpush2.msra.mxu0 0.0
    %1364 = vmatprep.subr.mxu0 0.0
    %1365 = vmatpush2.msra.mxu0 0.0
    %1366 = vmatprep.subr.mxu0 0.0
    %1367 = vmatpush2.msra.mxu0 0.0
    %1368 = vmatprep.subr.mxu0 0.0
    %1369 = vmatpush2.msra.mxu0 0.0
    %1370 = vmatprep.subr.mxu0 0.0
    %1371 = vmatpush2.msra.mxu0 0.0
    %1372 = vmatprep.subr.mxu0 0.0
    %1373 = vmatpush2.msra.mxu0 0.0
    %1374 = vmatprep.subr.mxu0 0.0
    %1375 = vmatpush2.msra.mxu0 0.0
    %1376 = vmatprep.mubr.f32.mxu0 0.0
    %1377 = vmatmul.mubr.f32.gmra.mxu0 %v1307
    %v1378 = vpop.f32.mrf.mxu0
    %v1379 = vadd.f32 %v270, %v1378
    %v1380 = vpop.f32.mrf.mxu0
    %1381 = vmatprep.mubr.f32.mxu0 0.0
    %1382 = vmatmul.mubr.f32.gmra.mxu0 %v1310
    %v1383 = vpop.f32.mrf.mxu0
    %v1384 = vadd.f32 %v270, %v1383
    %v1385 = vpop.f32.mrf.mxu0
    %1386 = vdwg.mxu0
    %v1387 = vmax.f32 %v1379, 0.0
    %v1388 = vmax.f32 %v1384, 0.0
    %1389 = vmatprep.subr.mxu0 0.0
    %1390 = vmatpush1.msra.mxu0 0.0
    %1391 = vmatprep.subr.mxu0 0.0
    %1392 = vmatpush1.msra.mxu0 0.0
    %1393 = vmatprep.subr.mxu0 0.0
    %1394 = vmatpush1.msra.mxu0 0.0
    %1395 = vmatprep.subr.mxu0 0.0
    %1396 = vmatpush1.msra.mxu0 0.0
    %1397 = vmatprep.subr.mxu0 0.0
    %1398 = vmatpush1.msra.mxu0 0.0
    %1399 = vmatprep.subr.mxu0 0.0
    %1400 = vmatpush1.msra.mxu0 0.0
    %1401 = vmatprep.subr.mxu0 0.0
    %1402 = vmatpush1.msra.mxu0 0.0
    %1403 = vmatprep.subr.mxu0 0.0
    %1404 = vmatpush1.msra.mxu0 0.0
    %1405 = vmatprep.subr.mxu0 0.0
    %1406 = vmatpush1.msra.mxu0 0.0
    %1407 = vmatprep.subr.mxu0 0.0
    %1408 = vmatpush1.msra.mxu0 0.0
    %1409 = vmatprep.subr.mxu0 0.0
    %1410 = vmatpush1.msra.mxu0 0.0
    %1411 = vmatprep.subr.mxu0 0.0
    %1412 = vmatpush1.msra.mxu0 0.0
    %1413 = vmatprep.subr.mxu0 0.0
    %1414 = vmatpush1.msra.mxu0 %v212
    %1415 = vmatprep.subr.mxu0 0.0
    %1416 = vmatpush1.msra.mxu0 %v211
    %1417 = vmatprep.subr.mxu0 0.0
    %1418 = vmatpush1.msra.mxu0 %v210
    %1419 = vmatprep.subr.mxu0 0.0
    %1420 = vmatpush1.msra.mxu0 %v209
    %1421 = vmatprep.subr.mxu0 0.0
    %1422 = vmatpush2.msra.mxu0 0.0
    %1423 = vmatprep.subr.mxu0 0.0
    %1424 = vmatpush2.msra.mxu0 0.0
    %1425 = vmatprep.subr.mxu0 0.0
    %1426 = vmatpush2.msra.mxu0 0.0
    %1427 = vmatprep.subr.mxu0 0.0
    %1428 = vmatpush2.msra.mxu0 0.0
    %1429 = vmatprep.subr.mxu0 0.0
    %1430 = vmatpush2.msra.mxu0 0.0
    %1431 = vmatprep.subr.mxu0 0.0
    %1432 = vmatpush2.msra.mxu0 0.0
    %1433 = vmatprep.subr.mxu0 0.0
    %1434 = vmatpush2.msra.mxu0 0.0
    %1435 = vmatprep.subr.mxu0 0.0
    %1436 = vmatpush2.msra.mxu0 0.0
    %1437 = vmatprep.subr.mxu0 0.0
    %1438 = vmatpush2.msra.mxu0 0.0
    %1439 = vmatprep.subr.mxu0 0.0
    %1440 = vmatpush2.msra.mxu0 0.0
    %1441 = vmatprep.subr.mxu0 0.0
    %1442 = vmatpush2.msra.mxu0 0.0
    %1443 = vmatprep.subr.mxu0 0.0
    %1444 = vmatpush2.msra.mxu0 0.0
    %1445 = vmatprep.subr.mxu0 0.0
    %1446 = vmatpush2.msra.mxu0 0.0
    %1447 = vmatprep.subr.mxu0 0.0
    %1448 = vmatpush2.msra.mxu0 0.0
    %1449 = vmatprep.subr.mxu0 0.0
    %1450 = vmatpush2.msra.mxu0 0.0
    %1451 = vmatprep.subr.mxu0 0.0
    %1452 = vmatpush2.msra.mxu0 0.0
    %1453 = vmatprep.mubr.f32.mxu0 0.0
    %1454 = vmatmul.mubr.f32.gmra.mxu0 %v1307
    %v1455 = vpop.f32.mrf.mxu0
    %v1456 = vadd.f32 %v360, %v1455
    %v1457 = vpop.f32.mrf.mxu0
    %1458 = vmatprep.mubr.f32.mxu0 0.0
    %1459 = vmatmul.mubr.f32.gmra.mxu0 %v1310
    %v1460 = vpop.f32.mrf.mxu0
    %v1461 = vadd.f32 %v360, %v1460
    %v1462 = vpop.f32.mrf.mxu0
    %1463 = vdwg.mxu0
    %v1464 = vmax.f32 %v1456, 0.0
    %v1465 = vmax.f32 %v1461, 0.0
    %1466 = vmatprep.subr.mxu0 0.0
    %1467 = vmatpush1.msra.mxu0 0.0
    %1468 = vmatprep.subr.mxu0 0.0
    %1469 = vmatpush1.msra.mxu0 0.0
    %1470 = vmatprep.subr.mxu0 0.0
    %1471 = vmatpush1.msra.mxu0 0.0
    %1472 = vmatprep.subr.mxu0 0.0
    %1473 = vmatpush1.msra.mxu0 0.0
    %1474 = vmatprep.subr.mxu0 0.0
    %1475 = vmatpush1.msra.mxu0 0.0
    %1476 = vmatprep.subr.mxu0 0.0
    %1477 = vmatpush1.msra.mxu0 0.0
    %1478 = vmatprep.subr.mxu0 0.0
    %1479 = vmatpush1.msra.mxu0 0.0
    %1480 = vmatprep.subr.mxu0 0.0
    %1481 = vmatpush1.msra.mxu0 0.0
    %1482 = vmatprep.subr.mxu0 0.0
    %1483 = vmatpush1.msra.mxu0 0.0
    %1484 = vmatprep.subr.mxu0 0.0
    %1485 = vmatpush1.msra.mxu0 0.0
    %1486 = vmatprep.subr.mxu0 0.0
    %1487 = vmatpush1.msra.mxu0 0.0
    %1488 = vmatprep.subr.mxu0 0.0
    %1489 = vmatpush1.msra.mxu0 0.0
    %1490 = vmatprep.subr.mxu0 0.0
    %1491 = vmatpush1.msra.mxu0 %v217
    %1492 = vmatprep.subr.mxu0 0.0
    %1493 = vmatpush1.msra.mxu0 %v216
    %1494 = vmatprep.subr.mxu0 0.0
    %1495 = vmatpush1.msra.mxu0 %v215
    %1496 = vmatprep.subr.mxu0 0.0
    %1497 = vmatpush1.msra.mxu0 %v214
    %1498 = vmatprep.subr.mxu0 0.0
    %1499 = vmatpush2.msra.mxu0 0.0
    %1500 = vmatprep.subr.mxu0 0.0
    %1501 = vmatpush2.msra.mxu0 0.0
    %1502 = vmatprep.subr.mxu0 0.0
    %1503 = vmatpush2.msra.mxu0 0.0
    %1504 = vmatprep.subr.mxu0 0.0
    %1505 = vmatpush2.msra.mxu0 0.0
    %1506 = vmatprep.subr.mxu0 0.0
    %1507 = vmatpush2.msra.mxu0 0.0
    %1508 = vmatprep.subr.mxu0 0.0
    %1509 = vmatpush2.msra.mxu0 0.0
    %1510 = vmatprep.subr.mxu0 0.0
    %1511 = vmatpush2.msra.mxu0 0.0
    %1512 = vmatprep.subr.mxu0 0.0
    %1513 = vmatpush2.msra.mxu0 0.0
    %1514 = vmatprep.subr.mxu0 0.0
    %1515 = vmatpush2.msra.mxu0 0.0
    %1516 = vmatprep.subr.mxu0 0.0
    %1517 = vmatpush2.msra.mxu0 0.0
    %1518 = vmatprep.subr.mxu0 0.0
    %1519 = vmatpush2.msra.mxu0 0.0
    %1520 = vmatprep.subr.mxu0 0.0
    %1521 = vmatpush2.msra.mxu0 0.0
    %1522 = vmatprep.subr.mxu0 0.0
    %1523 = vmatpush2.msra.mxu0 0.0
    %1524 = vmatprep.subr.mxu0 0.0
    %1525 = vmatpush2.msra.mxu0 0.0
    %1526 = vmatprep.subr.mxu0 0.0
    %1527 = vmatpush2.msra.mxu0 0.0
    %1528 = vmatprep.subr.mxu0 0.0
    %1529 = vmatpush2.msra.mxu0 0.0
    %1530 = vmatprep.mubr.f32.mxu0 0.0
    %1531 = vmatmul.mubr.f32.gmra.mxu0 %v1307
    %v1532 = vpop.f32.mrf.mxu0
    %v1533 = vadd.f32 %v443, %v1532
    %v1534 = vpop.f32.mrf.mxu0
    %1535 = vmatprep.mubr.f32.mxu0 0.0
    %1536 = vmatmul.mubr.f32.gmra.mxu0 %v1310
    %v1537 = vpop.f32.mrf.mxu0
    %v1538 = vadd.f32 %v443, %v1537
    %v1539 = vpop.f32.mrf.mxu0
    %1540 = vdwg.mxu0
    %v1541 = vmax.f32 %v1533, 0.0
    %v1542 = vmax.f32 %v1538, 0.0
    %v1543 = vmul.f32 %v1387, %v226
    %v1544 = vmul.f32 %v1388, %v227
    %v1545 = vmul.f32 %v1387, %v228
    %v1546 = vmul.f32 %v1388, %v229
    %v1547 = vmul.f32 %v1387, %v230
    %v1548 = vmul.f32 %v1388, %v231
    %v1549 = vmul.f32 %v1387, %v232
    %v1550 = vmul.f32 %v1388, %v233
    %v1552 = vsel %vm272, %v1543, 0
    %v1555 = vsel %vm272, %v1544, 0
    %v1558 = vsel %vm272, %v1545, 0
    %v1561 = vsel %vm272, %v1546, 0
    %v1564 = vsel %vm272, %v1547, 0
    %v1567 = vsel %vm272, %v1548, 0
    %v1570 = vsel %vm272, %v1549, 0
    %v1573 = vsel %vm272, %v1550, 0
    %v1576 = vsel %vm272, %v1464, 0
    %v1579 = vsel %vm272, %v1465, 0
    %1581 = vmatprep.subr.mxu0 0.0
    %1582 = vmatpush1.xpose.msra.mxu0 0.0
    %1583 = vmatprep.subr.mxu0 0.0
    %1584 = vmatpush1.xpose.msra.mxu0 0.0
    %1585 = vmatprep.subr.mxu0 0.0
    %1586 = vmatpush1.xpose.msra.mxu0 0.0
    %1587 = vmatprep.subr.mxu0 0.0
    %1588 = vmatpush1.xpose.msra.mxu0 0.0
    %1589 = vmatprep.subr.mxu0 0.0
    %1590 = vmatpush1.xpose.msra.mxu0 0.0
    %1591 = vmatprep.subr.mxu0 0.0
    %1592 = vmatpush1.xpose.msra.mxu0 0.0
    %1593 = vmatprep.subr.mxu0 0.0
    %1594 = vmatpush1.xpose.msra.mxu0 0.0
    %1595 = vmatprep.subr.mxu0 0.0
    %1596 = vmatpush1.xpose.msra.mxu0 0.0
    %1597 = vmatprep.subr.mxu0 0.0
    %1598 = vmatpush1.xpose.msra.mxu0 0.0
    %1599 = vmatprep.subr.mxu0 0.0
    %1600 = vmatpush1.xpose.msra.mxu0 0.0
    %1601 = vmatprep.subr.mxu0 0.0
    %1602 = vmatpush1.xpose.msra.mxu0 0.0
    %1603 = vmatprep.subr.mxu0 0.0
    %1604 = vmatpush1.xpose.msra.mxu0 0.0
    %1605 = vmatprep.subr.mxu0 0.0
    %1606 = vmatpush1.xpose.msra.mxu0 0.0
    %1607 = vmatprep.subr.mxu0 0.0
    %1608 = vmatpush1.xpose.msra.mxu0 0.0
    %1609 = vmatprep.subr.mxu0 0.0
    %1610 = vmatpush1.xpose.msra.mxu0 %v1579
    %1611 = vmatprep.subr.mxu0 0.0
    %1612 = vmatpush1.xpose.msra.mxu0 %v1576
    %1613 = vmatprep.subr.mxu0 0.0
    %1614 = vmatpush2.xpose.msra.mxu0 0.0
    %1615 = vmatprep.subr.mxu0 0.0
    %1616 = vmatpush2.xpose.msra.mxu0 0.0
    %1617 = vmatprep.subr.mxu0 0.0
    %1618 = vmatpush2.xpose.msra.mxu0 0.0
    %1619 = vmatprep.subr.mxu0 0.0
    %1620 = vmatpush2.xpose.msra.mxu0 0.0
    %1621 = vmatprep.subr.mxu0 0.0
    %1622 = vmatpush2.xpose.msra.mxu0 0.0
    %1623 = vmatprep.subr.mxu0 0.0
    %1624 = vmatpush2.xpose.msra.mxu0 0.0
    %1625 = vmatprep.subr.mxu0 0.0
    %1626 = vmatpush2.xpose.msra.mxu0 0.0
    %1627 = vmatprep.subr.mxu0 0.0
    %1628 = vmatpush2.xpose.msra.mxu0 0.0
    %1629 = vmatprep.subr.mxu0 0.0
    %1630 = vmatpush2.xpose.msra.mxu0 0.0
    %1631 = vmatprep.subr.mxu0 0.0
    %1632 = vmatpush2.xpose.msra.mxu0 0.0
    %1633 = vmatprep.subr.mxu0 0.0
    %1634 = vmatpush2.xpose.msra.mxu0 0.0
    %1635 = vmatprep.subr.mxu0 0.0
    %1636 = vmatpush2.xpose.msra.mxu0 0.0
    %1637 = vmatprep.subr.mxu0 0.0
    %1638 = vmatpush2.xpose.msra.mxu0 0.0
    %1639 = vmatprep.subr.mxu0 0.0
    %1640 = vmatpush2.xpose.msra.mxu0 0.0
    %1641 = vmatprep.subr.mxu0 0.0
    %1642 = vmatpush2.xpose.msra.mxu0 0.0
    %1643 = vmatprep.subr.mxu0 0.0
    %1644 = vmatpush2.xpose.msra.mxu0 0.0
    %1645 = vmatprep.mubr.f32.mxu0 0.0
    %1646 = vmatmul.mubr.f32.gmra.mxu0 %v1552
    %v1647 = vpop.f32.mrf.mxu0
    %v1648 = vadd.f32 0.0, %v1647
    %v1649 = vpop.f32.mrf.mxu0
    %1650 = vmatprep.mubr.f32.mxu0 0.0
    %1651 = vmatmul.mubr.f32.gmra.mxu0 %v1555
    %v1652 = vpop.f32.mrf.mxu0
    %v1653 = vadd.f32 0.0, %v1652
    %v1654 = vpop.f32.mrf.mxu0
    %1655 = vmatprep.mubr.f32.mxu0 0.0
    %1656 = vmatmul.mubr.f32.gmra.mxu0 %v1558
    %v1657 = vpop.f32.mrf.mxu0
    %v1658 = vadd.f32 0.0, %v1657
    %v1659 = vpop.f32.mrf.mxu0
    %1660 = vmatprep.mubr.f32.mxu0 0.0
    %1661 = vmatmul.mubr.f32.gmra.mxu0 %v1561
    %v1662 = vpop.f32.mrf.mxu0
    %v1663 = vadd.f32 0.0, %v1662
    %v1664 = vpop.f32.mrf.mxu0
    %1665 = vmatprep.mubr.f32.mxu0 0.0
    %1666 = vmatmul.mubr.f32.gmra.mxu0 %v1564
    %v1667 = vpop.f32.mrf.mxu0
    %v1668 = vadd.f32 0.0, %v1667
    %v1669 = vpop.f32.mrf.mxu0
    %1670 = vmatprep.mubr.f32.mxu0 0.0
    %1671 = vmatmul.mubr.f32.gmra.mxu0 %v1567
    %v1672 = vpop.f32.mrf.mxu0
    %v1673 = vadd.f32 0.0, %v1672
    %v1674 = vpop.f32.mrf.mxu0
    %1675 = vmatprep.mubr.f32.mxu0 0.0
    %1676 = vmatmul.mubr.f32.gmra.mxu0 %v1570
    %v1677 = vpop.f32.mrf.mxu0
    %v1678 = vadd.f32 0.0, %v1677
    %v1679 = vpop.f32.mrf.mxu0
    %1680 = vmatprep.mubr.f32.mxu0 0.0
    %1681 = vmatmul.mubr.f32.gmra.mxu0 %v1573
    %v1682 = vpop.f32.mrf.mxu0
    %v1683 = vadd.f32 0.0, %v1682
    %v1684 = vpop.f32.mrf.mxu0
    %1685 = vdwg.mxu0
    %v1686 = vmul.f32 %v1648, 0.35355338
    %v1687 = vmul.f32 %v1653, 0.35355338
    %v1688 = vmul.f32 %v1658, 0.35355338
    %v1689 = vmul.f32 %v1663, 0.35355338
    %v1690 = vmul.f32 %v1668, 0.35355338
    %v1691 = vmul.f32 %v1673, 0.35355338
    %v1692 = vmul.f32 %v1678, 0.35355338
    %v1693 = vmul.f32 %v1683, 0.35355338
    %v1694 = vadd.f32 %v1686, %v234
    %v1695 = vadd.f32 %v1687, %v235
    %v1696 = vadd.f32 %v1688, %v236
    %v1697 = vadd.f32 %v1689, %v237
    %v1698 = vadd.f32 %v1690, %v238
    %v1699 = vadd.f32 %v1691, %v239
    %v1700 = vadd.f32 %v1692, %v240
    %v1701 = vadd.f32 %v1693, %v241
    %v1702 = vsel %vm681, %v1694, -inf
    %1703 = vmax.xlane.f32.xlu0 %v1702
    %v1704 = vpop.xlane.xlu0 %1703
    %v1705 = vsel %vm681, %v1695, -inf
    %1706 = vmax.xlane.f32.xlu0 %v1705
    %v1707 = vpop.xlane.xlu0 %1706
    %v1708 = vsel %vm681, %v1696, -inf
    %1709 = vmax.xlane.f32.xlu0 %v1708
    %v1710 = vpop.xlane.xlu0 %1709
    %v1711 = vsel %vm681, %v1697, -inf
    %1712 = vmax.xlane.f32.xlu0 %v1711
    %v1713 = vpop.xlane.xlu0 %1712
    %v1714 = vsel %vm681, %v1698, -inf
    %1715 = vmax.xlane.f32.xlu0 %v1714
    %v1716 = vpop.xlane.xlu0 %1715
    %v1717 = vsel %vm681, %v1699, -inf
    %1718 = vmax.xlane.f32.xlu0 %v1717
    %v1719 = vpop.xlane.xlu0 %1718
    %v1720 = vsel %vm681, %v1700, -inf
    %1721 = vmax.xlane.f32.xlu0 %v1720
    %v1722 = vpop.xlane.xlu0 %1721
    %v1723 = vsel %vm681, %v1701, -inf
    %1724 = vmax.xlane.f32.xlu0 %v1723
    %v1725 = vpop.xlane.xlu0 %1724
    %v1726 = vsub.f32 %v1694, %v1704
    %v1727 = vsub.f32 %v1695, %v1707
    %v1728 = vsub.f32 %v1696, %v1710
    %v1729 = vsub.f32 %v1697, %v1713
    %v1730 = vsub.f32 %v1698, %v1716
    %v1731 = vsub.f32 %v1699, %v1719
    %v1732 = vsub.f32 %v1700, %v1722
    %v1733 = vsub.f32 %v1701, %v1725
    %v1734 = vmul.f32 %v1726, 1.442695
    %v1735 = vpow.pop %v1734
    %v1736 = vmul.f32 %v1727, 1.442695
    %v1737 = vpow.pop %v1736
    %v1738 = vmul.f32 %v1728, 1.442695
    %v1739 = vpow.pop %v1738
    %v1740 = vmul.f32 %v1729, 1.442695
    %v1741 = vpow.pop %v1740
    %v1742 = vmul.f32 %v1730, 1.442695
    %v1743 = vpow.pop %v1742
    %v1744 = vmul.f32 %v1731, 1.442695
    %v1745 = vpow.pop %v1744
    %v1746 = vmul.f32 %v1732, 1.442695
    %v1747 = vpow.pop %v1746
    %v1748 = vmul.f32 %v1733, 1.442695
    %v1749 = vpow.pop %v1748
    %v1750 = vsel %vm681, %v1735, 0.0
    %1751 = vadd.xlane.f32.xlu0 %v1750
    %v1752 = vpop.xlane.xlu0 %1751
    %v1753 = vsel %vm681, %v1737, 0.0
    %1754 = vadd.xlane.f32.xlu0 %v1753
    %v1755 = vpop.xlane.xlu0 %1754
    %v1756 = vsel %vm681, %v1739, 0.0
    %1757 = vadd.xlane.f32.xlu0 %v1756
    %v1758 = vpop.xlane.xlu0 %1757
    %v1759 = vsel %vm681, %v1741, 0.0
    %1760 = vadd.xlane.f32.xlu0 %v1759
    %v1761 = vpop.xlane.xlu0 %1760
    %v1762 = vsel %vm681, %v1743, 0.0
    %1763 = vadd.xlane.f32.xlu0 %v1762
    %v1764 = vpop.xlane.xlu0 %1763
    %v1765 = vsel %vm681, %v1745, 0.0
    %1766 = vadd.xlane.f32.xlu0 %v1765
    %v1767 = vpop.xlane.xlu0 %1766
    %v1768 = vsel %vm681, %v1747, 0.0
    %1769 = vadd.xlane.f32.xlu0 %v1768
    %v1770 = vpop.xlane.xlu0 %1769
    %v1771 = vsel %vm681, %v1749, 0.0
    %1772 = vadd.xlane.f32.xlu0 %v1771
    %v1773 = vpop.xlane.xlu0 %1772
    %v1774 = vrcp.pop %v1752
    %v1775 = vrcp.pop %v1755
    %v1776 = vrcp.pop %v1758
    %v1777 = vrcp.pop %v1761
    %v1778 = vrcp.pop %v1764
    %v1779 = vrcp.pop %v1767
    %v1780 = vrcp.pop %v1770
    %v1781 = vrcp.pop %v1773
    %v1782 = vmul.f32 %v1735, %v1774
    %v1783 = vmul.f32 %v1737, %v1775
    %v1784 = vmul.f32 %v1739, %v1776
    %v1785 = vmul.f32 %v1741, %v1777
    %v1786 = vmul.f32 %v1743, %v1778
    %v1787 = vmul.f32 %v1745, %v1779
    %v1788 = vmul.f32 %v1747, %v1780
    %v1789 = vmul.f32 %v1749, %v1781
    %v1791 = vsel %vm681, %v1782, 0
    %v1794 = vsel %vm681, %v1783, 0
    %v1797 = vsel %vm681, %v1784, 0
    %v1800 = vsel %vm681, %v1785, 0
    %v1803 = vsel %vm681, %v1786, 0
    %v1806 = vsel %vm681, %v1787, 0
    %v1809 = vsel %vm681, %v1788, 0
    %v1812 = vsel %vm681, %v1789, 0
    %1814 = vmatprep.subr.mxu0 0.0
    %1815 = vmatpush1.msra.mxu0 0.0
    %1816 = vmatprep.subr.mxu0 0.0
    %1817 = vmatpush1.msra.mxu0 0.0
    %1818 = vmatprep.subr.mxu0 0.0
    %1819 = vmatpush1.msra.mxu0 0.0
    %1820 = vmatprep.subr.mxu0 0.0
    %1821 = vmatpush1.msra.mxu0 0.0
    %1822 = vmatprep.subr.mxu0 0.0
    %1823 = vmatpush1.msra.mxu0 0.0
    %1824 = vmatprep.subr.mxu0 0.0
    %1825 = vmatpush1.msra.mxu0 0.0
    %1826 = vmatprep.subr.mxu0 0.0
    %1827 = vmatpush1.msra.mxu0 0.0
    %1828 = vmatprep.subr.mxu0 0.0
    %1829 = vmatpush1.msra.mxu0 0.0
    %1830 = vmatprep.subr.mxu0 0.0
    %1831 = vmatpush1.msra.mxu0 0.0
    %1832 = vmatprep.subr.mxu0 0.0
    %1833 = vmatpush1.msra.mxu0 0.0
    %1834 = vmatprep.subr.mxu0 0.0
    %1835 = vmatpush1.msra.mxu0 0.0
    %1836 = vmatprep.subr.mxu0 0.0
    %1837 = vmatpush1.msra.mxu0 0.0
    %1838 = vmatprep.subr.mxu0 0.0
    %1839 = vmatpush1.msra.mxu0 0.0
    %1840 = vmatprep.subr.mxu0 0.0
    %1841 = vmatpush1.msra.mxu0 0.0
    %1842 = vmatprep.subr.mxu0 0.0
    %1843 = vmatpush1.msra.mxu0 %v1542
    %1844 = vmatprep.subr.mxu0 0.0
    %1845 = vmatpush1.msra.mxu0 %v1541
    %1846 = vmatprep.subr.mxu0 0.0
    %1847 = vmatpush2.msra.mxu0 0.0
    %1848 = vmatprep.subr.mxu0 0.0
    %1849 = vmatpush2.msra.mxu0 0.0
    %1850 = vmatprep.subr.mxu0 0.0
    %1851 = vmatpush2.msra.mxu0 0.0
    %1852 = vmatprep.subr.mxu0 0.0
    %1853 = vmatpush2.msra.mxu0 0.0
    %1854 = vmatprep.subr.mxu0 0.0
    %1855 = vmatpush2.msra.mxu0 0.0
    %1856 = vmatprep.subr.mxu0 0.0
    %1857 = vmatpush2.msra.mxu0 0.0
    %1858 = vmatprep.subr.mxu0 0.0
    %1859 = vmatpush2.msra.mxu0 0.0
    %1860 = vmatprep.subr.mxu0 0.0
    %1861 = vmatpush2.msra.mxu0 0.0
    %1862 = vmatprep.subr.mxu0 0.0
    %1863 = vmatpush2.msra.mxu0 0.0
    %1864 = vmatprep.subr.mxu0 0.0
    %1865 = vmatpush2.msra.mxu0 0.0
    %1866 = vmatprep.subr.mxu0 0.0
    %1867 = vmatpush2.msra.mxu0 0.0
    %1868 = vmatprep.subr.mxu0 0.0
    %1869 = vmatpush2.msra.mxu0 0.0
    %1870 = vmatprep.subr.mxu0 0.0
    %1871 = vmatpush2.msra.mxu0 0.0
    %1872 = vmatprep.subr.mxu0 0.0
    %1873 = vmatpush2.msra.mxu0 0.0
    %1874 = vmatprep.subr.mxu0 0.0
    %1875 = vmatpush2.msra.mxu0 0.0
    %1876 = vmatprep.subr.mxu0 0.0
    %1877 = vmatpush2.msra.mxu0 0.0
    %1878 = vmatprep.mubr.f32.mxu0 0.0
    %1879 = vmatmul.mubr.f32.gmra.mxu0 %v1791
    %v1880 = vpop.f32.mrf.mxu0
    %v1881 = vadd.f32 0.0, %v1880
    %v1882 = vpop.f32.mrf.mxu0
    %1883 = vmatprep.mubr.f32.mxu0 0.0
    %1884 = vmatmul.mubr.f32.gmra.mxu0 %v1794
    %v1885 = vpop.f32.mrf.mxu0
    %v1886 = vadd.f32 0.0, %v1885
    %v1887 = vpop.f32.mrf.mxu0
    %1888 = vmatprep.mubr.f32.mxu0 0.0
    %1889 = vmatmul.mubr.f32.gmra.mxu0 %v1797
    %v1890 = vpop.f32.mrf.mxu0
    %v1891 = vadd.f32 0.0, %v1890
    %v1892 = vpop.f32.mrf.mxu0
    %1893 = vmatprep.mubr.f32.mxu0 0.0
    %1894 = vmatmul.mubr.f32.gmra.mxu0 %v1800
    %v1895 = vpop.f32.mrf.mxu0
    %v1896 = vadd.f32 0.0, %v1895
    %v1897 = vpop.f32.mrf.mxu0
    %1898 = vmatprep.mubr.f32.mxu0 0.0
    %1899 = vmatmul.mubr.f32.gmra.mxu0 %v1803
    %v1900 = vpop.f32.mrf.mxu0
    %v1901 = vadd.f32 0.0, %v1900
    %v1902 = vpop.f32.mrf.mxu0
    %1903 = vmatprep.mubr.f32.mxu0 0.0
    %1904 = vmatmul.mubr.f32.gmra.mxu0 %v1806
    %v1905 = vpop.f32.mrf.mxu0
    %v1906 = vadd.f32 0.0, %v1905
    %v1907 = vpop.f32.mrf.mxu0
    %1908 = vmatprep.mubr.f32.mxu0 0.0
    %1909 = vmatmul.mubr.f32.gmra.mxu0 %v1809
    %v1910 = vpop.f32.mrf.mxu0
    %v1911 = vadd.f32 0.0, %v1910
    %v1912 = vpop.f32.mrf.mxu0
    %1913 = vmatprep.mubr.f32.mxu0 0.0
    %1914 = vmatmul.mubr.f32.gmra.mxu0 %v1812
    %v1915 = vpop.f32.mrf.mxu0
    %v1916 = vadd.f32 0.0, %v1915
    %v1917 = vpop.f32.mrf.mxu0
    %1918 = vdwg.mxu0
    %v1919 = vmul.f32 %v1881, %v242
    %v1920 = vmul.f32 %v1886, %v243
    %v1921 = vmul.f32 %v1891, %v244
    %v1922 = vmul.f32 %v1896, %v245
    %v1923 = vmul.f32 %v1901, %v246
    %v1924 = vmul.f32 %v1906, %v247
    %v1925 = vmul.f32 %v1911, %v248
    %v1926 = vmul.f32 %v1916, %v249
    %v1928 = vsel %vm272, %v1919, 0
    %v1931 = vsel %vm272, %v1920, 0
    %v1934 = vsel %vm272, %v1921, 0
    %v1937 = vsel %vm272, %v1922, 0
    %v1940 = vsel %vm272, %v1923, 0
    %v1943 = vsel %vm272, %v1924, 0
    %v1946 = vsel %vm272, %v1925, 0
    %v1949 = vsel %vm272, %v1926, 0
    %1951 = vmatprep.subr.mxu0 0.0
    %1952 = vmatpush1.msra.mxu0 0.0
    %1953 = vmatprep.subr.mxu0 0.0
    %1954 = vmatpush1.msra.mxu0 0.0
    %1955 = vmatprep.subr.mxu0 0.0
    %1956 = vmatpush1.msra.mxu0 0.0
    %1957 = vmatprep.subr.mxu0 0.0
    %1958 = vmatpush1.msra.mxu0 0.0
    %1959 = vmatprep.subr.mxu0 0.0
    %1960 = vmatpush1.msra.mxu0 0.0
    %1961 = vmatprep.subr.mxu0 0.0
    %1962 = vmatpush1.msra.mxu0 0.0
    %1963 = vmatprep.subr.mxu0 0.0
    %1964 = vmatpush1.msra.mxu0 0.0
    %1965 = vmatprep.subr.mxu0 0.0
    %1966 = vmatpush1.msra.mxu0 0.0
    %1967 = vmatprep.subr.mxu0 0.0
    %1968 = vmatpush1.msra.mxu0 0.0
    %1969 = vmatprep.subr.mxu0 0.0
    %1970 = vmatpush1.msra.mxu0 0.0
    %1971 = vmatprep.subr.mxu0 0.0
    %1972 = vmatpush1.msra.mxu0 0.0
    %1973 = vmatprep.subr.mxu0 0.0
    %1974 = vmatpush1.msra.mxu0 0.0
    %1975 = vmatprep.subr.mxu0 0.0
    %1976 = vmatpush1.msra.mxu0 %v261
    %1977 = vmatprep.subr.mxu0 0.0
    %1978 = vmatpush1.msra.mxu0 %v260
    %1979 = vmatprep.subr.mxu0 0.0
    %1980 = vmatpush1.msra.mxu0 %v259
    %1981 = vmatprep.subr.mxu0 0.0
    %1982 = vmatpush1.msra.mxu0 %v258
    %1983 = vmatprep.subr.mxu0 0.0
    %1984 = vmatpush2.msra.mxu0 0.0
    %1985 = vmatprep.subr.mxu0 0.0
    %1986 = vmatpush2.msra.mxu0 0.0
    %1987 = vmatprep.subr.mxu0 0.0
    %1988 = vmatpush2.msra.mxu0 0.0
    %1989 = vmatprep.subr.mxu0 0.0
    %1990 = vmatpush2.msra.mxu0 0.0
    %1991 = vmatprep.subr.mxu0 0.0
    %1992 = vmatpush2.msra.mxu0 0.0
    %1993 = vmatprep.subr.mxu0 0.0
    %1994 = vmatpush2.msra.mxu0 0.0
    %1995 = vmatprep.subr.mxu0 0.0
    %1996 = vmatpush2.msra.mxu0 0.0
    %1997 = vmatprep.subr.mxu0 0.0
    %1998 = vmatpush2.msra.mxu0 0.0
    %1999 = vmatprep.subr.mxu0 0.0
    %2000 = vmatpush2.msra.mxu0 0.0
    %2001 = vmatprep.subr.mxu0 0.0
    %2002 = vmatpush2.msra.mxu0 0.0
    %2003 = vmatprep.subr.mxu0 0.0
    %2004 = vmatpush2.msra.mxu0 0.0
    %2005 = vmatprep.subr.mxu0 0.0
    %2006 = vmatpush2.msra.mxu0 0.0
    %2007 = vmatprep.subr.mxu0 0.0
    %2008 = vmatpush2.msra.mxu0 0.0
    %2009 = vmatprep.subr.mxu0 0.0
    %2010 = vmatpush2.msra.mxu0 0.0
    %2011 = vmatprep.subr.mxu0 0.0
    %2012 = vmatpush2.msra.mxu0 0.0
    %2013 = vmatprep.subr.mxu0 0.0
    %2014 = vmatpush2.msra.mxu0 0.0
    %2015 = vmatprep.mubr.f32.mxu0 0.0
    %2016 = vmatmul.mubr.f32.gmra.mxu0 %v1928
    %v2017 = vpop.f32.mrf.mxu0
    %v2018 = vadd.f32 0.0, %v2017
    %v2019 = vpop.f32.mrf.mxu0
    %2020 = vmatprep.mubr.f32.mxu0 0.0
    %2021 = vmatmul.mubr.f32.gmra.mxu0 %v1931
    %v2022 = vpop.f32.mrf.mxu0
    %v2023 = vadd.f32 0.0, %v2022
    %v2024 = vpop.f32.mrf.mxu0
    %2025 = vmatprep.mubr.f32.mxu0 0.0
    %2026 = vmatmul.mubr.f32.gmra.mxu0 %v1934
    %v2027 = vpop.f32.mrf.mxu0
    %v2028 = vadd.f32 0.0, %v2027
    %v2029 = vpop.f32.mrf.mxu0
    %2030 = vmatprep.mubr.f32.mxu0 0.0
    %2031 = vmatmul.mubr.f32.gmra.mxu0 %v1937
    %v2032 = vpop.f32.mrf.mxu0
    %v2033 = vadd.f32 0.0, %v2032
    %v2034 = vpop.f32.mrf.mxu0
    %2035 = vmatprep.mubr.f32.mxu0 0.0
    %2036 = vmatmul.mubr.f32.gmra.mxu0 %v1940
    %v2037 = vpop.f32.mrf.mxu0
    %v2038 = vadd.f32 0.0, %v2037
    %v2039 = vpop.f32.mrf.mxu0
    %2040 = vmatprep.mubr.f32.mxu0 0.0
    %2041 = vmatmul.mubr.f32.gmra.mxu0 %v1943
    %v2042 = vpop.f32.mrf.mxu0
    %v2043 = vadd.f32 0.0, %v2042
    %v2044 = vpop.f32.mrf.mxu0
    %2045 = vmatprep.mubr.f32.mxu0 0.0
    %2046 = vmatmul.mubr.f32.gmra.mxu0 %v1946
    %v2047 = vpop.f32.mrf.mxu0
    %v2048 = vadd.f32 0.0, %v2047
    %v2049 = vpop.f32.mrf.mxu0
    %2050 = vmatprep.mubr.f32.mxu0 0.0
    %2051 = vmatmul.mubr.f32.gmra.mxu0 %v1949
    %v2052 = vpop.f32.mrf.mxu0
    %v2053 = vadd.f32 0.0, %v2052
    %v2054 = vpop.f32.mrf.mxu0
    %2055 = vdwg.mxu0
    %v2056 = vmul.f32 %v2018, %v250
    %v2057 = vmul.f32 %v2023, %v251
    %v2058 = vmul.f32 %v2028, %v252
    %v2059 = vmul.f32 %v2033, %v253
    %v2060 = vmul.f32 %v2038, %v254
    %v2061 = vmul.f32 %v2043, %v255
    %v2062 = vmul.f32 %v2048, %v256
    %v2063 = vmul.f32 %v2053, %v257
    %v2065 = vsel %vm272, %v2056, 0
    %v2068 = vsel %vm272, %v2057, 0
    %v2071 = vsel %vm272, %v2058, 0
    %v2074 = vsel %vm272, %v2059, 0
    %v2077 = vsel %vm272, %v2060, 0
    %v2080 = vsel %vm272, %v2061, 0
    %v2083 = vsel %vm272, %v2062, 0
    %v2086 = vsel %vm272, %v2063, 0
    %2088 = vmatprep.subr.mxu0 0.0
    %2089 = vmatpush1.msra.mxu0 0.0
    %2090 = vmatprep.subr.mxu0 0.0
    %2091 = vmatpush1.msra.mxu0 0.0
    %2092 = vmatprep.subr.mxu0 0.0
    %2093 = vmatpush1.msra.mxu0 0.0
    %2094 = vmatprep.subr.mxu0 0.0
    %2095 = vmatpush1.msra.mxu0 0.0
    %2096 = vmatprep.subr.mxu0 0.0
    %2097 = vmatpush1.msra.mxu0 0.0
    %2098 = vmatprep.subr.mxu0 0.0
    %2099 = vmatpush1.msra.mxu0 0.0
    %2100 = vmatprep.subr.mxu0 0.0
    %2101 = vmatpush1.msra.mxu0 0.0
    %2102 = vmatprep.subr.mxu0 0.0
    %2103 = vmatpush1.msra.mxu0 0.0
    %2104 = vmatprep.subr.mxu0 0.0
    %2105 = vmatpush1.msra.mxu0 0.0
    %2106 = vmatprep.subr.mxu0 0.0
    %2107 = vmatpush1.msra.mxu0 0.0
    %2108 = vmatprep.subr.mxu0 0.0
    %2109 = vmatpush1.msra.mxu0 0.0
    %2110 = vmatprep.subr.mxu0 0.0
    %2111 = vmatpush1.msra.mxu0 0.0
    %2112 = vmatprep.subr.mxu0 0.0
    %2113 = vmatpush1.msra.mxu0 %v222
    %2114 = vmatprep.subr.mxu0 0.0
    %2115 = vmatpush1.msra.mxu0 %v221
    %2116 = vmatprep.subr.mxu0 0.0
    %2117 = vmatpush1.msra.mxu0 %v220
    %2118 = vmatprep.subr.mxu0 0.0
    %2119 = vmatpush1.msra.mxu0 %v219
    %2120 = vmatprep.subr.mxu0 0.0
    %2121 = vmatpush2.msra.mxu0 0.0
    %2122 = vmatprep.subr.mxu0 0.0
    %2123 = vmatpush2.msra.mxu0 0.0
    %2124 = vmatprep.subr.mxu0 0.0
    %2125 = vmatpush2.msra.mxu0 0.0
    %2126 = vmatprep.subr.mxu0 0.0
    %2127 = vmatpush2.msra.mxu0 0.0
    %2128 = vmatprep.subr.mxu0 0.0
    %2129 = vmatpush2.msra.mxu0 0.0
    %2130 = vmatprep.subr.mxu0 0.0
    %2131 = vmatpush2.msra.mxu0 0.0
    %2132 = vmatprep.subr.mxu0 0.0
    %2133 = vmatpush2.msra.mxu0 0.0
    %2134 = vmatprep.subr.mxu0 0.0
    %2135 = vmatpush2.msra.mxu0 0.0
    %2136 = vmatprep.subr.mxu0 0.0
    %2137 = vmatpush2.msra.mxu0 0.0
    %2138 = vmatprep.subr.mxu0 0.0
    %2139 = vmatpush2.msra.mxu0 0.0
    %2140 = vmatprep.subr.mxu0 0.0
    %2141 = vmatpush2.msra.mxu0 0.0
    %2142 = vmatprep.subr.mxu0 0.0
    %2143 = vmatpush2.msra.mxu0 0.0
    %2144 = vmatprep.subr.mxu0 0.0
    %2145 = vmatpush2.msra.mxu0 0.0
    %2146 = vmatprep.subr.mxu0 0.0
    %2147 = vmatpush2.msra.mxu0 0.0
    %2148 = vmatprep.subr.mxu0 0.0
    %2149 = vmatpush2.msra.mxu0 0.0
    %2150 = vmatprep.subr.mxu0 0.0
    %2151 = vmatpush2.msra.mxu0 0.0
    %2152 = vmatprep.mubr.f32.mxu0 0.0
    %2153 = vmatmul.mubr.f32.gmra.mxu0 %v2065
    %v2154 = vpop.f32.mrf.mxu0
    %v2155 = vadd.f32 0.0, %v2154
    %v2156 = vpop.f32.mrf.mxu0
    %2157 = vmatprep.mubr.f32.mxu0 0.0
    %2158 = vmatmul.mubr.f32.gmra.mxu0 %v2068
    %v2159 = vpop.f32.mrf.mxu0
    %v2160 = vadd.f32 0.0, %v2159
    %v2161 = vpop.f32.mrf.mxu0
    %2162 = vmatprep.mubr.f32.mxu0 0.0
    %2163 = vmatmul.mubr.f32.gmra.mxu0 %v2071
    %v2164 = vpop.f32.mrf.mxu0
    %v2165 = vadd.f32 0.0, %v2164
    %v2166 = vpop.f32.mrf.mxu0
    %2167 = vmatprep.mubr.f32.mxu0 0.0
    %2168 = vmatmul.mubr.f32.gmra.mxu0 %v2074
    %v2169 = vpop.f32.mrf.mxu0
    %v2170 = vadd.f32 0.0, %v2169
    %v2171 = vpop.f32.mrf.mxu0
    %2172 = vmatprep.mubr.f32.mxu0 0.0
    %2173 = vmatmul.mubr.f32.gmra.mxu0 %v2077
    %v2174 = vpop.f32.mrf.mxu0
    %v2175 = vadd.f32 0.0, %v2174
    %v2176 = vpop.f32.mrf.mxu0
    %2177 = vmatprep.mubr.f32.mxu0 0.0
    %2178 = vmatmul.mubr.f32.gmra.mxu0 %v2080
    %v2179 = vpop.f32.mrf.mxu0
    %v2180 = vadd.f32 0.0, %v2179
    %v2181 = vpop.f32.mrf.mxu0
    %2182 = vmatprep.mubr.f32.mxu0 0.0
    %2183 = vmatmul.mubr.f32.gmra.mxu0 %v2083
    %v2184 = vpop.f32.mrf.mxu0
    %v2185 = vadd.f32 0.0, %v2184
    %v2186 = vpop.f32.mrf.mxu0
    %2187 = vmatprep.mubr.f32.mxu0 0.0
    %2188 = vmatmul.mubr.f32.gmra.mxu0 %v2086
    %v2189 = vpop.f32.mrf.mxu0
    %v2190 = vadd.f32 0.0, %v2189
    %v2191 = vpop.f32.mrf.mxu0
    %2192 = vdwg.mxu0
    %2193 = vmatprep.subr.mxu0 0.0
    %2194 = vmatpush1.msra.mxu0 0.0
    %2195 = vmatprep.subr.mxu0 0.0
    %2196 = vmatpush1.msra.mxu0 0.0
    %2197 = vmatprep.subr.mxu0 0.0
    %2198 = vmatpush1.msra.mxu0 0.0
    %2199 = vmatprep.subr.mxu0 0.0
    %2200 = vmatpush1.msra.mxu0 0.0
    %2201 = vmatprep.subr.mxu0 0.0
    %2202 = vmatpush1.msra.mxu0 0.0
    %2203 = vmatprep.subr.mxu0 0.0
    %2204 = vmatpush1.msra.mxu0 0.0
    %2205 = vmatprep.subr.mxu0 0.0
    %2206 = vmatpush1.msra.mxu0 0.0
    %2207 = vmatprep.subr.mxu0 0.0
    %2208 = vmatpush1.msra.mxu0 0.0
    %2209 = vmatprep.subr.mxu0 0.0
    %2210 = vmatpush1.msra.mxu0 %v2190
    %2211 = vmatprep.subr.mxu0 0.0
    %2212 = vmatpush1.msra.mxu0 %v2185
    %2213 = vmatprep.subr.mxu0 0.0
    %2214 = vmatpush1.msra.mxu0 %v2180
    %2215 = vmatprep.subr.mxu0 0.0
    %2216 = vmatpush1.msra.mxu0 %v2175
    %2217 = vmatprep.subr.mxu0 0.0
    %2218 = vmatpush1.msra.mxu0 %v2170
    %2219 = vmatprep.subr.mxu0 0.0
    %2220 = vmatpush1.msra.mxu0 %v2165
    %2221 = vmatprep.subr.mxu0 0.0
    %2222 = vmatpush1.msra.mxu0 %v2160
    %2223 = vmatprep.subr.mxu0 0.0
    %2224 = vmatpush1.msra.mxu0 %v2155
    %2225 = vmatprep.subr.mxu0 0.0
    %2226 = vmatpush2.msra.mxu0 0.0
    %2227 = vmatprep.subr.mxu0 0.0
    %2228 = vmatpush2.msra.mxu0 0.0
    %2229 = vmatprep.subr.mxu0 0.0
    %2230 = vmatpush2.msra.mxu0 0.0
    %2231 = vmatprep.subr.mxu0 0.0
    %2232 = vmatpush2.msra.mxu0 0.0
    %2233 = vmatprep.subr.mxu0 0.0
    %2234 = vmatpush2.msra.mxu0 0.0
    %2235 = vmatprep.subr.mxu0 0.0
    %2236 = vmatpush2.msra.mxu0 0.0
    %2237 = vmatprep.subr.mxu0 0.0
    %2238 = vmatpush2.msra.mxu0 0.0
    %2239 = vmatprep.subr.mxu0 0.0
    %2240 = vmatpush2.msra.mxu0 0.0
    %2241 = vmatprep.subr.mxu0 0.0
    %2242 = vmatpush2.msra.mxu0 0.0
    %2243 = vmatprep.subr.mxu0 0.0
    %2244 = vmatpush2.msra.mxu0 0.0
    %2245 = vmatprep.subr.mxu0 0.0
    %2246 = vmatpush2.msra.mxu0 0.0
    %2247 = vmatprep.subr.mxu0 0.0
    %2248 = vmatpush2.msra.mxu0 0.0
    %2249 = vmatprep.subr.mxu0 0.0
    %2250 = vmatpush2.msra.mxu0 0.0
    %2251 = vmatprep.subr.mxu0 0.0
    %2252 = vmatpush2.msra.mxu0 0.0
    %2253 = vmatprep.subr.mxu0 0.0
    %2254 = vmatpush2.msra.mxu0 0.0
    %2255 = vmatprep.subr.mxu0 0.0
    %2256 = vmatpush2.msra.mxu0 0.0
    %2257 = vmatprep.mubr.f32.mxu0 0.0
    %2258 = vmatmul.mubr.f32.gmra.mxu0 %v1181
    %v2259 = vpop.f32.mrf.mxu0
    %v2260 = vadd.f32 %v1177, %v2259
    %v2261 = vpop.f32.mrf.mxu0
    %2262 = vmatprep.mubr.f32.mxu0 0.0
    %2263 = vmatmul.mubr.f32.gmra.mxu0 %v1184
    %v2264 = vpop.f32.mrf.mxu0
    %v2265 = vadd.f32 %v1177, %v2264
    %v2266 = vpop.f32.mrf.mxu0
    %2267 = vdwg.mxu0
    %v2268 = vmax.f32 %v2260, 0.0
    %v2269 = vmax.f32 %v2265, 0.0
    %v2270 = vadd.f32 %v2268, %v264
    %v2271 = vadd.f32 %v2269, %v265
    %v2272 = vsel %vm272, %v2270, 0.0
    %2273 = vadd.xlane.f32.xlu0 %v2272
    %v2274 = vpop.xlane.xlu0 %2273
    %v2275 = vsel %vm272, %v2271, 0.0
    %2276 = vadd.xlane.f32.xlu0 %v2275
    %v2277 = vpop.xlane.xlu0 %2276
    %v2278 = vmul.f32 %v2274, %v1269
    %v2279 = vmul.f32 %v2277, %v1269
    %v2280 = vsub.f32 %v2270, %v2278
    %v2281 = vsub.f32 %v2271, %v2279
    %v2282 = vmul.f32 %v2280, %v2280
    %v2283 = vmul.f32 %v2281, %v2281
    %v2284 = vsel %vm272, %v2282, 0.0
    %2285 = vadd.xlane.f32.xlu0 %v2284
    %v2286 = vpop.xlane.xlu0 %2285
    %v2287 = vsel %vm272, %v2283, 0.0
    %2288 = vadd.xlane.f32.xlu0 %v2287
    %v2289 = vpop.xlane.xlu0 %2288
    %v2290 = vmul.f32 %v2286, %v1269
    %v2291 = vmul.f32 %v2289, %v1269
    %v2292 = vadd.f32 %v2290, 1e-05
    %v2293 = vadd.f32 %v2291, 1e-05
    %v2294 = vrsqrt.pop %v2292
    %v2295 = vrsqrt.pop %v2293
    %v2296 = vmul.f32 %v2280, %v2294
    %v2297 = vmul.f32 %v2281, %v2295
    %v2298 = vmul.f32 %v2296, %v1294
    %v2299 = vmul.f32 %v2297, %v1294
    %v2300 = vadd.f32 %v2298, %v1302
    %v2301 = vadd.f32 %v2299, %v1302
    %v2303 = vsel %vm272, %v2300, 0
    %v2306 = vsel %vm272, %v2301, 0
    %2308 = vmatprep.subr.mxu0 0.0
    %2309 = vmatpush1.msra.mxu0 0.0
    %2310 = vmatprep.subr.mxu0 0.0
    %2311 = vmatpush1.msra.mxu0 0.0
    %2312 = vmatprep.subr.mxu0 0.0
    %2313 = vmatpush1.msra.mxu0 0.0
    %2314 = vmatprep.subr.mxu0 0.0
    %2315 = vmatpush1.msra.mxu0 0.0
    %2316 = vmatprep.subr.mxu0 0.0
    %2317 = vmatpush1.msra.mxu0 0.0
    %2318 = vmatprep.subr.mxu0 0.0
    %2319 = vmatpush1.msra.mxu0 0.0
    %2320 = vmatprep.subr.mxu0 0.0
    %2321 = vmatpush1.msra.mxu0 0.0
    %2322 = vmatprep.subr.mxu0 0.0
    %2323 = vmatpush1.msra.mxu0 0.0
    %2324 = vmatprep.subr.mxu0 0.0
    %2325 = vmatpush1.msra.mxu0 0.0
    %2326 = vmatprep.subr.mxu0 0.0
    %2327 = vmatpush1.msra.mxu0 0.0
    %2328 = vmatprep.subr.mxu0 0.0
    %2329 = vmatpush1.msra.mxu0 0.0
    %2330 = vmatprep.subr.mxu0 0.0
    %2331 = vmatpush1.msra.mxu0 0.0
    %2332 = vmatprep.subr.mxu0 0.0
    %2333 = vmatpush1.msra.mxu0 %v207
    %2334 = vmatprep.subr.mxu0 0.0
    %2335 = vmatpush1.msra.mxu0 %v206
    %2336 = vmatprep.subr.mxu0 0.0
    %2337 = vmatpush1.msra.mxu0 %v205
    %2338 = vmatprep.subr.mxu0 0.0
    %2339 = vmatpush1.msra.mxu0 %v204
    %2340 = vmatprep.subr.mxu0 0.0
    %2341 = vmatpush2.msra.mxu0 0.0
    %2342 = vmatprep.subr.mxu0 0.0
    %2343 = vmatpush2.msra.mxu0 0.0
    %2344 = vmatprep.subr.mxu0 0.0
    %2345 = vmatpush2.msra.mxu0 0.0
    %2346 = vmatprep.subr.mxu0 0.0
    %2347 = vmatpush2.msra.mxu0 0.0
    %2348 = vmatprep.subr.mxu0 0.0
    %2349 = vmatpush2.msra.mxu0 0.0
    %2350 = vmatprep.subr.mxu0 0.0
    %2351 = vmatpush2.msra.mxu0 0.0
    %2352 = vmatprep.subr.mxu0 0.0
    %2353 = vmatpush2.msra.mxu0 0.0
    %2354 = vmatprep.subr.mxu0 0.0
    %2355 = vmatpush2.msra.mxu0 0.0
    %2356 = vmatprep.subr.mxu0 0.0
    %2357 = vmatpush2.msra.mxu0 0.0
    %2358 = vmatprep.subr.mxu0 0.0
    %2359 = vmatpush2.msra.mxu0 0.0
    %2360 = vmatprep.subr.mxu0 0.0
    %2361 = vmatpush2.msra.mxu0 0.0
    %2362 = vmatprep.subr.mxu0 0.0
    %2363 = vmatpush2.msra.mxu0 0.0
    %2364 = vmatprep.subr.mxu0 0.0
    %2365 = vmatpush2.msra.mxu0 0.0
    %2366 = vmatprep.subr.mxu0 0.0
    %2367 = vmatpush2.msra.mxu0 0.0
    %2368 = vmatprep.subr.mxu0 0.0
    %2369 = vmatpush2.msra.mxu0 0.0
    %2370 = vmatprep.subr.mxu0 0.0
    %2371 = vmatpush2.msra.mxu0 0.0
    %2372 = vmatprep.mubr.f32.mxu0 0.0
    %2373 = vmatmul.mubr.f32.gmra.mxu0 %v2303
    %v2374 = vpop.f32.mrf.mxu0
    %v2375 = vadd.f32 %v270, %v2374
    %v2376 = vpop.f32.mrf.mxu0
    %2377 = vmatprep.mubr.f32.mxu0 0.0
    %2378 = vmatmul.mubr.f32.gmra.mxu0 %v2306
    %v2379 = vpop.f32.mrf.mxu0
    %v2380 = vadd.f32 %v270, %v2379
    %v2381 = vpop.f32.mrf.mxu0
    %2382 = vdwg.mxu0
    %v2383 = vmax.f32 %v2375, 0.0
    %v2384 = vmax.f32 %v2380, 0.0
    %2385 = vmatprep.subr.mxu0 0.0
    %2386 = vmatpush1.msra.mxu0 0.0
    %2387 = vmatprep.subr.mxu0 0.0
    %2388 = vmatpush1.msra.mxu0 0.0
    %2389 = vmatprep.subr.mxu0 0.0
    %2390 = vmatpush1.msra.mxu0 0.0
    %2391 = vmatprep.subr.mxu0 0.0
    %2392 = vmatpush1.msra.mxu0 0.0
    %2393 = vmatprep.subr.mxu0 0.0
    %2394 = vmatpush1.msra.mxu0 0.0
    %2395 = vmatprep.subr.mxu0 0.0
    %2396 = vmatpush1.msra.mxu0 0.0
    %2397 = vmatprep.subr.mxu0 0.0
    %2398 = vmatpush1.msra.mxu0 0.0
    %2399 = vmatprep.subr.mxu0 0.0
    %2400 = vmatpush1.msra.mxu0 0.0
    %2401 = vmatprep.subr.mxu0 0.0
    %2402 = vmatpush1.msra.mxu0 0.0
    %2403 = vmatprep.subr.mxu0 0.0
    %2404 = vmatpush1.msra.mxu0 0.0
    %2405 = vmatprep.subr.mxu0 0.0
    %2406 = vmatpush1.msra.mxu0 0.0
    %2407 = vmatprep.subr.mxu0 0.0
    %2408 = vmatpush1.msra.mxu0 0.0
    %2409 = vmatprep.subr.mxu0 0.0
    %2410 = vmatpush1.msra.mxu0 %v212
    %2411 = vmatprep.subr.mxu0 0.0
    %2412 = vmatpush1.msra.mxu0 %v211
    %2413 = vmatprep.subr.mxu0 0.0
    %2414 = vmatpush1.msra.mxu0 %v210
    %2415 = vmatprep.subr.mxu0 0.0
    %2416 = vmatpush1.msra.mxu0 %v209
    %2417 = vmatprep.subr.mxu0 0.0
    %2418 = vmatpush2.msra.mxu0 0.0
    %2419 = vmatprep.subr.mxu0 0.0
    %2420 = vmatpush2.msra.mxu0 0.0
    %2421 = vmatprep.subr.mxu0 0.0
    %2422 = vmatpush2.msra.mxu0 0.0
    %2423 = vmatprep.subr.mxu0 0.0
    %2424 = vmatpush2.msra.mxu0 0.0
    %2425 = vmatprep.subr.mxu0 0.0
    %2426 = vmatpush2.msra.mxu0 0.0
    %2427 = vmatprep.subr.mxu0 0.0
    %2428 = vmatpush2.msra.mxu0 0.0
    %2429 = vmatprep.subr.mxu0 0.0
    %2430 = vmatpush2.msra.mxu0 0.0
    %2431 = vmatprep.subr.mxu0 0.0
    %2432 = vmatpush2.msra.mxu0 0.0
    %2433 = vmatprep.subr.mxu0 0.0
    %2434 = vmatpush2.msra.mxu0 0.0
    %2435 = vmatprep.subr.mxu0 0.0
    %2436 = vmatpush2.msra.mxu0 0.0
    %2437 = vmatprep.subr.mxu0 0.0
    %2438 = vmatpush2.msra.mxu0 0.0
    %2439 = vmatprep.subr.mxu0 0.0
    %2440 = vmatpush2.msra.mxu0 0.0
    %2441 = vmatprep.subr.mxu0 0.0
    %2442 = vmatpush2.msra.mxu0 0.0
    %2443 = vmatprep.subr.mxu0 0.0
    %2444 = vmatpush2.msra.mxu0 0.0
    %2445 = vmatprep.subr.mxu0 0.0
    %2446 = vmatpush2.msra.mxu0 0.0
    %2447 = vmatprep.subr.mxu0 0.0
    %2448 = vmatpush2.msra.mxu0 0.0
    %2449 = vmatprep.mubr.f32.mxu0 0.0
    %2450 = vmatmul.mubr.f32.gmra.mxu0 %v2303
    %v2451 = vpop.f32.mrf.mxu0
    %v2452 = vadd.f32 %v360, %v2451
    %v2453 = vpop.f32.mrf.mxu0
    %2454 = vmatprep.mubr.f32.mxu0 0.0
    %2455 = vmatmul.mubr.f32.gmra.mxu0 %v2306
    %v2456 = vpop.f32.mrf.mxu0
    %v2457 = vadd.f32 %v360, %v2456
    %v2458 = vpop.f32.mrf.mxu0
    %2459 = vdwg.mxu0
    %v2460 = vmax.f32 %v2452, 0.0
    %v2461 = vmax.f32 %v2457, 0.0
    %2462 = vmatprep.subr.mxu0 0.0
    %2463 = vmatpush1.msra.mxu0 0.0
    %2464 = vmatprep.subr.mxu0 0.0
    %2465 = vmatpush1.msra.mxu0 0.0
    %2466 = vmatprep.subr.mxu0 0.0
    %2467 = vmatpush1.msra.mxu0 0.0
    %2468 = vmatprep.subr.mxu0 0.0
    %2469 = vmatpush1.msra.mxu0 0.0
    %2470 = vmatprep.subr.mxu0 0.0
    %2471 = vmatpush1.msra.mxu0 0.0
    %2472 = vmatprep.subr.mxu0 0.0
    %2473 = vmatpush1.msra.mxu0 0.0
    %2474 = vmatprep.subr.mxu0 0.0
    %2475 = vmatpush1.msra.mxu0 0.0
    %2476 = vmatprep.subr.mxu0 0.0
    %2477 = vmatpush1.msra.mxu0 0.0
    %2478 = vmatprep.subr.mxu0 0.0
    %2479 = vmatpush1.msra.mxu0 0.0
    %2480 = vmatprep.subr.mxu0 0.0
    %2481 = vmatpush1.msra.mxu0 0.0
    %2482 = vmatprep.subr.mxu0 0.0
    %2483 = vmatpush1.msra.mxu0 0.0
    %2484 = vmatprep.subr.mxu0 0.0
    %2485 = vmatpush1.msra.mxu0 0.0
    %2486 = vmatprep.subr.mxu0 0.0
    %2487 = vmatpush1.msra.mxu0 %v217
    %2488 = vmatprep.subr.mxu0 0.0
    %2489 = vmatpush1.msra.mxu0 %v216
    %2490 = vmatprep.subr.mxu0 0.0
    %2491 = vmatpush1.msra.mxu0 %v215
    %2492 = vmatprep.subr.mxu0 0.0
    %2493 = vmatpush1.msra.mxu0 %v214
    %2494 = vmatprep.subr.mxu0 0.0
    %2495 = vmatpush2.msra.mxu0 0.0
    %2496 = vmatprep.subr.mxu0 0.0
    %2497 = vmatpush2.msra.mxu0 0.0
    %2498 = vmatprep.subr.mxu0 0.0
    %2499 = vmatpush2.msra.mxu0 0.0
    %2500 = vmatprep.subr.mxu0 0.0
    %2501 = vmatpush2.msra.mxu0 0.0
    %2502 = vmatprep.subr.mxu0 0.0
    %2503 = vmatpush2.msra.mxu0 0.0
    %2504 = vmatprep.subr.mxu0 0.0
    %2505 = vmatpush2.msra.mxu0 0.0
    %2506 = vmatprep.subr.mxu0 0.0
    %2507 = vmatpush2.msra.mxu0 0.0
    %2508 = vmatprep.subr.mxu0 0.0
    %2509 = vmatpush2.msra.mxu0 0.0
    %2510 = vmatprep.subr.mxu0 0.0
    %2511 = vmatpush2.msra.mxu0 0.0
    %2512 = vmatprep.subr.mxu0 0.0
    %2513 = vmatpush2.msra.mxu0 0.0
    %2514 = vmatprep.subr.mxu0 0.0
    %2515 = vmatpush2.msra.mxu0 0.0
    %2516 = vmatprep.subr.mxu0 0.0
    %2517 = vmatpush2.msra.mxu0 0.0
    %2518 = vmatprep.subr.mxu0 0.0
    %2519 = vmatpush2.msra.mxu0 0.0
    %2520 = vmatprep.subr.mxu0 0.0
    %2521 = vmatpush2.msra.mxu0 0.0
    %2522 = vmatprep.subr.mxu0 0.0
    %2523 = vmatpush2.msra.mxu0 0.0
    %2524 = vmatprep.subr.mxu0 0.0
    %2525 = vmatpush2.msra.mxu0 0.0
    %2526 = vmatprep.mubr.f32.mxu0 0.0
    %2527 = vmatmul.mubr.f32.gmra.mxu0 %v2303
    %v2528 = vpop.f32.mrf.mxu0
    %v2529 = vadd.f32 %v443, %v2528
    %v2530 = vpop.f32.mrf.mxu0
    %2531 = vmatprep.mubr.f32.mxu0 0.0
    %2532 = vmatmul.mubr.f32.gmra.mxu0 %v2306
    %v2533 = vpop.f32.mrf.mxu0
    %v2534 = vadd.f32 %v443, %v2533
    %v2535 = vpop.f32.mrf.mxu0
    %2536 = vdwg.mxu0
    %v2537 = vmax.f32 %v2529, 0.0
    %v2538 = vmax.f32 %v2534, 0.0
    %v2539 = vmul.f32 %v2383, %v226
    %v2540 = vmul.f32 %v2384, %v227
    %v2541 = vmul.f32 %v2383, %v228
    %v2542 = vmul.f32 %v2384, %v229
    %v2543 = vmul.f32 %v2383, %v230
    %v2544 = vmul.f32 %v2384, %v231
    %v2545 = vmul.f32 %v2383, %v232
    %v2546 = vmul.f32 %v2384, %v233
    %v2548 = vsel %vm272, %v2539, 0
    %v2551 = vsel %vm272, %v2540, 0
    %v2554 = vsel %vm272, %v2541, 0
    %v2557 = vsel %vm272, %v2542, 0
    %v2560 = vsel %vm272, %v2543, 0
    %v2563 = vsel %vm272, %v2544, 0
    %v2566 = vsel %vm272, %v2545, 0
    %v2569 = vsel %vm272, %v2546, 0
    %v2572 = vsel %vm272, %v2460, 0
    %v2575 = vsel %vm272, %v2461, 0
    %2577 = vmatprep.subr.mxu0 0.0
    %2578 = vmatpush1.xpose.msra.mxu0 0.0
    %2579 = vmatprep.subr.mxu0 0.0
    %2580 = vmatpush1.xpose.msra.mxu0 0.0
    %2581 = vmatprep.subr.mxu0 0.0
    %2582 = vmatpush1.xpose.msra.mxu0 0.0
    %2583 = vmatprep.subr.mxu0 0.0
    %2584 = vmatpush1.xpose.msra.mxu0 0.0
    %2585 = vmatprep.subr.mxu0 0.0
    %2586 = vmatpush1.xpose.msra.mxu0 0.0
    %2587 = vmatprep.subr.mxu0 0.0
    %2588 = vmatpush1.xpose.msra.mxu0 0.0
    %2589 = vmatprep.subr.mxu0 0.0
    %2590 = vmatpush1.xpose.msra.mxu0 0.0
    %2591 = vmatprep.subr.mxu0 0.0
    %2592 = vmatpush1.xpose.msra.mxu0 0.0
    %2593 = vmatprep.subr.mxu0 0.0
    %2594 = vmatpush1.xpose.msra.mxu0 0.0
    %2595 = vmatprep.subr.mxu0 0.0
    %2596 = vmatpush1.xpose.msra.mxu0 0.0
    %2597 = vmatprep.subr.mxu0 0.0
    %2598 = vmatpush1.xpose.msra.mxu0 0.0
    %2599 = vmatprep.subr.mxu0 0.0
    %2600 = vmatpush1.xpose.msra.mxu0 0.0
    %2601 = vmatprep.subr.mxu0 0.0
    %2602 = vmatpush1.xpose.msra.mxu0 0.0
    %2603 = vmatprep.subr.mxu0 0.0
    %2604 = vmatpush1.xpose.msra.mxu0 0.0
    %2605 = vmatprep.subr.mxu0 0.0
    %2606 = vmatpush1.xpose.msra.mxu0 %v2575
    %2607 = vmatprep.subr.mxu0 0.0
    %2608 = vmatpush1.xpose.msra.mxu0 %v2572
    %2609 = vmatprep.subr.mxu0 0.0
    %2610 = vmatpush2.xpose.msra.mxu0 0.0
    %2611 = vmatprep.subr.mxu0 0.0
    %2612 = vmatpush2.xpose.msra.mxu0 0.0
    %2613 = vmatprep.subr.mxu0 0.0
    %2614 = vmatpush2.xpose.msra.mxu0 0.0
    %2615 = vmatprep.subr.mxu0 0.0
    %2616 = vmatpush2.xpose.msra.mxu0 0.0
    %2617 = vmatprep.subr.mxu0 0.0
    %2618 = vmatpush2.xpose.msra.mxu0 0.0
    %2619 = vmatprep.subr.mxu0 0.0
    %2620 = vmatpush2.xpose.msra.mxu0 0.0
    %2621 = vmatprep.subr.mxu0 0.0
    %2622 = vmatpush2.xpose.msra.mxu0 0.0
    %2623 = vmatprep.subr.mxu0 0.0
    %2624 = vmatpush2.xpose.msra.mxu0 0.0
    %2625 = vmatprep.subr.mxu0 0.0
    %2626 = vmatpush2.xpose.msra.mxu0 0.0
    %2627 = vmatprep.subr.mxu0 0.0
    %2628 = vmatpush2.xpose.msra.mxu0 0.0
    %2629 = vmatprep.subr.mxu0 0.0
    %2630 = vmatpush2.xpose.msra.mxu0 0.0
    %2631 = vmatprep.subr.mxu0 0.0
    %2632 = vmatpush2.xpose.msra.mxu0 0.0
    %2633 = vmatprep.subr.mxu0 0.0
    %2634 = vmatpush2.xpose.msra.mxu0 0.0
    %2635 = vmatprep.subr.mxu0 0.0
    %2636 = vmatpush2.xpose.msra.mxu0 0.0
    %2637 = vmatprep.subr.mxu0 0.0
    %2638 = vmatpush2.xpose.msra.mxu0 0.0
    %2639 = vmatprep.subr.mxu0 0.0
    %2640 = vmatpush2.xpose.msra.mxu0 0.0
    %2641 = vmatprep.mubr.f32.mxu0 0.0
    %2642 = vmatmul.mubr.f32.gmra.mxu0 %v2548
    %v2643 = vpop.f32.mrf.mxu0
    %v2644 = vadd.f32 0.0, %v2643
    %v2645 = vpop.f32.mrf.mxu0
    %2646 = vmatprep.mubr.f32.mxu0 0.0
    %2647 = vmatmul.mubr.f32.gmra.mxu0 %v2551
    %v2648 = vpop.f32.mrf.mxu0
    %v2649 = vadd.f32 0.0, %v2648
    %v2650 = vpop.f32.mrf.mxu0
    %2651 = vmatprep.mubr.f32.mxu0 0.0
    %2652 = vmatmul.mubr.f32.gmra.mxu0 %v2554
    %v2653 = vpop.f32.mrf.mxu0
    %v2654 = vadd.f32 0.0, %v2653
    %v2655 = vpop.f32.mrf.mxu0
    %2656 = vmatprep.mubr.f32.mxu0 0.0
    %2657 = vmatmul.mubr.f32.gmra.mxu0 %v2557
    %v2658 = vpop.f32.mrf.mxu0
    %v2659 = vadd.f32 0.0, %v2658
    %v2660 = vpop.f32.mrf.mxu0
    %2661 = vmatprep.mubr.f32.mxu0 0.0
    %2662 = vmatmul.mubr.f32.gmra.mxu0 %v2560
    %v2663 = vpop.f32.mrf.mxu0
    %v2664 = vadd.f32 0.0, %v2663
    %v2665 = vpop.f32.mrf.mxu0
    %2666 = vmatprep.mubr.f32.mxu0 0.0
    %2667 = vmatmul.mubr.f32.gmra.mxu0 %v2563
    %v2668 = vpop.f32.mrf.mxu0
    %v2669 = vadd.f32 0.0, %v2668
    %v2670 = vpop.f32.mrf.mxu0
    %2671 = vmatprep.mubr.f32.mxu0 0.0
    %2672 = vmatmul.mubr.f32.gmra.mxu0 %v2566
    %v2673 = vpop.f32.mrf.mxu0
    %v2674 = vadd.f32 0.0, %v2673
    %v2675 = vpop.f32.mrf.mxu0
    %2676 = vmatprep.mubr.f32.mxu0 0.0
    %2677 = vmatmul.mubr.f32.gmra.mxu0 %v2569
    %v2678 = vpop.f32.mrf.mxu0
    %v2679 = vadd.f32 0.0, %v2678
    %v2680 = vpop.f32.mrf.mxu0
    %2681 = vdwg.mxu0
    %v2682 = vmul.f32 %v2644, 0.35355338
    %v2683 = vmul.f32 %v2649, 0.35355338
    %v2684 = vmul.f32 %v2654, 0.35355338
    %v2685 = vmul.f32 %v2659, 0.35355338
    %v2686 = vmul.f32 %v2664, 0.35355338
    %v2687 = vmul.f32 %v2669, 0.35355338
    %v2688 = vmul.f32 %v2674, 0.35355338
    %v2689 = vmul.f32 %v2679, 0.35355338
    %v2690 = vadd.f32 %v2682, %v234
    %v2691 = vadd.f32 %v2683, %v235
    %v2692 = vadd.f32 %v2684, %v236
    %v2693 = vadd.f32 %v2685, %v237
    %v2694 = vadd.f32 %v2686, %v238
    %v2695 = vadd.f32 %v2687, %v239
    %v2696 = vadd.f32 %v2688, %v240
    %v2697 = vadd.f32 %v2689, %v241
    %v2698 = vsel %vm681, %v2690, -inf
    %2699 = vmax.xlane.f32.xlu0 %v2698
    %v2700 = vpop.xlane.xlu0 %2699
    %v2701 = vsel %vm681, %v2691, -inf
    %2702 = vmax.xlane.f32.xlu0 %v2701
    %v2703 = vpop.xlane.xlu0 %2702
    %v2704 = vsel %vm681, %v2692, -inf
    %2705 = vmax.xlane.f32.xlu0 %v2704
    %v2706 = vpop.xlane.xlu0 %2705
    %v2707 = vsel %vm681, %v2693, -inf
    %2708 = vmax.xlane.f32.xlu0 %v2707
    %v2709 = vpop.xlane.xlu0 %2708
    %v2710 = vsel %vm681, %v2694, -inf
    %2711 = vmax.xlane.f32.xlu0 %v2710
    %v2712 = vpop.xlane.xlu0 %2711
    %v2713 = vsel %vm681, %v2695, -inf
    %2714 = vmax.xlane.f32.xlu0 %v2713
    %v2715 = vpop.xlane.xlu0 %2714
    %v2716 = vsel %vm681, %v2696, -inf
    %2717 = vmax.xlane.f32.xlu0 %v2716
    %v2718 = vpop.xlane.xlu0 %2717
    %v2719 = vsel %vm681, %v2697, -inf
    %2720 = vmax.xlane.f32.xlu0 %v2719
    %v2721 = vpop.xlane.xlu0 %2720
    %v2722 = vsub.f32 %v2690, %v2700
    %v2723 = vsub.f32 %v2691, %v2703
    %v2724 = vsub.f32 %v2692, %v2706
    %v2725 = vsub.f32 %v2693, %v2709
    %v2726 = vsub.f32 %v2694, %v2712
    %v2727 = vsub.f32 %v2695, %v2715
    %v2728 = vsub.f32 %v2696, %v2718
    %v2729 = vsub.f32 %v2697, %v2721
    %v2730 = vmul.f32 %v2722, 1.442695
    %v2731 = vpow.pop %v2730
    %v2732 = vmul.f32 %v2723, 1.442695
    %v2733 = vpow.pop %v2732
    %v2734 = vmul.f32 %v2724, 1.442695
    %v2735 = vpow.pop %v2734
    %v2736 = vmul.f32 %v2725, 1.442695
    %v2737 = vpow.pop %v2736
    %v2738 = vmul.f32 %v2726, 1.442695
    %v2739 = vpow.pop %v2738
    %v2740 = vmul.f32 %v2727, 1.442695
    %v2741 = vpow.pop %v2740
    %v2742 = vmul.f32 %v2728, 1.442695
    %v2743 = vpow.pop %v2742
    %v2744 = vmul.f32 %v2729, 1.442695
    %v2745 = vpow.pop %v2744
    %v2746 = vsel %vm681, %v2731, 0.0
    %2747 = vadd.xlane.f32.xlu0 %v2746
    %v2748 = vpop.xlane.xlu0 %2747
    %v2749 = vsel %vm681, %v2733, 0.0
    %2750 = vadd.xlane.f32.xlu0 %v2749
    %v2751 = vpop.xlane.xlu0 %2750
    %v2752 = vsel %vm681, %v2735, 0.0
    %2753 = vadd.xlane.f32.xlu0 %v2752
    %v2754 = vpop.xlane.xlu0 %2753
    %v2755 = vsel %vm681, %v2737, 0.0
    %2756 = vadd.xlane.f32.xlu0 %v2755
    %v2757 = vpop.xlane.xlu0 %2756
    %v2758 = vsel %vm681, %v2739, 0.0
    %2759 = vadd.xlane.f32.xlu0 %v2758
    %v2760 = vpop.xlane.xlu0 %2759
    %v2761 = vsel %vm681, %v2741, 0.0
    %2762 = vadd.xlane.f32.xlu0 %v2761
    %v2763 = vpop.xlane.xlu0 %2762
    %v2764 = vsel %vm681, %v2743, 0.0
    %2765 = vadd.xlane.f32.xlu0 %v2764
    %v2766 = vpop.xlane.xlu0 %2765
    %v2767 = vsel %vm681, %v2745, 0.0
    %2768 = vadd.xlane.f32.xlu0 %v2767
    %v2769 = vpop.xlane.xlu0 %2768
    %v2770 = vrcp.pop %v2748
    %v2771 = vrcp.pop %v2751
    %v2772 = vrcp.pop %v2754
    %v2773 = vrcp.pop %v2757
    %v2774 = vrcp.pop %v2760
    %v2775 = vrcp.pop %v2763
    %v2776 = vrcp.pop %v2766
    %v2777 = vrcp.pop %v2769
    %v2778 = vmul.f32 %v2731, %v2770
    %v2779 = vmul.f32 %v2733, %v2771
    %v2780 = vmul.f32 %v2735, %v2772
    %v2781 = vmul.f32 %v2737, %v2773
    %v2782 = vmul.f32 %v2739, %v2774
    %v2783 = vmul.f32 %v2741, %v2775
    %v2784 = vmul.f32 %v2743, %v2776
    %v2785 = vmul.f32 %v2745, %v2777
    %v2787 = vsel %vm681, %v2778, 0
    %v2790 = vsel %vm681, %v2779, 0
    %v2793 = vsel %vm681, %v2780, 0
    %v2796 = vsel %vm681, %v2781, 0
    %v2799 = vsel %vm681, %v2782, 0
    %v2802 = vsel %vm681, %v2783, 0
    %v2805 = vsel %vm681, %v2784, 0
    %v2808 = vsel %vm681, %v2785, 0
    %2810 = vmatprep.subr.mxu0 0.0
    %2811 = vmatpush1.msra.mxu0 0.0
    %2812 = vmatprep.subr.mxu0 0.0
    %2813 = vmatpush1.msra.mxu0 0.0
    %2814 = vmatprep.subr.mxu0 0.0
    %2815 = vmatpush1.msra.mxu0 0.0
    %2816 = vmatprep.subr.mxu0 0.0
    %2817 = vmatpush1.msra.mxu0 0.0
    %2818 = vmatprep.subr.mxu0 0.0
    %2819 = vmatpush1.msra.mxu0 0.0
    %2820 = vmatprep.subr.mxu0 0.0
    %2821 = vmatpush1.msra.mxu0 0.0
    %2822 = vmatprep.subr.mxu0 0.0
    %2823 = vmatpush1.msra.mxu0 0.0
    %2824 = vmatprep.subr.mxu0 0.0
    %2825 = vmatpush1.msra.mxu0 0.0
    %2826 = vmatprep.subr.mxu0 0.0
    %2827 = vmatpush1.msra.mxu0 0.0
    %2828 = vmatprep.subr.mxu0 0.0
    %2829 = vmatpush1.msra.mxu0 0.0
    %2830 = vmatprep.subr.mxu0 0.0
    %2831 = vmatpush1.msra.mxu0 0.0
    %2832 = vmatprep.subr.mxu0 0.0
    %2833 = vmatpush1.msra.mxu0 0.0
    %2834 = vmatprep.subr.mxu0 0.0
    %2835 = vmatpush1.msra.mxu0 0.0
    %2836 = vmatprep.subr.mxu0 0.0
    %2837 = vmatpush1.msra.mxu0 0.0
    %2838 = vmatprep.subr.mxu0 0.0
    %2839 = vmatpush1.msra.mxu0 %v2538
    %2840 = vmatprep.subr.mxu0 0.0
    %2841 = vmatpush1.msra.mxu0 %v2537
    %2842 = vmatprep.subr.mxu0 0.0
    %2843 = vmatpush2.msra.mxu0 0.0
    %2844 = vmatprep.subr.mxu0 0.0
    %2845 = vmatpush2.msra.mxu0 0.0
    %2846 = vmatprep.subr.mxu0 0.0
    %2847 = vmatpush2.msra.mxu0 0.0
    %2848 = vmatprep.subr.mxu0 0.0
    %2849 = vmatpush2.msra.mxu0 0.0
    %2850 = vmatprep.subr.mxu0 0.0
    %2851 = vmatpush2.msra.mxu0 0.0
    %2852 = vmatprep.subr.mxu0 0.0
    %2853 = vmatpush2.msra.mxu0 0.0
    %2854 = vmatprep.subr.mxu0 0.0
    %2855 = vmatpush2.msra.mxu0 0.0
    %2856 = vmatprep.subr.mxu0 0.0
    %2857 = vmatpush2.msra.mxu0 0.0
    %2858 = vmatprep.subr.mxu0 0.0
    %2859 = vmatpush2.msra.mxu0 0.0
    %2860 = vmatprep.subr.mxu0 0.0
    %2861 = vmatpush2.msra.mxu0 0.0
    %2862 = vmatprep.subr.mxu0 0.0
    %2863 = vmatpush2.msra.mxu0 0.0
    %2864 = vmatprep.subr.mxu0 0.0
    %2865 = vmatpush2.msra.mxu0 0.0
    %2866 = vmatprep.subr.mxu0 0.0
    %2867 = vmatpush2.msra.mxu0 0.0
    %2868 = vmatprep.subr.mxu0 0.0
    %2869 = vmatpush2.msra.mxu0 0.0
    %2870 = vmatprep.subr.mxu0 0.0
    %2871 = vmatpush2.msra.mxu0 0.0
    %2872 = vmatprep.subr.mxu0 0.0
    %2873 = vmatpush2.msra.mxu0 0.0
    %2874 = vmatprep.mubr.f32.mxu0 0.0
    %2875 = vmatmul.mubr.f32.gmra.mxu0 %v2787
    %v2876 = vpop.f32.mrf.mxu0
    %v2877 = vadd.f32 0.0, %v2876
    %v2878 = vpop.f32.mrf.mxu0
    %2879 = vmatprep.mubr.f32.mxu0 0.0
    %2880 = vmatmul.mubr.f32.gmra.mxu0 %v2790
    %v2881 = vpop.f32.mrf.mxu0
    %v2882 = vadd.f32 0.0, %v2881
    %v2883 = vpop.f32.mrf.mxu0
    %2884 = vmatprep.mubr.f32.mxu0 0.0
    %2885 = vmatmul.mubr.f32.gmra.mxu0 %v2793
    %v2886 = vpop.f32.mrf.mxu0
    %v2887 = vadd.f32 0.0, %v2886
    %v2888 = vpop.f32.mrf.mxu0
    %2889 = vmatprep.mubr.f32.mxu0 0.0
    %2890 = vmatmul.mubr.f32.gmra.mxu0 %v2796
    %v2891 = vpop.f32.mrf.mxu0
    %v2892 = vadd.f32 0.0, %v2891
    %v2893 = vpop.f32.mrf.mxu0
    %2894 = vmatprep.mubr.f32.mxu0 0.0
    %2895 = vmatmul.mubr.f32.gmra.mxu0 %v2799
    %v2896 = vpop.f32.mrf.mxu0
    %v2897 = vadd.f32 0.0, %v2896
    %v2898 = vpop.f32.mrf.mxu0
    %2899 = vmatprep.mubr.f32.mxu0 0.0
    %2900 = vmatmul.mubr.f32.gmra.mxu0 %v2802
    %v2901 = vpop.f32.mrf.mxu0
    %v2902 = vadd.f32 0.0, %v2901
    %v2903 = vpop.f32.mrf.mxu0
    %2904 = vmatprep.mubr.f32.mxu0 0.0
    %2905 = vmatmul.mubr.f32.gmra.mxu0 %v2805
    %v2906 = vpop.f32.mrf.mxu0
    %v2907 = vadd.f32 0.0, %v2906
    %v2908 = vpop.f32.mrf.mxu0
    %2909 = vmatprep.mubr.f32.mxu0 0.0
    %2910 = vmatmul.mubr.f32.gmra.mxu0 %v2808
    %v2911 = vpop.f32.mrf.mxu0
    %v2912 = vadd.f32 0.0, %v2911
    %v2913 = vpop.f32.mrf.mxu0
    %2914 = vdwg.mxu0
    %v2915 = vmul.f32 %v2877, %v242
    %v2916 = vmul.f32 %v2882, %v243
    %v2917 = vmul.f32 %v2887, %v244
    %v2918 = vmul.f32 %v2892, %v245
    %v2919 = vmul.f32 %v2897, %v246
    %v2920 = vmul.f32 %v2902, %v247
    %v2921 = vmul.f32 %v2907, %v248
    %v2922 = vmul.f32 %v2912, %v249
    %v2924 = vsel %vm272, %v2915, 0
    %v2927 = vsel %vm272, %v2916, 0
    %v2930 = vsel %vm272, %v2917, 0
    %v2933 = vsel %vm272, %v2918, 0
    %v2936 = vsel %vm272, %v2919, 0
    %v2939 = vsel %vm272, %v2920, 0
    %v2942 = vsel %vm272, %v2921, 0
    %v2945 = vsel %vm272, %v2922, 0
    %2947 = vmatprep.subr.mxu0 0.0
    %2948 = vmatpush1.msra.mxu0 0.0
    %2949 = vmatprep.subr.mxu0 0.0
    %2950 = vmatpush1.msra.mxu0 0.0
    %2951 = vmatprep.subr.mxu0 0.0
    %2952 = vmatpush1.msra.mxu0 0.0
    %2953 = vmatprep.subr.mxu0 0.0
    %2954 = vmatpush1.msra.mxu0 0.0
    %2955 = vmatprep.subr.mxu0 0.0
    %2956 = vmatpush1.msra.mxu0 0.0
    %2957 = vmatprep.subr.mxu0 0.0
    %2958 = vmatpush1.msra.mxu0 0.0
    %2959 = vmatprep.subr.mxu0 0.0
    %2960 = vmatpush1.msra.mxu0 0.0
    %2961 = vmatprep.subr.mxu0 0.0
    %2962 = vmatpush1.msra.mxu0 0.0
    %2963 = vmatprep.subr.mxu0 0.0
    %2964 = vmatpush1.msra.mxu0 0.0
    %2965 = vmatprep.subr.mxu0 0.0
    %2966 = vmatpush1.msra.mxu0 0.0
    %2967 = vmatprep.subr.mxu0 0.0
    %2968 = vmatpush1.msra.mxu0 0.0
    %2969 = vmatprep.subr.mxu0 0.0
    %2970 = vmatpush1.msra.mxu0 0.0
    %2971 = vmatprep.subr.mxu0 0.0
    %2972 = vmatpush1.msra.mxu0 %v261
    %2973 = vmatprep.subr.mxu0 0.0
    %2974 = vmatpush1.msra.mxu0 %v260
    %2975 = vmatprep.subr.mxu0 0.0
    %2976 = vmatpush1.msra.mxu0 %v259
    %2977 = vmatprep.subr.mxu0 0.0
    %2978 = vmatpush1.msra.mxu0 %v258
    %2979 = vmatprep.subr.mxu0 0.0
    %2980 = vmatpush2.msra.mxu0 0.0
    %2981 = vmatprep.subr.mxu0 0.0
    %2982 = vmatpush2.msra.mxu0 0.0
    %2983 = vmatprep.subr.mxu0 0.0
    %2984 = vmatpush2.msra.mxu0 0.0
    %2985 = vmatprep.subr.mxu0 0.0
    %2986 = vmatpush2.msra.mxu0 0.0
    %2987 = vmatprep.subr.mxu0 0.0
    %2988 = vmatpush2.msra.mxu0 0.0
    %2989 = vmatprep.subr.mxu0 0.0
    %2990 = vmatpush2.msra.mxu0 0.0
    %2991 = vmatprep.subr.mxu0 0.0
    %2992 = vmatpush2.msra.mxu0 0.0
    %2993 = vmatprep.subr.mxu0 0.0
    %2994 = vmatpush2.msra.mxu0 0.0
    %2995 = vmatprep.subr.mxu0 0.0
    %2996 = vmatpush2.msra.mxu0 0.0
    %2997 = vmatprep.subr.mxu0 0.0
    %2998 = vmatpush2.msra.mxu0 0.0
    %2999 = vmatprep.subr.mxu0 0.0
    %3000 = vmatpush2.msra.mxu0 0.0
    %3001 = vmatprep.subr.mxu0 0.0
    %3002 = vmatpush2.msra.mxu0 0.0
    %3003 = vmatprep.subr.mxu0 0.0
    %3004 = vmatpush2.msra.mxu0 0.0
    %3005 = vmatprep.subr.mxu0 0.0
    %3006 = vmatpush2.msra.mxu0 0.0
    %3007 = vmatprep.subr.mxu0 0.0
    %3008 = vmatpush2.msra.mxu0 0.0
    %3009 = vmatprep.subr.mxu0 0.0
    %3010 = vmatpush2.msra.mxu0 0.0
    %3011 = vmatprep.mubr.f32.mxu0 0.0
    %3012 = vmatmul.mubr.f32.gmra.mxu0 %v2924
    %v3013 = vpop.f32.mrf.mxu0
    %v3014 = vadd.f32 0.0, %v3013
    %v3015 = vpop.f32.mrf.mxu0
    %3016 = vmatprep.mubr.f32.mxu0 0.0
    %3017 = vmatmul.mubr.f32.gmra.mxu0 %v2927
    %v3018 = vpop.f32.mrf.mxu0
    %v3019 = vadd.f32 0.0, %v3018
    %v3020 = vpop.f32.mrf.mxu0
    %3021 = vmatprep.mubr.f32.mxu0 0.0
    %3022 = vmatmul.mubr.f32.gmra.mxu0 %v2930
    %v3023 = vpop.f32.mrf.mxu0
    %v3024 = vadd.f32 0.0, %v3023
    %v3025 = vpop.f32.mrf.mxu0
    %3026 = vmatprep.mubr.f32.mxu0 0.0
    %3027 = vmatmul.mubr.f32.gmra.mxu0 %v2933
    %v3028 = vpop.f32.mrf.mxu0
    %v3029 = vadd.f32 0.0, %v3028
    %v3030 = vpop.f32.mrf.mxu0
    %3031 = vmatprep.mubr.f32.mxu0 0.0
    %3032 = vmatmul.mubr.f32.gmra.mxu0 %v2936
    %v3033 = vpop.f32.mrf.mxu0
    %v3034 = vadd.f32 0.0, %v3033
    %v3035 = vpop.f32.mrf.mxu0
    %3036 = vmatprep.mubr.f32.mxu0 0.0
    %3037 = vmatmul.mubr.f32.gmra.mxu0 %v2939
    %v3038 = vpop.f32.mrf.mxu0
    %v3039 = vadd.f32 0.0, %v3038
    %v3040 = vpop.f32.mrf.mxu0
    %3041 = vmatprep.mubr.f32.mxu0 0.0
    %3042 = vmatmul.mubr.f32.gmra.mxu0 %v2942
    %v3043 = vpop.f32.mrf.mxu0
    %v3044 = vadd.f32 0.0, %v3043
    %v3045 = vpop.f32.mrf.mxu0
    %3046 = vmatprep.mubr.f32.mxu0 0.0
    %3047 = vmatmul.mubr.f32.gmra.mxu0 %v2945
    %v3048 = vpop.f32.mrf.mxu0
    %v3049 = vadd.f32 0.0, %v3048
    %v3050 = vpop.f32.mrf.mxu0
    %3051 = vdwg.mxu0
    %v3052 = vmul.f32 %v3014, %v250
    %v3053 = vmul.f32 %v3019, %v251
    %v3054 = vmul.f32 %v3024, %v252
    %v3055 = vmul.f32 %v3029, %v253
    %v3056 = vmul.f32 %v3034, %v254
    %v3057 = vmul.f32 %v3039, %v255
    %v3058 = vmul.f32 %v3044, %v256
    %v3059 = vmul.f32 %v3049, %v257
    %v3061 = vsel %vm272, %v3052, 0
    %v3064 = vsel %vm272, %v3053, 0
    %v3067 = vsel %vm272, %v3054, 0
    %v3070 = vsel %vm272, %v3055, 0
    %v3073 = vsel %vm272, %v3056, 0
    %v3076 = vsel %vm272, %v3057, 0
    %v3079 = vsel %vm272, %v3058, 0
    %v3082 = vsel %vm272, %v3059, 0
    %3084 = vmatprep.subr.mxu0 0.0
    %3085 = vmatpush1.msra.mxu0 0.0
    %3086 = vmatprep.subr.mxu0 0.0
    %3087 = vmatpush1.msra.mxu0 0.0
    %3088 = vmatprep.subr.mxu0 0.0
    %3089 = vmatpush1.msra.mxu0 0.0
    %3090 = vmatprep.subr.mxu0 0.0
    %3091 = vmatpush1.msra.mxu0 0.0
    %3092 = vmatprep.subr.mxu0 0.0
    %3093 = vmatpush1.msra.mxu0 0.0
    %3094 = vmatprep.subr.mxu0 0.0
    %3095 = vmatpush1.msra.mxu0 0.0
    %3096 = vmatprep.subr.mxu0 0.0
    %3097 = vmatpush1.msra.mxu0 0.0
    %3098 = vmatprep.subr.mxu0 0.0
    %3099 = vmatpush1.msra.mxu0 0.0
    %3100 = vmatprep.subr.mxu0 0.0
    %3101 = vmatpush1.msra.mxu0 0.0
    %3102 = vmatprep.subr.mxu0 0.0
    %3103 = vmatpush1.msra.mxu0 0.0
    %3104 = vmatprep.subr.mxu0 0.0
    %3105 = vmatpush1.msra.mxu0 0.0
    %3106 = vmatprep.subr.mxu0 0.0
    %3107 = vmatpush1.msra.mxu0 0.0
    %3108 = vmatprep.subr.mxu0 0.0
    %3109 = vmatpush1.msra.mxu0 %v222
    %3110 = vmatprep.subr.mxu0 0.0
    %3111 = vmatpush1.msra.mxu0 %v221
    %3112 = vmatprep.subr.mxu0 0.0
    %3113 = vmatpush1.msra.mxu0 %v220
    %3114 = vmatprep.subr.mxu0 0.0
    %3115 = vmatpush1.msra.mxu0 %v219
    %3116 = vmatprep.subr.mxu0 0.0
    %3117 = vmatpush2.msra.mxu0 0.0
    %3118 = vmatprep.subr.mxu0 0.0
    %3119 = vmatpush2.msra.mxu0 0.0
    %3120 = vmatprep.subr.mxu0 0.0
    %3121 = vmatpush2.msra.mxu0 0.0
    %3122 = vmatprep.subr.mxu0 0.0
    %3123 = vmatpush2.msra.mxu0 0.0
    %3124 = vmatprep.subr.mxu0 0.0
    %3125 = vmatpush2.msra.mxu0 0.0
    %3126 = vmatprep.subr.mxu0 0.0
    %3127 = vmatpush2.msra.mxu0 0.0
    %3128 = vmatprep.subr.mxu0 0.0
    %3129 = vmatpush2.msra.mxu0 0.0
    %3130 = vmatprep.subr.mxu0 0.0
    %3131 = vmatpush2.msra.mxu0 0.0
    %3132 = vmatprep.subr.mxu0 0.0
    %3133 = vmatpush2.msra.mxu0 0.0
    %3134 = vmatprep.subr.mxu0 0.0
    %3135 = vmatpush2.msra.mxu0 0.0
    %3136 = vmatprep.subr.mxu0 0.0
    %3137 = vmatpush2.msra.mxu0 0.0
    %3138 = vmatprep.subr.mxu0 0.0
    %3139 = vmatpush2.msra.mxu0 0.0
    %3140 = vmatprep.subr.mxu0 0.0
    %3141 = vmatpush2.msra.mxu0 0.0
    %3142 = vmatprep.subr.mxu0 0.0
    %3143 = vmatpush2.msra.mxu0 0.0
    %3144 = vmatprep.subr.mxu0 0.0
    %3145 = vmatpush2.msra.mxu0 0.0
    %3146 = vmatprep.subr.mxu0 0.0
    %3147 = vmatpush2.msra.mxu0 0.0
    %3148 = vmatprep.mubr.f32.mxu0 0.0
    %3149 = vmatmul.mubr.f32.gmra.mxu0 %v3061
    %v3150 = vpop.f32.mrf.mxu0
    %v3151 = vadd.f32 0.0, %v3150
    %v3152 = vpop.f32.mrf.mxu0
    %3153 = vmatprep.mubr.f32.mxu0 0.0
    %3154 = vmatmul.mubr.f32.gmra.mxu0 %v3064
    %v3155 = vpop.f32.mrf.mxu0
    %v3156 = vadd.f32 0.0, %v3155
    %v3157 = vpop.f32.mrf.mxu0
    %3158 = vmatprep.mubr.f32.mxu0 0.0
    %3159 = vmatmul.mubr.f32.gmra.mxu0 %v3067
    %v3160 = vpop.f32.mrf.mxu0
    %v3161 = vadd.f32 0.0, %v3160
    %v3162 = vpop.f32.mrf.mxu0
    %3163 = vmatprep.mubr.f32.mxu0 0.0
    %3164 = vmatmul.mubr.f32.gmra.mxu0 %v3070
    %v3165 = vpop.f32.mrf.mxu0
    %v3166 = vadd.f32 0.0, %v3165
    %v3167 = vpop.f32.mrf.mxu0
    %3168 = vmatprep.mubr.f32.mxu0 0.0
    %3169 = vmatmul.mubr.f32.gmra.mxu0 %v3073
    %v3170 = vpop.f32.mrf.mxu0
    %v3171 = vadd.f32 0.0, %v3170
    %v3172 = vpop.f32.mrf.mxu0
    %3173 = vmatprep.mubr.f32.mxu0 0.0
    %3174 = vmatmul.mubr.f32.gmra.mxu0 %v3076
    %v3175 = vpop.f32.mrf.mxu0
    %v3176 = vadd.f32 0.0, %v3175
    %v3177 = vpop.f32.mrf.mxu0
    %3178 = vmatprep.mubr.f32.mxu0 0.0
    %3179 = vmatmul.mubr.f32.gmra.mxu0 %v3079
    %v3180 = vpop.f32.mrf.mxu0
    %v3181 = vadd.f32 0.0, %v3180
    %v3182 = vpop.f32.mrf.mxu0
    %3183 = vmatprep.mubr.f32.mxu0 0.0
    %3184 = vmatmul.mubr.f32.gmra.mxu0 %v3082
    %v3185 = vpop.f32.mrf.mxu0
    %v3186 = vadd.f32 0.0, %v3185
    %v3187 = vpop.f32.mrf.mxu0
    %3188 = vdwg.mxu0
    %3189 = vmatprep.subr.mxu0 0.0
    %3190 = vmatpush1.msra.mxu0 0.0
    %3191 = vmatprep.subr.mxu0 0.0
    %3192 = vmatpush1.msra.mxu0 0.0
    %3193 = vmatprep.subr.mxu0 0.0
    %3194 = vmatpush1.msra.mxu0 0.0
    %3195 = vmatprep.subr.mxu0 0.0
    %3196 = vmatpush1.msra.mxu0 0.0
    %3197 = vmatprep.subr.mxu0 0.0
    %3198 = vmatpush1.msra.mxu0 0.0
    %3199 = vmatprep.subr.mxu0 0.0
    %3200 = vmatpush1.msra.mxu0 0.0
    %3201 = vmatprep.subr.mxu0 0.0
    %3202 = vmatpush1.msra.mxu0 0.0
    %3203 = vmatprep.subr.mxu0 0.0
    %3204 = vmatpush1.msra.mxu0 0.0
    %3205 = vmatprep.subr.mxu0 0.0
    %3206 = vmatpush1.msra.mxu0 %v3186
    %3207 = vmatprep.subr.mxu0 0.0
    %3208 = vmatpush1.msra.mxu0 %v3181
    %3209 = vmatprep.subr.mxu0 0.0
    %3210 = vmatpush1.msra.mxu0 %v3176
    %3211 = vmatprep.subr.mxu0 0.0
    %3212 = vmatpush1.msra.mxu0 %v3171
    %3213 = vmatprep.subr.mxu0 0.0
    %3214 = vmatpush1.msra.mxu0 %v3166
    %3215 = vmatprep.subr.mxu0 0.0
    %3216 = vmatpush1.msra.mxu0 %v3161
    %3217 = vmatprep.subr.mxu0 0.0
    %3218 = vmatpush1.msra.mxu0 %v3156
    %3219 = vmatprep.subr.mxu0 0.0
    %3220 = vmatpush1.msra.mxu0 %v3151
    %3221 = vmatprep.subr.mxu0 0.0
    %3222 = vmatpush2.msra.mxu0 0.0
    %3223 = vmatprep.subr.mxu0 0.0
    %3224 = vmatpush2.msra.mxu0 0.0
    %3225 = vmatprep.subr.mxu0 0.0
    %3226 = vmatpush2.msra.mxu0 0.0
    %3227 = vmatprep.subr.mxu0 0.0
    %3228 = vmatpush2.msra.mxu0 0.0
    %3229 = vmatprep.subr.mxu0 0.0
    %3230 = vmatpush2.msra.mxu0 0.0
    %3231 = vmatprep.subr.mxu0 0.0
    %3232 = vmatpush2.msra.mxu0 0.0
    %3233 = vmatprep.subr.mxu0 0.0
    %3234 = vmatpush2.msra.mxu0 0.0
    %3235 = vmatprep.subr.mxu0 0.0
    %3236 = vmatpush2.msra.mxu0 0.0
    %3237 = vmatprep.subr.mxu0 0.0
    %3238 = vmatpush2.msra.mxu0 0.0
    %3239 = vmatprep.subr.mxu0 0.0
    %3240 = vmatpush2.msra.mxu0 0.0
    %3241 = vmatprep.subr.mxu0 0.0
    %3242 = vmatpush2.msra.mxu0 0.0
    %3243 = vmatprep.subr.mxu0 0.0
    %3244 = vmatpush2.msra.mxu0 0.0
    %3245 = vmatprep.subr.mxu0 0.0
    %3246 = vmatpush2.msra.mxu0 0.0
    %3247 = vmatprep.subr.mxu0 0.0
    %3248 = vmatpush2.msra.mxu0 0.0
    %3249 = vmatprep.subr.mxu0 0.0
    %3250 = vmatpush2.msra.mxu0 0.0
    %3251 = vmatprep.subr.mxu0 0.0
    %3252 = vmatpush2.msra.mxu0 0.0
    %3253 = vmatprep.mubr.f32.mxu0 0.0
    %3254 = vmatmul.mubr.f32.gmra.mxu0 %v1181
    %v3255 = vpop.f32.mrf.mxu0
    %v3256 = vadd.f32 %v1177, %v3255
    %v3257 = vpop.f32.mrf.mxu0
    %3258 = vmatprep.mubr.f32.mxu0 0.0
    %3259 = vmatmul.mubr.f32.gmra.mxu0 %v1184
    %v3260 = vpop.f32.mrf.mxu0
    %v3261 = vadd.f32 %v1177, %v3260
    %v3262 = vpop.f32.mrf.mxu0
    %3263 = vdwg.mxu0
    %v3264 = vmax.f32 %v3256, 0.0
    %v3265 = vmax.f32 %v3261, 0.0
    %v3266 = vsel %vm272, %v3264, 0.0
    %3267 = vadd.xlane.f32.xlu0 %v3266
    %v3268 = vpop.xlane.xlu0 %3267
    %v3269 = vsel %vm272, %v3265, 0.0
    %3270 = vadd.xlane.f32.xlu0 %v3269
    %v3271 = vpop.xlane.xlu0 %3270
    %v3272 = vmul.f32 %v3268, %v1269
    %v3273 = vmul.f32 %v3271, %v1269
    %v3274 = vsub.f32 %v3264, %v3272
    %v3275 = vsub.f32 %v3265, %v3273
    %v3276 = vmul.f32 %v3274, %v3274
    %v3277 = vmul.f32 %v3275, %v3275
    %v3278 = vsel %vm272, %v3276, 0.0
    %3279 = vadd.xlane.f32.xlu0 %v3278
    %v3280 = vpop.xlane.xlu0 %3279
    %v3281 = vsel %vm272, %v3277, 0.0
    %3282 = vadd.xlane.f32.xlu0 %v3281
    %v3283 = vpop.xlane.xlu0 %3282
    %v3284 = vmul.f32 %v3280, %v1269
    %v3285 = vmul.f32 %v3283, %v1269
    %v3286 = vadd.f32 %v3284, 1e-05
    %v3287 = vadd.f32 %v3285, 1e-05
    %v3288 = vrsqrt.pop %v3286
    %v3289 = vrsqrt.pop %v3287
    %v3290 = vmul.f32 %v3274, %v3288
    %v3291 = vmul.f32 %v3275, %v3289
    %v3292 = vmul.f32 %v3290, %v1294
    %v3293 = vmul.f32 %v3291, %v1294
    %v3294 = vadd.f32 %v3292, %v1302
    %v3295 = vadd.f32 %v3293, %v1302
    %v3297 = vsel %vm272, %v3294, 0
    %v3300 = vsel %vm272, %v3295, 0
    %3302 = vmatprep.subr.mxu0 0.0
    %3303 = vmatpush1.msra.mxu0 0.0
    %3304 = vmatprep.subr.mxu0 0.0
    %3305 = vmatpush1.msra.mxu0 0.0
    %3306 = vmatprep.subr.mxu0 0.0
    %3307 = vmatpush1.msra.mxu0 0.0
    %3308 = vmatprep.subr.mxu0 0.0
    %3309 = vmatpush1.msra.mxu0 0.0
    %3310 = vmatprep.subr.mxu0 0.0
    %3311 = vmatpush1.msra.mxu0 0.0
    %3312 = vmatprep.subr.mxu0 0.0
    %3313 = vmatpush1.msra.mxu0 0.0
    %3314 = vmatprep.subr.mxu0 0.0
    %3315 = vmatpush1.msra.mxu0 0.0
    %3316 = vmatprep.subr.mxu0 0.0
    %3317 = vmatpush1.msra.mxu0 0.0
    %3318 = vmatprep.subr.mxu0 0.0
    %3319 = vmatpush1.msra.mxu0 0.0
    %3320 = vmatprep.subr.mxu0 0.0
    %3321 = vmatpush1.msra.mxu0 0.0
    %3322 = vmatprep.subr.mxu0 0.0
    %3323 = vmatpush1.msra.mxu0 0.0
    %3324 = vmatprep.subr.mxu0 0.0
    %3325 = vmatpush1.msra.mxu0 0.0
    %3326 = vmatprep.subr.mxu0 0.0
    %3327 = vmatpush1.msra.mxu0 %v207
    %3328 = vmatprep.subr.mxu0 0.0
    %3329 = vmatpush1.msra.mxu0 %v206
    %3330 = vmatprep.subr.mxu0 0.0
    %3331 = vmatpush1.msra.mxu0 %v205
    %3332 = vmatprep.subr.mxu0 0.0
    %3333 = vmatpush1.msra.mxu0 %v204
    %3334 = vmatprep.subr.mxu0 0.0
    %3335 = vmatpush2.msra.mxu0 0.0
    %3336 = vmatprep.subr.mxu0 0.0
    %3337 = vmatpush2.msra.mxu0 0.0
    %3338 = vmatprep.subr.mxu0 0.0
    %3339 = vmatpush2.msra.mxu0 0.0
    %3340 = vmatprep.subr.mxu0 0.0
    %3341 = vmatpush2.msra.mxu0 0.0
    %3342 = vmatprep.subr.mxu0 0.0
    %3343 = vmatpush2.msra.mxu0 0.0
    %3344 = vmatprep.subr.mxu0 0.0
    %3345 = vmatpush2.msra.mxu0 0.0
    %3346 = vmatprep.subr.mxu0 0.0
    %3347 = vmatpush2.msra.mxu0 0.0
    %3348 = vmatprep.subr.mxu0 0.0
    %3349 = vmatpush2.msra.mxu0 0.0
    %3350 = vmatprep.subr.mxu0 0.0
    %3351 = vmatpush2.msra.mxu0 0.0
    %3352 = vmatprep.subr.mxu0 0.0
    %3353 = vmatpush2.msra.mxu0 0.0
    %3354 = vmatprep.subr.mxu0 0.0
    %3355 = vmatpush2.msra.mxu0 0.0
    %3356 = vmatprep.subr.mxu0 0.0
    %3357 = vmatpush2.msra.mxu0 0.0
    %3358 = vmatprep.subr.mxu0 0.0
    %3359 = vmatpush2.msra.mxu0 0.0
    %3360 = vmatprep.subr.mxu0 0.0
    %3361 = vmatpush2.msra.mxu0 0.0
    %3362 = vmatprep.subr.mxu0 0.0
    %3363 = vmatpush2.msra.mxu0 0.0
    %3364 = vmatprep.subr.mxu0 0.0
    %3365 = vmatpush2.msra.mxu0 0.0
    %3366 = vmatprep.mubr.f32.mxu0 0.0
    %3367 = vmatmul.mubr.f32.gmra.mxu0 %v3297
    %v3368 = vpop.f32.mrf.mxu0
    %v3369 = vadd.f32 %v270, %v3368
    %v3370 = vpop.f32.mrf.mxu0
    %3371 = vmatprep.mubr.f32.mxu0 0.0
    %3372 = vmatmul.mubr.f32.gmra.mxu0 %v3300
    %v3373 = vpop.f32.mrf.mxu0
    %v3374 = vadd.f32 %v270, %v3373
    %v3375 = vpop.f32.mrf.mxu0
    %3376 = vdwg.mxu0
    %v3377 = vmax.f32 %v3369, 0.0
    %v3378 = vmax.f32 %v3374, 0.0
    %3379 = vmatprep.subr.mxu0 0.0
    %3380 = vmatpush1.msra.mxu0 0.0
    %3381 = vmatprep.subr.mxu0 0.0
    %3382 = vmatpush1.msra.mxu0 0.0
    %3383 = vmatprep.subr.mxu0 0.0
    %3384 = vmatpush1.msra.mxu0 0.0
    %3385 = vmatprep.subr.mxu0 0.0
    %3386 = vmatpush1.msra.mxu0 0.0
    %3387 = vmatprep.subr.mxu0 0.0
    %3388 = vmatpush1.msra.mxu0 0.0
    %3389 = vmatprep.subr.mxu0 0.0
    %3390 = vmatpush1.msra.mxu0 0.0
    %3391 = vmatprep.subr.mxu0 0.0
    %3392 = vmatpush1.msra.mxu0 0.0
    %3393 = vmatprep.subr.mxu0 0.0
    %3394 = vmatpush1.msra.mxu0 0.0
    %3395 = vmatprep.subr.mxu0 0.0
    %3396 = vmatpush1.msra.mxu0 0.0
    %3397 = vmatprep.subr.mxu0 0.0
    %3398 = vmatpush1.msra.mxu0 0.0
    %3399 = vmatprep.subr.mxu0 0.0
    %3400 = vmatpush1.msra.mxu0 0.0
    %3401 = vmatprep.subr.mxu0 0.0
    %3402 = vmatpush1.msra.mxu0 0.0
    %3403 = vmatprep.subr.mxu0 0.0
    %3404 = vmatpush1.msra.mxu0 %v212
    %3405 = vmatprep.subr.mxu0 0.0
    %3406 = vmatpush1.msra.mxu0 %v211
    %3407 = vmatprep.subr.mxu0 0.0
    %3408 = vmatpush1.msra.mxu0 %v210
    %3409 = vmatprep.subr.mxu0 0.0
    %3410 = vmatpush1.msra.mxu0 %v209
    %3411 = vmatprep.subr.mxu0 0.0
    %3412 = vmatpush2.msra.mxu0 0.0
    %3413 = vmatprep.subr.mxu0 0.0
    %3414 = vmatpush2.msra.mxu0 0.0
    %3415 = vmatprep.subr.mxu0 0.0
    %3416 = vmatpush2.msra.mxu0 0.0
    %3417 = vmatprep.subr.mxu0 0.0
    %3418 = vmatpush2.msra.mxu0 0.0
    %3419 = vmatprep.subr.mxu0 0.0
    %3420 = vmatpush2.msra.mxu0 0.0
    %3421 = vmatprep.subr.mxu0 0.0
    %3422 = vmatpush2.msra.mxu0 0.0
    %3423 = vmatprep.subr.mxu0 0.0
    %3424 = vmatpush2.msra.mxu0 0.0
    %3425 = vmatprep.subr.mxu0 0.0
    %3426 = vmatpush2.msra.mxu0 0.0
    %3427 = vmatprep.subr.mxu0 0.0
    %3428 = vmatpush2.msra.mxu0 0.0
    %3429 = vmatprep.subr.mxu0 0.0
    %3430 = vmatpush2.msra.mxu0 0.0
    %3431 = vmatprep.subr.mxu0 0.0
    %3432 = vmatpush2.msra.mxu0 0.0
    %3433 = vmatprep.subr.mxu0 0.0
    %3434 = vmatpush2.msra.mxu0 0.0
    %3435 = vmatprep.subr.mxu0 0.0
    %3436 = vmatpush2.msra.mxu0 0.0
    %3437 = vmatprep.subr.mxu0 0.0
    %3438 = vmatpush2.msra.mxu0 0.0
    %3439 = vmatprep.subr.mxu0 0.0
    %3440 = vmatpush2.msra.mxu0 0.0
    %3441 = vmatprep.subr.mxu0 0.0
    %3442 = vmatpush2.msra.mxu0 0.0
    %3443 = vmatprep.mubr.f32.mxu0 0.0
    %3444 = vmatmul.mubr.f32.gmra.mxu0 %v3297
    %v3445 = vpop.f32.mrf.mxu0
    %v3446 = vadd.f32 %v360, %v3445
    %v3447 = vpop.f32.mrf.mxu0
    %3448 = vmatprep.mubr.f32.mxu0 0.0
    %3449 = vmatmul.mubr.f32.gmra.mxu0 %v3300
    %v3450 = vpop.f32.mrf.mxu0
    %v3451 = vadd.f32 %v360, %v3450
    %v3452 = vpop.f32.mrf.mxu0
    %3453 = vdwg.mxu0
    %v3454 = vmax.f32 %v3446, 0.0
    %v3455 = vmax.f32 %v3451, 0.0
    %3456 = vmatprep.subr.mxu0 0.0
    %3457 = vmatpush1.msra.mxu0 0.0
    %3458 = vmatprep.subr.mxu0 0.0
    %3459 = vmatpush1.msra.mxu0 0.0
    %3460 = vmatprep.subr.mxu0 0.0
    %3461 = vmatpush1.msra.mxu0 0.0
    %3462 = vmatprep.subr.mxu0 0.0
    %3463 = vmatpush1.msra.mxu0 0.0
    %3464 = vmatprep.subr.mxu0 0.0
    %3465 = vmatpush1.msra.mxu0 0.0
    %3466 = vmatprep.subr.mxu0 0.0
    %3467 = vmatpush1.msra.mxu0 0.0
    %3468 = vmatprep.subr.mxu0 0.0
    %3469 = vmatpush1.msra.mxu0 0.0
    %3470 = vmatprep.subr.mxu0 0.0
    %3471 = vmatpush1.msra.mxu0 0.0
    %3472 = vmatprep.subr.mxu0 0.0
    %3473 = vmatpush1.msra.mxu0 0.0
    %3474 = vmatprep.subr.mxu0 0.0
    %3475 = vmatpush1.msra.mxu0 0.0
    %3476 = vmatprep.subr.mxu0 0.0
    %3477 = vmatpush1.msra.mxu0 0.0
    %3478 = vmatprep.subr.mxu0 0.0
    %3479 = vmatpush1.msra.mxu0 0.0
    %3480 = vmatprep.subr.mxu0 0.0
    %3481 = vmatpush1.msra.mxu0 %v217
    %3482 = vmatprep.subr.mxu0 0.0
    %3483 = vmatpush1.msra.mxu0 %v216
    %3484 = vmatprep.subr.mxu0 0.0
    %3485 = vmatpush1.msra.mxu0 %v215
    %3486 = vmatprep.subr.mxu0 0.0
    %3487 = vmatpush1.msra.mxu0 %v214
    %3488 = vmatprep.subr.mxu0 0.0
    %3489 = vmatpush2.msra.mxu0 0.0
    %3490 = vmatprep.subr.mxu0 0.0
    %3491 = vmatpush2.msra.mxu0 0.0
    %3492 = vmatprep.subr.mxu0 0.0
    %3493 = vmatpush2.msra.mxu0 0.0
    %3494 = vmatprep.subr.mxu0 0.0
    %3495 = vmatpush2.msra.mxu0 0.0
    %3496 = vmatprep.subr.mxu0 0.0
    %3497 = vmatpush2.msra.mxu0 0.0
    %3498 = vmatprep.subr.mxu0 0.0
    %3499 = vmatpush2.msra.mxu0 0.0
    %3500 = vmatprep.subr.mxu0 0.0
    %3501 = vmatpush2.msra.mxu0 0.0
    %3502 = vmatprep.subr.mxu0 0.0
    %3503 = vmatpush2.msra.mxu0 0.0
    %3504 = vmatprep.subr.mxu0 0.0
    %3505 = vmatpush2.msra.mxu0 0.0
    %3506 = vmatprep.subr.mxu0 0.0
    %3507 = vmatpush2.msra.mxu0 0.0
    %3508 = vmatprep.subr.mxu0 0.0
    %3509 = vmatpush2.msra.mxu0 0.0
    %3510 = vmatprep.subr.mxu0 0.0
    %3511 = vmatpush2.msra.mxu0 0.0
    %3512 = vmatprep.subr.mxu0 0.0
    %3513 = vmatpush2.msra.mxu0 0.0
    %3514 = vmatprep.subr.mxu0 0.0
    %3515 = vmatpush2.msra.mxu0 0.0
    %3516 = vmatprep.subr.mxu0 0.0
    %3517 = vmatpush2.msra.mxu0 0.0
    %3518 = vmatprep.subr.mxu0 0.0
    %3519 = vmatpush2.msra.mxu0 0.0
    %3520 = vmatprep.mubr.f32.mxu0 0.0
    %3521 = vmatmul.mubr.f32.gmra.mxu0 %v3297
    %v3522 = vpop.f32.mrf.mxu0
    %v3523 = vadd.f32 %v443, %v3522
    %v3524 = vpop.f32.mrf.mxu0
    %3525 = vmatprep.mubr.f32.mxu0 0.0
    %3526 = vmatmul.mubr.f32.gmra.mxu0 %v3300
    %v3527 = vpop.f32.mrf.mxu0
    %v3528 = vadd.f32 %v443, %v3527
    %v3529 = vpop.f32.mrf.mxu0
    %3530 = vdwg.mxu0
    %v3531 = vmax.f32 %v3523, 0.0
    %v3532 = vmax.f32 %v3528, 0.0
    %v3533 = vmul.f32 %v3377, %v226
    %v3534 = vmul.f32 %v3378, %v227
    %v3535 = vmul.f32 %v3377, %v228
    %v3536 = vmul.f32 %v3378, %v229
    %v3537 = vmul.f32 %v3377, %v230
    %v3538 = vmul.f32 %v3378, %v231
    %v3539 = vmul.f32 %v3377, %v232
    %v3540 = vmul.f32 %v3378, %v233
    %v3542 = vsel %vm272, %v3533, 0
    %v3545 = vsel %vm272, %v3534, 0
    %v3548 = vsel %vm272, %v3535, 0
    %v3551 = vsel %vm272, %v3536, 0
    %v3554 = vsel %vm272, %v3537, 0
    %v3557 = vsel %vm272, %v3538, 0
    %v3560 = vsel %vm272, %v3539, 0
    %v3563 = vsel %vm272, %v3540, 0
    %v3566 = vsel %vm272, %v3454, 0
    %v3569 = vsel %vm272, %v3455, 0
    %3571 = vmatprep.subr.mxu0 0.0
    %3572 = vmatpush1.xpose.msra.mxu0 0.0
    %3573 = vmatprep.subr.mxu0 0.0
    %3574 = vmatpush1.xpose.msra.mxu0 0.0
    %3575 = vmatprep.subr.mxu0 0.0
    %3576 = vmatpush1.xpose.msra.mxu0 0.0
    %3577 = vmatprep.subr.mxu0 0.0
    %3578 = vmatpush1.xpose.msra.mxu0 0.0
    %3579 = vmatprep.subr.mxu0 0.0
    %3580 = vmatpush1.xpose.msra.mxu0 0.0
    %3581 = vmatprep.subr.mxu0 0.0
    %3582 = vmatpush1.xpose.msra.mxu0 0.0
    %3583 = vmatprep.subr.mxu0 0.0
    %3584 = vmatpush1.xpose.msra.mxu0 0.0
    %3585 = vmatprep.subr.mxu0 0.0
    %3586 = vmatpush1.xpose.msra.mxu0 0.0
    %3587 = vmatprep.subr.mxu0 0.0
    %3588 = vmatpush1.xpose.msra.mxu0 0.0
    %3589 = vmatprep.subr.mxu0 0.0
    %3590 = vmatpush1.xpose.msra.mxu0 0.0
    %3591 = vmatprep.subr.mxu0 0.0
    %3592 = vmatpush1.xpose.msra.mxu0 0.0
    %3593 = vmatprep.subr.mxu0 0.0
    %3594 = vmatpush1.xpose.msra.mxu0 0.0
    %3595 = vmatprep.subr.mxu0 0.0
    %3596 = vmatpush1.xpose.msra.mxu0 0.0
    %3597 = vmatprep.subr.mxu0 0.0
    %3598 = vmatpush1.xpose.msra.mxu0 0.0
    %3599 = vmatprep.subr.mxu0 0.0
    %3600 = vmatpush1.xpose.msra.mxu0 %v3569
    %3601 = vmatprep.subr.mxu0 0.0
    %3602 = vmatpush1.xpose.msra.mxu0 %v3566
    %3603 = vmatprep.subr.mxu0 0.0
    %3604 = vmatpush2.xpose.msra.mxu0 0.0
    %3605 = vmatprep.subr.mxu0 0.0
    %3606 = vmatpush2.xpose.msra.mxu0 0.0
    %3607 = vmatprep.subr.mxu0 0.0
    %3608 = vmatpush2.xpose.msra.mxu0 0.0
    %3609 = vmatprep.subr.mxu0 0.0
    %3610 = vmatpush2.xpose.msra.mxu0 0.0
    %3611 = vmatprep.subr.mxu0 0.0
    %3612 = vmatpush2.xpose.msra.mxu0 0.0
    %3613 = vmatprep.subr.mxu0 0.0
    %3614 = vmatpush2.xpose.msra.mxu0 0.0
    %3615 = vmatprep.subr.mxu0 0.0
    %3616 = vmatpush2.xpose.msra.mxu0 0.0
    %3617 = vmatprep.subr.mxu0 0.0
    %3618 = vmatpush2.xpose.msra.mxu0 0.0
    %3619 = vmatprep.subr.mxu0 0.0
    %3620 = vmatpush2.xpose.msra.mxu0 0.0
    %3621 = vmatprep.subr.mxu0 0.0
    %3622 = vmatpush2.xpose.msra.mxu0 0.0
    %3623 = vmatprep.subr.mxu0 0.0
    %3624 = vmatpush2.xpose.msra.mxu0 0.0
    %3625 = vmatprep.subr.mxu0 0.0
    %3626 = vmatpush2.xpose.msra.mxu0 0.0
    %3627 = vmatprep.subr.mxu0 0.0
    %3628 = vmatpush2.xpose.msra.mxu0 0.0
    %3629 = vmatprep.subr.mxu0 0.0
    %3630 = vmatpush2.xpose.msra.mxu0 0.0
    %3631 = vmatprep.subr.mxu0 0.0
    %3632 = vmatpush2.xpose.msra.mxu0 0.0
    %3633 = vmatprep.subr.mxu0 0.0
    %3634 = vmatpush2.xpose.msra.mxu0 0.0
    %3635 = vmatprep.mubr.f32.mxu0 0.0
    %3636 = vmatmul.mubr.f32.gmra.mxu0 %v3542
    %v3637 = vpop.f32.mrf.mxu0
    %v3638 = vadd.f32 0.0, %v3637
    %v3639 = vpop.f32.mrf.mxu0
    %3640 = vmatprep.mubr.f32.mxu0 0.0
    %3641 = vmatmul.mubr.f32.gmra.mxu0 %v3545
    %v3642 = vpop.f32.mrf.mxu0
    %v3643 = vadd.f32 0.0, %v3642
    %v3644 = vpop.f32.mrf.mxu0
    %3645 = vmatprep.mubr.f32.mxu0 0.0
    %3646 = vmatmul.mubr.f32.gmra.mxu0 %v3548
    %v3647 = vpop.f32.mrf.mxu0
    %v3648 = vadd.f32 0.0, %v3647
    %v3649 = vpop.f32.mrf.mxu0
    %3650 = vmatprep.mubr.f32.mxu0 0.0
    %3651 = vmatmul.mubr.f32.gmra.mxu0 %v3551
    %v3652 = vpop.f32.mrf.mxu0
    %v3653 = vadd.f32 0.0, %v3652
    %v3654 = vpop.f32.mrf.mxu0
    %3655 = vmatprep.mubr.f32.mxu0 0.0
    %3656 = vmatmul.mubr.f32.gmra.mxu0 %v3554
    %v3657 = vpop.f32.mrf.mxu0
    %v3658 = vadd.f32 0.0, %v3657
    %v3659 = vpop.f32.mrf.mxu0
    %3660 = vmatprep.mubr.f32.mxu0 0.0
    %3661 = vmatmul.mubr.f32.gmra.mxu0 %v3557
    %v3662 = vpop.f32.mrf.mxu0
    %v3663 = vadd.f32 0.0, %v3662
    %v3664 = vpop.f32.mrf.mxu0
    %3665 = vmatprep.mubr.f32.mxu0 0.0
    %3666 = vmatmul.mubr.f32.gmra.mxu0 %v3560
    %v3667 = vpop.f32.mrf.mxu0
    %v3668 = vadd.f32 0.0, %v3667
    %v3669 = vpop.f32.mrf.mxu0
    %3670 = vmatprep.mubr.f32.mxu0 0.0
    %3671 = vmatmul.mubr.f32.gmra.mxu0 %v3563
    %v3672 = vpop.f32.mrf.mxu0
    %v3673 = vadd.f32 0.0, %v3672
    %v3674 = vpop.f32.mrf.mxu0
    %3675 = vdwg.mxu0
    %v3676 = vmul.f32 %v3638, 0.35355338
    %v3677 = vmul.f32 %v3643, 0.35355338
    %v3678 = vmul.f32 %v3648, 0.35355338
    %v3679 = vmul.f32 %v3653, 0.35355338
    %v3680 = vmul.f32 %v3658, 0.35355338
    %v3681 = vmul.f32 %v3663, 0.35355338
    %v3682 = vmul.f32 %v3668, 0.35355338
    %v3683 = vmul.f32 %v3673, 0.35355338
    %v3684 = vadd.f32 %v3676, %v234
    %v3685 = vadd.f32 %v3677, %v235
    %v3686 = vadd.f32 %v3678, %v236
    %v3687 = vadd.f32 %v3679, %v237
    %v3688 = vadd.f32 %v3680, %v238
    %v3689 = vadd.f32 %v3681, %v239
    %v3690 = vadd.f32 %v3682, %v240
    %v3691 = vadd.f32 %v3683, %v241
    %v3692 = vsel %vm681, %v3684, -inf
    %3693 = vmax.xlane.f32.xlu0 %v3692
    %v3694 = vpop.xlane.xlu0 %3693
    %v3695 = vsel %vm681, %v3685, -inf
    %3696 = vmax.xlane.f32.xlu0 %v3695
    %v3697 = vpop.xlane.xlu0 %3696
    %v3698 = vsel %vm681, %v3686, -inf
    %3699 = vmax.xlane.f32.xlu0 %v3698
    %v3700 = vpop.xlane.xlu0 %3699
    %v3701 = vsel %vm681, %v3687, -inf
    %3702 = vmax.xlane.f32.xlu0 %v3701
    %v3703 = vpop.xlane.xlu0 %3702
    %v3704 = vsel %vm681, %v3688, -inf
    %3705 = vmax.xlane.f32.xlu0 %v3704
    %v3706 = vpop.xlane.xlu0 %3705
    %v3707 = vsel %vm681, %v3689, -inf
    %3708 = vmax.xlane.f32.xlu0 %v3707
    %v3709 = vpop.xlane.xlu0 %3708
    %v3710 = vsel %vm681, %v3690, -inf
    %3711 = vmax.xlane.f32.xlu0 %v3710
    %v3712 = vpop.xlane.xlu0 %3711
    %v3713 = vsel %vm681, %v3691, -inf
    %3714 = vmax.xlane.f32.xlu0 %v3713
    %v3715 = vpop.xlane.xlu0 %3714
    %v3716 = vsub.f32 %v3684, %v3694
    %v3717 = vsub.f32 %v3685, %v3697
    %v3718 = vsub.f32 %v3686, %v3700
    %v3719 = vsub.f32 %v3687, %v3703
    %v3720 = vsub.f32 %v3688, %v3706
    %v3721 = vsub.f32 %v3689, %v3709
    %v3722 = vsub.f32 %v3690, %v3712
    %v3723 = vsub.f32 %v3691, %v3715
    %v3724 = vmul.f32 %v3716, 1.442695
    %v3725 = vpow.pop %v3724
    %v3726 = vmul.f32 %v3717, 1.442695
    %v3727 = vpow.pop %v3726
    %v3728 = vmul.f32 %v3718, 1.442695
    %v3729 = vpow.pop %v3728
    %v3730 = vmul.f32 %v3719, 1.442695
    %v3731 = vpow.pop %v3730
    %v3732 = vmul.f32 %v3720, 1.442695
    %v3733 = vpow.pop %v3732
    %v3734 = vmul.f32 %v3721, 1.442695
    %v3735 = vpow.pop %v3734
    %v3736 = vmul.f32 %v3722, 1.442695
    %v3737 = vpow.pop %v3736
    %v3738 = vmul.f32 %v3723, 1.442695
    %v3739 = vpow.pop %v3738
    %v3740 = vsel %vm681, %v3725, 0.0
    %3741 = vadd.xlane.f32.xlu0 %v3740
    %v3742 = vpop.xlane.xlu0 %3741
    %v3743 = vsel %vm681, %v3727, 0.0
    %3744 = vadd.xlane.f32.xlu0 %v3743
    %v3745 = vpop.xlane.xlu0 %3744
    %v3746 = vsel %vm681, %v3729, 0.0
    %3747 = vadd.xlane.f32.xlu0 %v3746
    %v3748 = vpop.xlane.xlu0 %3747
    %v3749 = vsel %vm681, %v3731, 0.0
    %3750 = vadd.xlane.f32.xlu0 %v3749
    %v3751 = vpop.xlane.xlu0 %3750
    %v3752 = vsel %vm681, %v3733, 0.0
    %3753 = vadd.xlane.f32.xlu0 %v3752
    %v3754 = vpop.xlane.xlu0 %3753
    %v3755 = vsel %vm681, %v3735, 0.0
    %3756 = vadd.xlane.f32.xlu0 %v3755
    %v3757 = vpop.xlane.xlu0 %3756
    %v3758 = vsel %vm681, %v3737, 0.0
    %3759 = vadd.xlane.f32.xlu0 %v3758
    %v3760 = vpop.xlane.xlu0 %3759
    %v3761 = vsel %vm681, %v3739, 0.0
    %3762 = vadd.xlane.f32.xlu0 %v3761
    %v3763 = vpop.xlane.xlu0 %3762
    %v3764 = vrcp.pop %v3742
    %v3765 = vrcp.pop %v3745
    %v3766 = vrcp.pop %v3748
    %v3767 = vrcp.pop %v3751
    %v3768 = vrcp.pop %v3754
    %v3769 = vrcp.pop %v3757
    %v3770 = vrcp.pop %v3760
    %v3771 = vrcp.pop %v3763
    %v3772 = vmul.f32 %v3725, %v3764
    %v3773 = vmul.f32 %v3727, %v3765
    %v3774 = vmul.f32 %v3729, %v3766
    %v3775 = vmul.f32 %v3731, %v3767
    %v3776 = vmul.f32 %v3733, %v3768
    %v3777 = vmul.f32 %v3735, %v3769
    %v3778 = vmul.f32 %v3737, %v3770
    %v3779 = vmul.f32 %v3739, %v3771
    %v3781 = vsel %vm681, %v3772, 0
    %v3784 = vsel %vm681, %v3773, 0
    %v3787 = vsel %vm681, %v3774, 0
    %v3790 = vsel %vm681, %v3775, 0
    %v3793 = vsel %vm681, %v3776, 0
    %v3796 = vsel %vm681, %v3777, 0
    %v3799 = vsel %vm681, %v3778, 0
    %v3802 = vsel %vm681, %v3779, 0
    %3804 = vmatprep.subr.mxu0 0.0
    %3805 = vmatpush1.msra.mxu0 0.0
    %3806 = vmatprep.subr.mxu0 0.0
    %3807 = vmatpush1.msra.mxu0 0.0
    %3808 = vmatprep.subr.mxu0 0.0
    %3809 = vmatpush1.msra.mxu0 0.0
    %3810 = vmatprep.subr.mxu0 0.0
    %3811 = vmatpush1.msra.mxu0 0.0
    %3812 = vmatprep.subr.mxu0 0.0
    %3813 = vmatpush1.msra.mxu0 0.0
    %3814 = vmatprep.subr.mxu0 0.0
    %3815 = vmatpush1.msra.mxu0 0.0
    %3816 = vmatprep.subr.mxu0 0.0
    %3817 = vmatpush1.msra.mxu0 0.0
    %3818 = vmatprep.subr.mxu0 0.0
    %3819 = vmatpush1.msra.mxu0 0.0
    %3820 = vmatprep.subr.mxu0 0.0
    %3821 = vmatpush1.msra.mxu0 0.0
    %3822 = vmatprep.subr.mxu0 0.0
    %3823 = vmatpush1.msra.mxu0 0.0
    %3824 = vmatprep.subr.mxu0 0.0
    %3825 = vmatpush1.msra.mxu0 0.0
    %3826 = vmatprep.subr.mxu0 0.0
    %3827 = vmatpush1.msra.mxu0 0.0
    %3828 = vmatprep.subr.mxu0 0.0
    %3829 = vmatpush1.msra.mxu0 0.0
    %3830 = vmatprep.subr.mxu0 0.0
    %3831 = vmatpush1.msra.mxu0 0.0
    %3832 = vmatprep.subr.mxu0 0.0
    %3833 = vmatpush1.msra.mxu0 %v3532
    %3834 = vmatprep.subr.mxu0 0.0
    %3835 = vmatpush1.msra.mxu0 %v3531
    %3836 = vmatprep.subr.mxu0 0.0
    %3837 = vmatpush2.msra.mxu0 0.0
    %3838 = vmatprep.subr.mxu0 0.0
    %3839 = vmatpush2.msra.mxu0 0.0
    %3840 = vmatprep.subr.mxu0 0.0
    %3841 = vmatpush2.msra.mxu0 0.0
    %3842 = vmatprep.subr.mxu0 0.0
    %3843 = vmatpush2.msra.mxu0 0.0
    %3844 = vmatprep.subr.mxu0 0.0
    %3845 = vmatpush2.msra.mxu0 0.0
    %3846 = vmatprep.subr.mxu0 0.0
    %3847 = vmatpush2.msra.mxu0 0.0
    %3848 = vmatprep.subr.mxu0 0.0
    %3849 = vmatpush2.msra.mxu0 0.0
    %3850 = vmatprep.subr.mxu0 0.0
    %3851 = vmatpush2.msra.mxu0 0.0
    %3852 = vmatprep.subr.mxu0 0.0
    %3853 = vmatpush2.msra.mxu0 0.0
    %3854 = vmatprep.subr.mxu0 0.0
    %3855 = vmatpush2.msra.mxu0 0.0
    %3856 = vmatprep.subr.mxu0 0.0
    %3857 = vmatpush2.msra.mxu0 0.0
    %3858 = vmatprep.subr.mxu0 0.0
    %3859 = vmatpush2.msra.mxu0 0.0
    %3860 = vmatprep.subr.mxu0 0.0
    %3861 = vmatpush2.msra.mxu0 0.0
    %3862 = vmatprep.subr.mxu0 0.0
    %3863 = vmatpush2.msra.mxu0 0.0
    %3864 = vmatprep.subr.mxu0 0.0
    %3865 = vmatpush2.msra.mxu0 0.0
    %3866 = vmatprep.subr.mxu0 0.0
    %3867 = vmatpush2.msra.mxu0 0.0
    %3868 = vmatprep.mubr.f32.mxu0 0.0
    %3869 = vmatmul.mubr.f32.gmra.mxu0 %v3781
    %v3870 = vpop.f32.mrf.mxu0
    %v3871 = vadd.f32 0.0, %v3870
    %v3872 = vpop.f32.mrf.mxu0
    %3873 = vmatprep.mubr.f32.mxu0 0.0
    %3874 = vmatmul.mubr.f32.gmra.mxu0 %v3784
    %v3875 = vpop.f32.mrf.mxu0
    %v3876 = vadd.f32 0.0, %v3875
    %v3877 = vpop.f32.mrf.mxu0
    %3878 = vmatprep.mubr.f32.mxu0 0.0
    %3879 = vmatmul.mubr.f32.gmra.mxu0 %v3787
    %v3880 = vpop.f32.mrf.mxu0
    %v3881 = vadd.f32 0.0, %v3880
    %v3882 = vpop.f32.mrf.mxu0
    %3883 = vmatprep.mubr.f32.mxu0 0.0
    %3884 = vmatmul.mubr.f32.gmra.mxu0 %v3790
    %v3885 = vpop.f32.mrf.mxu0
    %v3886 = vadd.f32 0.0, %v3885
    %v3887 = vpop.f32.mrf.mxu0
    %3888 = vmatprep.mubr.f32.mxu0 0.0
    %3889 = vmatmul.mubr.f32.gmra.mxu0 %v3793
    %v3890 = vpop.f32.mrf.mxu0
    %v3891 = vadd.f32 0.0, %v3890
    %v3892 = vpop.f32.mrf.mxu0
    %3893 = vmatprep.mubr.f32.mxu0 0.0
    %3894 = vmatmul.mubr.f32.gmra.mxu0 %v3796
    %v3895 = vpop.f32.mrf.mxu0
    %v3896 = vadd.f32 0.0, %v3895
    %v3897 = vpop.f32.mrf.mxu0
    %3898 = vmatprep.mubr.f32.mxu0 0.0
    %3899 = vmatmul.mubr.f32.gmra.mxu0 %v3799
    %v3900 = vpop.f32.mrf.mxu0
    %v3901 = vadd.f32 0.0, %v3900
    %v3902 = vpop.f32.mrf.mxu0
    %3903 = vmatprep.mubr.f32.mxu0 0.0
    %3904 = vmatmul.mubr.f32.gmra.mxu0 %v3802
    %v3905 = vpop.f32.mrf.mxu0
    %v3906 = vadd.f32 0.0, %v3905
    %v3907 = vpop.f32.mrf.mxu0
    %3908 = vdwg.mxu0
    %v3909 = vmul.f32 %v3871, %v242
    %v3910 = vmul.f32 %v3876, %v243
    %v3911 = vmul.f32 %v3881, %v244
    %v3912 = vmul.f32 %v3886, %v245
    %v3913 = vmul.f32 %v3891, %v246
    %v3914 = vmul.f32 %v3896, %v247
    %v3915 = vmul.f32 %v3901, %v248
    %v3916 = vmul.f32 %v3906, %v249
    %v3918 = vsel %vm272, %v3909, 0
    %v3921 = vsel %vm272, %v3910, 0
    %v3924 = vsel %vm272, %v3911, 0
    %v3927 = vsel %vm272, %v3912, 0
    %v3930 = vsel %vm272, %v3913, 0
    %v3933 = vsel %vm272, %v3914, 0
    %v3936 = vsel %vm272, %v3915, 0
    %v3939 = vsel %vm272, %v3916, 0
    %3941 = vmatprep.subr.mxu0 0.0
    %3942 = vmatpush1.msra.mxu0 0.0
    %3943 = vmatprep.subr.mxu0 0.0
    %3944 = vmatpush1.msra.mxu0 0.0
    %3945 = vmatprep.subr.mxu0 0.0
    %3946 = vmatpush1.msra.mxu0 0.0
    %3947 = vmatprep.subr.mxu0 0.0
    %3948 = vmatpush1.msra.mxu0 0.0
    %3949 = vmatprep.subr.mxu0 0.0
    %3950 = vmatpush1.msra.mxu0 0.0
    %3951 = vmatprep.subr.mxu0 0.0
    %3952 = vmatpush1.msra.mxu0 0.0
    %3953 = vmatprep.subr.mxu0 0.0
    %3954 = vmatpush1.msra.mxu0 0.0
    %3955 = vmatprep.subr.mxu0 0.0
    %3956 = vmatpush1.msra.mxu0 0.0
    %3957 = vmatprep.subr.mxu0 0.0
    %3958 = vmatpush1.msra.mxu0 0.0
    %3959 = vmatprep.subr.mxu0 0.0
    %3960 = vmatpush1.msra.mxu0 0.0
    %3961 = vmatprep.subr.mxu0 0.0
    %3962 = vmatpush1.msra.mxu0 0.0
    %3963 = vmatprep.subr.mxu0 0.0
    %3964 = vmatpush1.msra.mxu0 0.0
    %3965 = vmatprep.subr.mxu0 0.0
    %3966 = vmatpush1.msra.mxu0 %v261
    %3967 = vmatprep.subr.mxu0 0.0
    %3968 = vmatpush1.msra.mxu0 %v260
    %3969 = vmatprep.subr.mxu0 0.0
    %3970 = vmatpush1.msra.mxu0 %v259
    %3971 = vmatprep.subr.mxu0 0.0
    %3972 = vmatpush1.msra.mxu0 %v258
    %3973 = vmatprep.subr.mxu0 0.0
    %3974 = vmatpush2.msra.mxu0 0.0
    %3975 = vmatprep.subr.mxu0 0.0
    %3976 = vmatpush2.msra.mxu0 0.0
    %3977 = vmatprep.subr.mxu0 0.0
    %3978 = vmatpush2.msra.mxu0 0.0
    %3979 = vmatprep.subr.mxu0 0.0
    %3980 = vmatpush2.msra.mxu0 0.0
    %3981 = vmatprep.subr.mxu0 0.0
    %3982 = vmatpush2.msra.mxu0 0.0
    %3983 = vmatprep.subr.mxu0 0.0
    %3984 = vmatpush2.msra.mxu0 0.0
    %3985 = vmatprep.subr.mxu0 0.0
    %3986 = vmatpush2.msra.mxu0 0.0
    %3987 = vmatprep.subr.mxu0 0.0
    %3988 = vmatpush2.msra.mxu0 0.0
    %3989 = vmatprep.subr.mxu0 0.0
    %3990 = vmatpush2.msra.mxu0 0.0
    %3991 = vmatprep.subr.mxu0 0.0
    %3992 = vmatpush2.msra.mxu0 0.0
    %3993 = vmatprep.subr.mxu0 0.0
    %3994 = vmatpush2.msra.mxu0 0.0
    %3995 = vmatprep.subr.mxu0 0.0
    %3996 = vmatpush2.msra.mxu0 0.0
    %3997 = vmatprep.subr.mxu0 0.0
    %3998 = vmatpush2.msra.mxu0 0.0
    %3999 = vmatprep.subr.mxu0 0.0
    %4000 = vmatpush2.msra.mxu0 0.0
    %4001 = vmatprep.subr.mxu0 0.0
    %4002 = vmatpush2.msra.mxu0 0.0
    %4003 = vmatprep.subr.mxu0 0.0
    %4004 = vmatpush2.msra.mxu0 0.0
    %4005 = vmatprep.mubr.f32.mxu0 0.0
    %4006 = vmatmul.mubr.f32.gmra.mxu0 %v3918
    %v4007 = vpop.f32.mrf.mxu0
    %v4008 = vadd.f32 0.0, %v4007
    %v4009 = vpop.f32.mrf.mxu0
    %4010 = vmatprep.mubr.f32.mxu0 0.0
    %4011 = vmatmul.mubr.f32.gmra.mxu0 %v3921
    %v4012 = vpop.f32.mrf.mxu0
    %v4013 = vadd.f32 0.0, %v4012
    %v4014 = vpop.f32.mrf.mxu0
    %4015 = vmatprep.mubr.f32.mxu0 0.0
    %4016 = vmatmul.mubr.f32.gmra.mxu0 %v3924
    %v4017 = vpop.f32.mrf.mxu0
    %v4018 = vadd.f32 0.0, %v4017
    %v4019 = vpop.f32.mrf.mxu0
    %4020 = vmatprep.mubr.f32.mxu0 0.0
    %4021 = vmatmul.mubr.f32.gmra.mxu0 %v3927
    %v4022 = vpop.f32.mrf.mxu0
    %v4023 = vadd.f32 0.0, %v4022
    %v4024 = vpop.f32.mrf.mxu0
    %4025 = vmatprep.mubr.f32.mxu0 0.0
    %4026 = vmatmul.mubr.f32.gmra.mxu0 %v3930
    %v4027 = vpop.f32.mrf.mxu0
    %v4028 = vadd.f32 0.0, %v4027
    %v4029 = vpop.f32.mrf.mxu0
    %4030 = vmatprep.mubr.f32.mxu0 0.0
    %4031 = vmatmul.mubr.f32.gmra.mxu0 %v3933
    %v4032 = vpop.f32.mrf.mxu0
    %v4033 = vadd.f32 0.0, %v4032
    %v4034 = vpop.f32.mrf.mxu0
    %4035 = vmatprep.mubr.f32.mxu0 0.0
    %4036 = vmatmul.mubr.f32.gmra.mxu0 %v3936
    %v4037 = vpop.f32.mrf.mxu0
    %v4038 = vadd.f32 0.0, %v4037
    %v4039 = vpop.f32.mrf.mxu0
    %4040 = vmatprep.mubr.f32.mxu0 0.0
    %4041 = vmatmul.mubr.f32.gmra.mxu0 %v3939
    %v4042 = vpop.f32.mrf.mxu0
    %v4043 = vadd.f32 0.0, %v4042
    %v4044 = vpop.f32.mrf.mxu0
    %4045 = vdwg.mxu0
    %v4046 = vmul.f32 %v4008, %v250
    %v4047 = vmul.f32 %v4013, %v251
    %v4048 = vmul.f32 %v4018, %v252
    %v4049 = vmul.f32 %v4023, %v253
    %v4050 = vmul.f32 %v4028, %v254
    %v4051 = vmul.f32 %v4033, %v255
    %v4052 = vmul.f32 %v4038, %v256
    %v4053 = vmul.f32 %v4043, %v257
    %v4055 = vsel %vm272, %v4046, 0
    %v4058 = vsel %vm272, %v4047, 0
    %v4061 = vsel %vm272, %v4048, 0
    %v4064 = vsel %vm272, %v4049, 0
    %v4067 = vsel %vm272, %v4050, 0
    %v4070 = vsel %vm272, %v4051, 0
    %v4073 = vsel %vm272, %v4052, 0
    %v4076 = vsel %vm272, %v4053, 0
    %4078 = vmatprep.subr.mxu0 0.0
    %4079 = vmatpush1.msra.mxu0 0.0
    %4080 = vmatprep.subr.mxu0 0.0
    %4081 = vmatpush1.msra.mxu0 0.0
    %4082 = vmatprep.subr.mxu0 0.0
    %4083 = vmatpush1.msra.mxu0 0.0
    %4084 = vmatprep.subr.mxu0 0.0
    %4085 = vmatpush1.msra.mxu0 0.0
    %4086 = vmatprep.subr.mxu0 0.0
    %4087 = vmatpush1.msra.mxu0 0.0
    %4088 = vmatprep.subr.mxu0 0.0
    %4089 = vmatpush1.msra.mxu0 0.0
    %4090 = vmatprep.subr.mxu0 0.0
    %4091 = vmatpush1.msra.mxu0 0.0
    %4092 = vmatprep.subr.mxu0 0.0
    %4093 = vmatpush1.msra.mxu0 0.0
    %4094 = vmatprep.subr.mxu0 0.0
    %4095 = vmatpush1.msra.mxu0 0.0
    %4096 = vmatprep.subr.mxu0 0.0
    %4097 = vmatpush1.msra.mxu0 0.0
    %4098 = vmatprep.subr.mxu0 0.0
    %4099 = vmatpush1.msra.mxu0 0.0
    %4100 = vmatprep.subr.mxu0 0.0
    %4101 = vmatpush1.msra.mxu0 0.0
    %4102 = vmatprep.subr.mxu0 0.0
    %4103 = vmatpush1.msra.mxu0 %v222
    %4104 = vmatprep.subr.mxu0 0.0
    %4105 = vmatpush1.msra.mxu0 %v221
    %4106 = vmatprep.subr.mxu0 0.0
    %4107 = vmatpush1.msra.mxu0 %v220
    %4108 = vmatprep.subr.mxu0 0.0
    %4109 = vmatpush1.msra.mxu0 %v219
    %4110 = vmatprep.subr.mxu0 0.0
    %4111 = vmatpush2.msra.mxu0 0.0
    %4112 = vmatprep.subr.mxu0 0.0
    %4113 = vmatpush2.msra.mxu0 0.0
    %4114 = vmatprep.subr.mxu0 0.0
    %4115 = vmatpush2.msra.mxu0 0.0
    %4116 = vmatprep.subr.mxu0 0.0
    %4117 = vmatpush2.msra.mxu0 0.0
    %4118 = vmatprep.subr.mxu0 0.0
    %4119 = vmatpush2.msra.mxu0 0.0
    %4120 = vmatprep.subr.mxu0 0.0
    %4121 = vmatpush2.msra.mxu0 0.0
    %4122 = vmatprep.subr.mxu0 0.0
    %4123 = vmatpush2.msra.mxu0 0.0
    %4124 = vmatprep.subr.mxu0 0.0
    %4125 = vmatpush2.msra.mxu0 0.0
    %4126 = vmatprep.subr.mxu0 0.0
    %4127 = vmatpush2.msra.mxu0 0.0
    %4128 = vmatprep.subr.mxu0 0.0
    %4129 = vmatpush2.msra.mxu0 0.0
    %4130 = vmatprep.subr.mxu0 0.0
    %4131 = vmatpush2.msra.mxu0 0.0
    %4132 = vmatprep.subr.mxu0 0.0
    %4133 = vmatpush2.msra.mxu0 0.0
    %4134 = vmatprep.subr.mxu0 0.0
    %4135 = vmatpush2.msra.mxu0 0.0
    %4136 = vmatprep.subr.mxu0 0.0
    %4137 = vmatpush2.msra.mxu0 0.0
    %4138 = vmatprep.subr.mxu0 0.0
    %4139 = vmatpush2.msra.mxu0 0.0
    %4140 = vmatprep.subr.mxu0 0.0
    %4141 = vmatpush2.msra.mxu0 0.0
    %4142 = vmatprep.mubr.f32.mxu0 0.0
    %4143 = vmatmul.mubr.f32.gmra.mxu0 %v4055
    %v4144 = vpop.f32.mrf.mxu0
    %v4145 = vadd.f32 0.0, %v4144
    %v4146 = vpop.f32.mrf.mxu0
    %4147 = vmatprep.mubr.f32.mxu0 0.0
    %4148 = vmatmul.mubr.f32.gmra.mxu0 %v4058
    %v4149 = vpop.f32.mrf.mxu0
    %v4150 = vadd.f32 0.0, %v4149
    %v4151 = vpop.f32.mrf.mxu0
    %4152 = vmatprep.mubr.f32.mxu0 0.0
    %4153 = vmatmul.mubr.f32.gmra.mxu0 %v4061
    %v4154 = vpop.f32.mrf.mxu0
    %v4155 = vadd.f32 0.0, %v4154
    %v4156 = vpop.f32.mrf.mxu0
    %4157 = vmatprep.mubr.f32.mxu0 0.0
    %4158 = vmatmul.mubr.f32.gmra.mxu0 %v4064
    %v4159 = vpop.f32.mrf.mxu0
    %v4160 = vadd.f32 0.0, %v4159
    %v4161 = vpop.f32.mrf.mxu0
    %4162 = vmatprep.mubr.f32.mxu0 0.0
    %4163 = vmatmul.mubr.f32.gmra.mxu0 %v4067
    %v4164 = vpop.f32.mrf.mxu0
    %v4165 = vadd.f32 0.0, %v4164
    %v4166 = vpop.f32.mrf.mxu0
    %4167 = vmatprep.mubr.f32.mxu0 0.0
    %4168 = vmatmul.mubr.f32.gmra.mxu0 %v4070
    %v4169 = vpop.f32.mrf.mxu0
    %v4170 = vadd.f32 0.0, %v4169
    %v4171 = vpop.f32.mrf.mxu0
    %4172 = vmatprep.mubr.f32.mxu0 0.0
    %4173 = vmatmul.mubr.f32.gmra.mxu0 %v4073
    %v4174 = vpop.f32.mrf.mxu0
    %v4175 = vadd.f32 0.0, %v4174
    %v4176 = vpop.f32.mrf.mxu0
    %4177 = vmatprep.mubr.f32.mxu0 0.0
    %4178 = vmatmul.mubr.f32.gmra.mxu0 %v4076
    %v4179 = vpop.f32.mrf.mxu0
    %v4180 = vadd.f32 0.0, %v4179
    %v4181 = vpop.f32.mrf.mxu0
    %4182 = vdwg.mxu0
    %4183 = vmatprep.subr.mxu0 0.0
    %4184 = vmatpush1.msra.mxu0 0.0
    %4185 = vmatprep.subr.mxu0 0.0
    %4186 = vmatpush1.msra.mxu0 0.0
    %4187 = vmatprep.subr.mxu0 0.0
    %4188 = vmatpush1.msra.mxu0 0.0
    %4189 = vmatprep.subr.mxu0 0.0
    %4190 = vmatpush1.msra.mxu0 0.0
    %4191 = vmatprep.subr.mxu0 0.0
    %4192 = vmatpush1.msra.mxu0 0.0
    %4193 = vmatprep.subr.mxu0 0.0
    %4194 = vmatpush1.msra.mxu0 0.0
    %4195 = vmatprep.subr.mxu0 0.0
    %4196 = vmatpush1.msra.mxu0 0.0
    %4197 = vmatprep.subr.mxu0 0.0
    %4198 = vmatpush1.msra.mxu0 0.0
    %4199 = vmatprep.subr.mxu0 0.0
    %4200 = vmatpush1.msra.mxu0 %v4180
    %4201 = vmatprep.subr.mxu0 0.0
    %4202 = vmatpush1.msra.mxu0 %v4175
    %4203 = vmatprep.subr.mxu0 0.0
    %4204 = vmatpush1.msra.mxu0 %v4170
    %4205 = vmatprep.subr.mxu0 0.0
    %4206 = vmatpush1.msra.mxu0 %v4165
    %4207 = vmatprep.subr.mxu0 0.0
    %4208 = vmatpush1.msra.mxu0 %v4160
    %4209 = vmatprep.subr.mxu0 0.0
    %4210 = vmatpush1.msra.mxu0 %v4155
    %4211 = vmatprep.subr.mxu0 0.0
    %4212 = vmatpush1.msra.mxu0 %v4150
    %4213 = vmatprep.subr.mxu0 0.0
    %4214 = vmatpush1.msra.mxu0 %v4145
    %4215 = vmatprep.subr.mxu0 0.0
    %4216 = vmatpush2.msra.mxu0 0.0
    %4217 = vmatprep.subr.mxu0 0.0
    %4218 = vmatpush2.msra.mxu0 0.0
    %4219 = vmatprep.subr.mxu0 0.0
    %4220 = vmatpush2.msra.mxu0 0.0
    %4221 = vmatprep.subr.mxu0 0.0
    %4222 = vmatpush2.msra.mxu0 0.0
    %4223 = vmatprep.subr.mxu0 0.0
    %4224 = vmatpush2.msra.mxu0 0.0
    %4225 = vmatprep.subr.mxu0 0.0
    %4226 = vmatpush2.msra.mxu0 0.0
    %4227 = vmatprep.subr.mxu0 0.0
    %4228 = vmatpush2.msra.mxu0 0.0
    %4229 = vmatprep.subr.mxu0 0.0
    %4230 = vmatpush2.msra.mxu0 0.0
    %4231 = vmatprep.subr.mxu0 0.0
    %4232 = vmatpush2.msra.mxu0 0.0
    %4233 = vmatprep.subr.mxu0 0.0
    %4234 = vmatpush2.msra.mxu0 0.0
    %4235 = vmatprep.subr.mxu0 0.0
    %4236 = vmatpush2.msra.mxu0 0.0
    %4237 = vmatprep.subr.mxu0 0.0
    %4238 = vmatpush2.msra.mxu0 0.0
    %4239 = vmatprep.subr.mxu0 0.0
    %4240 = vmatpush2.msra.mxu0 0.0
    %4241 = vmatprep.subr.mxu0 0.0
    %4242 = vmatpush2.msra.mxu0 0.0
    %4243 = vmatprep.subr.mxu0 0.0
    %4244 = vmatpush2.msra.mxu0 0.0
    %4245 = vmatprep.subr.mxu0 0.0
    %4246 = vmatpush2.msra.mxu0 0.0
    %4247 = vmatprep.mubr.f32.mxu0 0.0
    %4248 = vmatmul.mubr.f32.gmra.mxu0 %v1181
    %v4249 = vpop.f32.mrf.mxu0
    %v4250 = vadd.f32 %v1177, %v4249
    %v4251 = vpop.f32.mrf.mxu0
    %4252 = vmatprep.mubr.f32.mxu0 0.0
    %4253 = vmatmul.mubr.f32.gmra.mxu0 %v1184
    %v4254 = vpop.f32.mrf.mxu0
    %v4255 = vadd.f32 %v1177, %v4254
    %v4256 = vpop.f32.mrf.mxu0
    %4257 = vdwg.mxu0
    %v4258 = vmax.f32 %v4250, 0.0
    %v4259 = vmax.f32 %v4255, 0.0
    %v4260 = vadd.f32 %v4258, %v2300
    %v4261 = vadd.f32 %v4259, %v2301
    %v4262 = vsel %vm272, %v4260, 0.0
    %4263 = vadd.xlane.f32.xlu0 %v4262
    %v4264 = vpop.xlane.xlu0 %4263
    %v4265 = vsel %vm272, %v4261, 0.0
    %4266 = vadd.xlane.f32.xlu0 %v4265
    %v4267 = vpop.xlane.xlu0 %4266
    %v4268 = vmul.f32 %v4264, %v1269
    %v4269 = vmul.f32 %v4267, %v1269
    %v4270 = vsub.f32 %v4260, %v4268
    %v4271 = vsub.f32 %v4261, %v4269
    %v4272 = vmul.f32 %v4270, %v4270
    %v4273 = vmul.f32 %v4271, %v4271
    %v4274 = vsel %vm272, %v4272, 0.0
    %4275 = vadd.xlane.f32.xlu0 %v4274
    %v4276 = vpop.xlane.xlu0 %4275
    %v4277 = vsel %vm272, %v4273, 0.0
    %4278 = vadd.xlane.f32.xlu0 %v4277
    %v4279 = vpop.xlane.xlu0 %4278
    %v4280 = vmul.f32 %v4276, %v1269
    %v4281 = vmul.f32 %v4279, %v1269
    %v4282 = vadd.f32 %v4280, 1e-05
    %v4283 = vadd.f32 %v4281, 1e-05
    %v4284 = vrsqrt.pop %v4282
    %v4285 = vrsqrt.pop %v4283
    %v4286 = vmul.f32 %v4270, %v4284
    %v4287 = vmul.f32 %v4271, %v4285
    %v4288 = vmul.f32 %v4286, %v1294
    %v4289 = vmul.f32 %v4287, %v1294
    %v4290 = vadd.f32 %v4288, %v1302
    %v4291 = vadd.f32 %v4289, %v1302
    %4292 = vst.msk [vmem:[#allocation20] sm:$0xff] %vm272, %v4290
    %4293 = vst.msk [vmem:[#allocation20 + $0x8] sm:$0xff] %vm272, %v4291
    // Predicated region
    $region114: #{encoder_forward.1} parent=1 // pred_check
      _
    $region115: #{encoder_forward.1} parent=1 // pred_check_branch
      %4295 = sbr.rel (0) target = $region117
    $region116: #{encoder_forward.1} parent=1 // pred_region
      %s4297 = ssub.s32 256, 256
      %4298 = vsyncadd [#allocation4], %s4297
      %s4299 = sshll.u32 [#allocation20], 4
      %s4300 = int_to_ptr.vmem [resolvable:$true] %s4299
      %4305 = dma.vmem_to_hbm [thread:$0]  %s4300, 256, %s17, [#allocation4], 128, 128, 8
    $region117: #{encoder_forward.1} parent=1 // pred_fallthru
      _
    // Predicated region
    $region118: #{encoder_forward.1} parent=1 // pred_check
      _
    $region119: #{encoder_forward.1} parent=1 // pred_check_branch
      %4307 = sbr.rel (0) target = $region121
    $region120: #{encoder_forward.1} parent=1 // pred_region
      %4308 = dma.done [#allocation4], 256
    $region121: #{encoder_forward.1} parent=1 // pred_fallthru
      _
    %4309 = vsyncpa [#allocation3], 1
    %4310 = vsyncpa [#allocation6], 1
    %4311 = vsyncpa [#allocation9], 1
    %4312 = vsyncpa [#allocation12], 1
    %4313 = vsyncpa [#allocation15], 1
    %4314 = vsyncpa [#allocation18], 1
    %4315 = vsyncpa [#allocation4], 1

</llo_original>
